<compile_context>
chip_gen: v6e
topology: v6e:2x2x1
jax: 0.10.0
libtpu: 0.0.40
codegen_flags: <defaults>
</compile_context>

<pallas_src>
import functools

import jax
import jax.numpy as jnp
from jax.experimental import pallas as pl
from jax.experimental.pallas import tpu as pltpu


# ---------------------------------------------------------------------------
# Pallas kernel: one matmul tile (full K, full N) + fused activation epilogue.
# K is small for every layer, so there is no K grid axis, no accumulator
# scratch and no init/finalize phases: a single MXU pass per grid step.
# ---------------------------------------------------------------------------
def _matmul_act_kernel(a_ref, b_ref, o_ref, *, act):
    r = jnp.dot(a_ref[0], b_ref[...], preferred_element_type=jnp.float32)
    if act == "relu":
        r = jnp.maximum(r, 0.0)
    elif act == "tanh":
        r = jnp.tanh(r)
    o_ref[0] = r.astype(o_ref.dtype)


def matmul_act(a, b, act="none", split_batch=False):
    """act(a @ b) with a Pallas TPU kernel.

    a: (G, M, K), b: (K, N), both bf16.  If split_batch is False the leading
    axis is folded into M and the kernel runs as a single grid step (best for
    the serial grid on single-TC v5e/v6e); if True the leading (batch) axis
    becomes a "parallel" grid axis, i.e. one big tile per TensorCore on v7x.
    K and N are always full-dimension blocks, so there is no (8,128) padding
    and no pad/slice round trip on M.
    """
    if a.dtype != jnp.bfloat16:
        a = a.astype(jnp.bfloat16)
    if b.dtype != jnp.bfloat16:
        b = b.astype(jnp.bfloat16)
    if not split_batch:
        a = a.reshape(1, -1, a.shape[-1])
    g, m, k = a.shape
    n = b.shape[1]

    return pl.pallas_call(
        functools.partial(_matmul_act_kernel, act=act),
        out_shape=jax.ShapeDtypeStruct((g, m, n), jnp.bfloat16),
        grid_spec=pltpu.PrefetchScalarGridSpec(
            num_scalar_prefetch=0,
            grid=(g,),
            in_specs=[
                pl.BlockSpec((1, m, k), lambda i: (i, 0, 0)),
                # Weight block index is constant across the (<=2 step) grid, so
                # it is not re-fetched; pl.Buffered(1) is deliberately skipped
                # (the extra buffer is <64 KiB and version support is uncertain).
                pl.BlockSpec((k, n), lambda i: (0, 0)),
            ],
            out_specs=pl.BlockSpec((1, m, n), lambda i: (i, 0, 0)),
        ),
        compiler_params=pltpu.CompilerParams(
            dimension_semantics=("parallel",)
        ),
    )(a, b)


# ---------------------------------------------------------------------------
# One-time weight folding: PyTorch ConvTranspose2d weights -> matmul weights.
# ---------------------------------------------------------------------------
def fold_first_weight(w):
    """Layer 1 (1x1 -> 4x4, stride 1, pad 0): (C_in, C_out, 4, 4) -> (C_in, 16*C_out).

    Columns ordered (oy, ox, c_out) so the matmul result reshapes directly to
    NHWC (N, 4, 4, C_out)."""
    c_in, c_out, kh, kw = w.shape
    assert (kh, kw) == (4, 4)
    return jnp.transpose(w, (0, 2, 3, 1)).reshape(c_in, kh * kw * c_out)


def fold_subpixel_weight(w):
    """Stride-2 / pad-1 / 4x4 ConvTranspose2d -> sub-pixel matmul weight.

    Returns (4*C_in, 4*C_out): rows ordered (u, v, c_in) over the 2x2 input
    window taps, columns ordered (dy, dx, c_out) over the 2x2 output phases:
        W[(u, v, ci), (dy, dx, co)] = w[ci, co, 3-2u-dy, 3-2v-dx]
    (zero when the kernel index falls outside [0, 4) never happens here)."""
    c_in, c_out, kh, kw = w.shape
    assert (kh, kw) == (4, 4), "sub-pixel folding assumes 4x4 kernels, stride 2, pad 1"
    wp = jnp.transpose(w, (2, 3, 0, 1))            # (ky, kx, ci, co)
    w6 = wp.reshape(2, 2, 2, 2, c_in, c_out)       # ky = 2*a + b, kx = 2*c + d
    w6 = w6[::-1, ::-1, ::-1, ::-1]                # [u, dy, v, dx, ci, co]
    wm = jnp.transpose(w6, (0, 2, 4, 1, 3, 5))     # (u, v, ci, dy, dx, co)
    return wm.reshape(4 * c_in, 4 * c_out)


def prepare_params(params):
    """One-time parameter preprocessing (hoisted out of the forward pass)."""
    w1, w2, w3, w4, w5 = params
    return (
        fold_first_weight(w1).astype(jnp.bfloat16),
        fold_subpixel_weight(w2).astype(jnp.bfloat16),
        fold_subpixel_weight(w3).astype(jnp.bfloat16),
        fold_subpixel_weight(w4).astype(jnp.bfloat16),
        fold_subpixel_weight(w5).astype(jnp.bfloat16),
    )


# ---------------------------------------------------------------------------
# Stride-2 ConvTranspose2d (k=4, p=1, bias=False) via sub-pixel decomposition.
# ---------------------------------------------------------------------------
def upconv2x_subpixel(x, wmat, act, split_batch):
    """x: (N, H, W, C_in) NHWC bf16; wmat: (4*C_in, 4*C_out) folded weight.

    y[n, 2a+dy, 2b+dx, :] = sum_{u,v} xpad[n, a+dy+u, b+dx+v, :] . W[(u,v),(dy,dx)]
    i.e. a single matmul over all (H+1)*(W+1) 2x2 windows of the padded input
    with the 4 output phases folded into the lane dim, then a cheap interleave.
    """
    n, h, w, c = x.shape
    c_out = wmat.shape[1] // 4
    xp = jnp.pad(x, ((0, 0), (1, 1), (1, 1), (0, 0)))
    # all 2x2 window starts (a', b') in [0, H] x [0, W]
    cols = [xp[:, u:u + h + 1, v:v + w + 1, :] for u in (0, 1) for v in (0, 1)]
    patches = jnp.stack(cols, axis=3)                     # (N, H+1, W+1, 4, C_in)
    patches = patches.reshape(n, (h + 1) * (w + 1), 4 * c)

    z = matmul_act(patches, wmat, act=act, split_batch=split_batch)
    z = z.reshape(n, h + 1, w + 1, 2, 2, c_out)           # (..., dy, dx, C_out)

    # phase interleave: y[:, 2a+dy, 2b+dx] = z[:, a+dy, b+dx, dy, dx]
    y00 = z[:, 0:h,     0:w,     0, 0, :]
    y01 = z[:, 0:h,     1:w + 1, 0, 1, :]
    y10 = z[:, 1:h + 1, 0:w,     1, 0, :]
    y11 = z[:, 1:h + 1, 1:w + 1, 1, 1, :]
    y = jnp.stack([jnp.stack([y00, y01], axis=3),
                   jnp.stack([y10, y11], axis=3)], axis=2)  # (N, H, 2, W, 2, C_out)
    return y.reshape(n, 2 * h, 2 * w, c_out)


# ---------------------------------------------------------------------------
# Generator (WGAN-GP), small synthetic config.
# ---------------------------------------------------------------------------
def init_generator_params(key, nz=8, ngf=8, nc=3):
    shapes = [
        (nz + 24, ngf * 8, 4, 4),
        (ngf * 8, ngf * 4, 4, 4),
        (ngf * 4, ngf * 2, 4, 4),
        (ngf * 2, ngf, 4, 4),
        (ngf, nc, 4, 4),
    ]
    keys = jax.random.split(key, len(shapes))
    # DCGAN-style deterministic init: N(0, 0.02)
    return [0.02 * jax.random.normal(k, s, jnp.float32) for k, s in zip(keys, shapes)]


def generator_forward(wmats, z, condition):
    """wmats: prepare_params(...) output.  z: (N, nz, 1, 1), condition: (N, 24).

    Returns the image (N, nc, 64, 64) float32 NCHW, matching the PyTorch module."""
    w1, w2, w3, w4, w5 = wmats
    n = z.shape[0]
    x = jnp.concatenate([z.reshape(n, -1), condition.reshape(n, -1)], axis=1)
    x = x.astype(jnp.bfloat16)                            # single activation cast

    # Layer 1: ConvT(4, stride 1, pad 0) on a 1x1 input is a dense matmul whose
    # columns are already ordered (oy, ox, c_out) -> reshape straight to NHWC.
    c1 = w1.shape[1] // 16
    y = matmul_act(x[None], w1, act="relu", split_batch=False)
    y = y.reshape(n, 4, 4, c1)                            # (N, 4, 4, 8*ngf)

    # Layers 2..5: stride-2 sub-pixel ConvTranspose2d.  Small layers run as a
    # single grid step; the two largest put batch on a parallel grid axis.
    y = upconv2x_subpixel(y, w2, act="relu", split_batch=False)   # (N,  8,  8, 4*ngf)
    y = upconv2x_subpixel(y, w3, act="relu", split_batch=False)   # (N, 16, 16, 2*ngf)
    y = upconv2x_subpixel(y, w4, act="relu", split_batch=True)    # (N, 32, 32, ngf)
    y = upconv2x_subpixel(y, w5, act="tanh", split_batch=True)    # (N, 64, 64, nc) bf16

    # single NCHW conversion + f32 cast on the tiny final tensor
    return jnp.transpose(y, (0, 3, 1, 2)).astype(jnp.float32)


# ---------------------------------------------------------------------------
# Pure-XLA f32 reference (for validating the lowering + bf16 numerics).
# ---------------------------------------------------------------------------
def _convt_ref(x_nhwc, w, stride, pad):
    kh, kw = w.shape[2], w.shape[3]
    w_hwio = jnp.transpose(w, (2, 3, 0, 1))[::-1, ::-1, :, :]
    return jax.lax.conv_general_dilated(
        x_nhwc, w_hwio,
        window_strides=(1, 1),
        padding=[(kh - 1 - pad,) * 2, (kw - 1 - pad,) * 2],
        lhs_dilation=(stride, stride),
        dimension_numbers=("NHWC", "HWIO", "NHWC"))


def generator_reference(params, z, condition):
    w1, w2, w3, w4, w5 = params
    n = z.shape[0]
    x = jnp.concatenate([z.reshape(n, -1), condition.reshape(n, -1)], axis=1)
    x = x.reshape(n, 1, 1, -1)
    x = jnp.maximum(_convt_ref(x, w1, 1, 0), 0.0)
    x = jnp.maximum(_convt_ref(x, w2, 2, 1), 0.0)
    x = jnp.maximum(_convt_ref(x, w3, 2, 1), 0.0)
    x = jnp.maximum(_convt_ref(x, w4, 2, 1), 0.0)
    x = jnp.tanh(_convt_ref(x, w5, 2, 1))
    return jnp.transpose(x, (0, 3, 1, 2))


if __name__ == "__main__":
    nz, ngf, nc, batch = 8, 8, 3, 2
    key = jax.random.PRNGKey(0)
    k_params, k_z, k_c = jax.random.split(key, 3)

    params = init_generator_params(k_params, nz=nz, ngf=ngf, nc=nc)
    z = jax.random.normal(k_z, (batch, nz, 1, 1), jnp.float32)
    condition = jax.random.normal(k_c, (batch, 24), jnp.float32)

    wmats = prepare_params(params)            # one-time weight folding (bf16)
    gen = jax.jit(generator_forward)
    out = jax.block_until_ready(gen(wmats, z, condition))

    assert out.shape == (batch, nc, 64, 64), out.shape
    assert bool(jnp.all(jnp.isfinite(out)))
    assert bool(jnp.all(jnp.abs(out) <= 1.0)), "tanh output out of range"

    # Validate the sub-pixel ConvTranspose lowering and the bf16 precision
    # deviation against a pure-XLA f32 reference of the original module.
    ref = jax.block_until_ready(jax.jit(generator_reference)(params, z, condition))
    err = float(jnp.max(jnp.abs(out - ref)))
    scale = float(jnp.max(jnp.abs(ref)))
    assert err <= 0.1 * scale + 1e-5, ("mismatch vs f32 reference", err, scale)

    print("KERNEL_OK")
</pallas_src>

<mosaic_0001>
module attributes {stable_mosaic.version = 11 : i64} {
  func.func @_matmul_act_kernel(%arg0: i32, %arg1: memref<1x2x32xbf16, #tpu.memory_space<vmem>>, %arg2: memref<32x1024xbf16, #tpu.memory_space<vmem>>, %arg3: memref<1x2x1024xbf16, #tpu.memory_space<vmem>>) attributes {dimension_semantics = [#tpu.dimension_semantics<parallel>], iteration_bounds = array<i64: 1>, scalar_prefetch = 0 : i64, scratch_operands = 0 : i64, tpu.core_type = #tpu.core_type<tc>, window_params = [{transform_indices = @transform_0, window_bounds = array<i64: 1, 2, 32>}, {pipeline_mode = #tpu.pipeline_mode<synchronous>, transform_indices = @transform_1, window_bounds = array<i64: 32, 1024>}, {transform_indices = @transform_2, window_bounds = array<i64: 1, 2, 1024>}]} {
    %c0 = arith.constant 0 : index
    %c0_0 = arith.constant 0 : index
    %c0_1 = arith.constant 0 : index
    %0 = vector.load %arg1[%c0, %c0_0, %c0_1] : memref<1x2x32xbf16, #tpu.memory_space<vmem>>, vector<1x2x32xbf16>
    %1 = vector.shape_cast %0 : vector<1x2x32xbf16> to vector<2x32xbf16>
    %c0_2 = arith.constant 0 : index
    %c0_3 = arith.constant 0 : index
    %2 = vector.load %arg2[%c0_2, %c0_3] : memref<32x1024xbf16, #tpu.memory_space<vmem>>, vector<32x1024xbf16>
    %cst = arith.constant dense<0.000000e+00> : vector<2x1024xf32>
    %3 = tpu.matmul %1, %2, %cst {dimension_numbers = #tpu.dot_dimension_numbers<[1], [0], [0], [1], [0, 0, 1, 1], [], []>} : vector<2x32xbf16>, vector<32x1024xbf16>, vector<2x1024xf32> -> vector<2x1024xf32>
    %cst_4 = arith.constant 0.000000e+00 : f32
    %4 = vector.broadcast %cst_4 : f32 to vector<2x1024xf32>
    %5 = arith.maximumf %3, %4 : vector<2x1024xf32>
    %6 = arith.truncf %5 : vector<2x1024xf32> to vector<2x1024xbf16>
    %c0_5 = arith.constant 0 : index
    %c0_6 = arith.constant 0 : index
    %c0_7 = arith.constant 0 : index
    %7 = vector.load %arg3[%c0_5, %c0_6, %c0_7] : memref<1x2x1024xbf16, #tpu.memory_space<vmem>>, vector<1x2x1024xbf16>
    %8 = vector.shape_cast %7 : vector<1x2x1024xbf16> to vector<2x1024xbf16>
    %9 = vector.shape_cast %6 : vector<2x1024xbf16> to vector<1x2x1024xbf16>
    tpu.vector_store %arg3[%c0_5, %c0_6, %c0_7], %9 {strides = array<i32>} : memref<1x2x1024xbf16, #tpu.memory_space<vmem>>, vector<1x2x1024xbf16>,
    return
  }
  func.func @transform_0(%arg0: i32) -> (i32, i32, i32) {
    %c0_i32 = arith.constant 0 : i32
    %c0_i32_0 = arith.constant 0 : i32
    %c0_i32_1 = arith.constant 0 : i32
    return %arg0, %c0_i32, %c0_i32_0 : i32, i32, i32
  }
  func.func @transform_1(%arg0: i32) -> (i32, i32) {
    %c0_i32 = arith.constant 0 : i32
    %c0_i32_0 = arith.constant 0 : i32
    %c0_i32_1 = arith.constant 0 : i32
    return %c0_i32, %c0_i32_0 : i32, i32
  }
  func.func @transform_2(%arg0: i32) -> (i32, i32, i32) {
    %c0_i32 = arith.constant 0 : i32
    %c0_i32_0 = arith.constant 0 : i32
    %c0_i32_1 = arith.constant 0 : i32
    return %arg0, %c0_i32, %c0_i32_0 : i32, i32, i32
  }
}

module attributes {stable_mosaic.version = 11 : i64} {
  func.func @_matmul_act_kernel(%arg0: i32, %arg1: memref<1x50x256xbf16, #tpu.memory_space<vmem>>, %arg2: memref<256x128xbf16, #tpu.memory_space<vmem>>, %arg3: memref<1x50x128xbf16, #tpu.memory_space<vmem>>) attributes {dimension_semantics = [#tpu.dimension_semantics<parallel>], iteration_bounds = array<i64: 1>, scalar_prefetch = 0 : i64, scratch_operands = 0 : i64, tpu.core_type = #tpu.core_type<tc>, window_params = [{transform_indices = @transform_0, window_bounds = array<i64: 1, 50, 256>}, {pipeline_mode = #tpu.pipeline_mode<synchronous>, transform_indices = @transform_1, window_bounds = array<i64: 256, 128>}, {transform_indices = @transform_2, window_bounds = array<i64: 1, 50, 128>}]} {
    %c0 = arith.constant 0 : index
    %c0_0 = arith.constant 0 : index
    %c0_1 = arith.constant 0 : index
    %0 = vector.load %arg1[%c0, %c0_0, %c0_1] : memref<1x50x256xbf16, #tpu.memory_space<vmem>>, vector<1x50x256xbf16>
    %1 = vector.shape_cast %0 : vector<1x50x256xbf16> to vector<50x256xbf16>
    %c0_2 = arith.constant 0 : index
    %c0_3 = arith.constant 0 : index
    %2 = vector.load %arg2[%c0_2, %c0_3] : memref<256x128xbf16, #tpu.memory_space<vmem>>, vector<256x128xbf16>
    %cst = arith.constant dense<0.000000e+00> : vector<50x128xf32>
    %3 = tpu.matmul %1, %2, %cst {dimension_numbers = #tpu.dot_dimension_numbers<[1], [0], [0], [1], [0, 0, 1, 1], [], []>} : vector<50x256xbf16>, vector<256x128xbf16>, vector<50x128xf32> -> vector<50x128xf32>
    %cst_4 = arith.constant 0.000000e+00 : f32
    %4 = vector.broadcast %cst_4 : f32 to vector<50x128xf32>
    %5 = arith.maximumf %3, %4 : vector<50x128xf32>
    %6 = arith.truncf %5 : vector<50x128xf32> to vector<50x128xbf16>
    %c0_5 = arith.constant 0 : index
    %c0_6 = arith.constant 0 : index
    %c0_7 = arith.constant 0 : index
    %7 = vector.load %arg3[%c0_5, %c0_6, %c0_7] : memref<1x50x128xbf16, #tpu.memory_space<vmem>>, vector<1x50x128xbf16>
    %8 = vector.shape_cast %7 : vector<1x50x128xbf16> to vector<50x128xbf16>
    %9 = vector.shape_cast %6 : vector<50x128xbf16> to vector<1x50x128xbf16>
    tpu.vector_store %arg3[%c0_5, %c0_6, %c0_7], %9 {strides = array<i32>} : memref<1x50x128xbf16, #tpu.memory_space<vmem>>, vector<1x50x128xbf16>,
    return
  }
  func.func @transform_0(%arg0: i32) -> (i32, i32, i32) {
    %c0_i32 = arith.constant 0 : i32
    %c0_i32_0 = arith.constant 0 : i32
    %c0_i32_1 = arith.constant 0 : i32
    return %arg0, %c0_i32, %c0_i32_0 : i32, i32, i32
  }
  func.func @transform_1(%arg0: i32) -> (i32, i32) {
    %c0_i32 = arith.constant 0 : i32
    %c0_i32_0 = arith.constant 0 : i32
    %c0_i32_1 = arith.constant 0 : i32
    return %c0_i32, %c0_i32_0 : i32, i32
  }
  func.func @transform_2(%arg0: i32) -> (i32, i32, i32) {
    %c0_i32 = arith.constant 0 : i32
    %c0_i32_0 = arith.constant 0 : i32
    %c0_i32_1 = arith.constant 0 : i32
    return %arg0, %c0_i32, %c0_i32_0 : i32, i32, i32
  }
}

module attributes {stable_mosaic.version = 11 : i64} {
  func.func @_matmul_act_kernel(%arg0: i32, %arg1: memref<1x162x128xbf16, #tpu.memory_space<vmem>>, %arg2: memref<128x64xbf16, #tpu.memory_space<vmem>>, %arg3: memref<1x162x64xbf16, #tpu.memory_space<vmem>>) attributes {dimension_semantics = [#tpu.dimension_semantics<parallel>], iteration_bounds = array<i64: 1>, scalar_prefetch = 0 : i64, scratch_operands = 0 : i64, tpu.core_type = #tpu.core_type<tc>, window_params = [{transform_indices = @transform_0, window_bounds = array<i64: 1, 162, 128>}, {pipeline_mode = #tpu.pipeline_mode<synchronous>, transform_indices = @transform_1, window_bounds = array<i64: 128, 64>}, {transform_indices = @transform_2, window_bounds = array<i64: 1, 162, 64>}]} {
    %c0 = arith.constant 0 : index
    %c0_0 = arith.constant 0 : index
    %c0_1 = arith.constant 0 : index
    %0 = vector.load %arg1[%c0, %c0_0, %c0_1] : memref<1x162x128xbf16, #tpu.memory_space<vmem>>, vector<1x162x128xbf16>
    %1 = vector.shape_cast %0 : vector<1x162x128xbf16> to vector<162x128xbf16>
    %c0_2 = arith.constant 0 : index
    %c0_3 = arith.constant 0 : index
    %2 = vector.load %arg2[%c0_2, %c0_3] : memref<128x64xbf16, #tpu.memory_space<vmem>>, vector<128x64xbf16>
    %cst = arith.constant dense<0.000000e+00> : vector<162x64xf32>
    %3 = tpu.matmul %1, %2, %cst {dimension_numbers = #tpu.dot_dimension_numbers<[1], [0], [0], [1], [0, 0, 1, 1], [], []>} : vector<162x128xbf16>, vector<128x64xbf16>, vector<162x64xf32> -> vector<162x64xf32>
    %cst_4 = arith.constant 0.000000e+00 : f32
    %4 = vector.broadcast %cst_4 : f32 to vector<162x64xf32>
    %5 = arith.maximumf %3, %4 : vector<162x64xf32>
    %6 = arith.truncf %5 : vector<162x64xf32> to vector<162x64xbf16>
    %c0_5 = arith.constant 0 : index
    %c0_6 = arith.constant 0 : index
    %c0_7 = arith.constant 0 : index
    %7 = vector.load %arg3[%c0_5, %c0_6, %c0_7] : memref<1x162x64xbf16, #tpu.memory_space<vmem>>, vector<1x162x64xbf16>
    %8 = vector.shape_cast %7 : vector<1x162x64xbf16> to vector<162x64xbf16>
    %9 = vector.shape_cast %6 : vector<162x64xbf16> to vector<1x162x64xbf16>
    tpu.vector_store %arg3[%c0_5, %c0_6, %c0_7], %9 {strides = array<i32>} : memref<1x162x64xbf16, #tpu.memory_space<vmem>>, vector<1x162x64xbf16>,
    return
  }
  func.func @transform_0(%arg0: i32) -> (i32, i32, i32) {
    %c0_i32 = arith.constant 0 : i32
    %c0_i32_0 = arith.constant 0 : i32
    %c0_i32_1 = arith.constant 0 : i32
    return %arg0, %c0_i32, %c0_i32_0 : i32, i32, i32
  }
  func.func @transform_1(%arg0: i32) -> (i32, i32) {
    %c0_i32 = arith.constant 0 : i32
    %c0_i32_0 = arith.constant 0 : i32
    %c0_i32_1 = arith.constant 0 : i32
    return %c0_i32, %c0_i32_0 : i32, i32
  }
  func.func @transform_2(%arg0: i32) -> (i32, i32, i32) {
    %c0_i32 = arith.constant 0 : i32
    %c0_i32_0 = arith.constant 0 : i32
    %c0_i32_1 = arith.constant 0 : i32
    return %arg0, %c0_i32, %c0_i32_0 : i32, i32, i32
  }
}

module attributes {stable_mosaic.version = 11 : i64} {
  func.func @_matmul_act_kernel(%arg0: i32, %arg1: memref<1x289x64xbf16, #tpu.memory_space<vmem>>, %arg2: memref<64x32xbf16, #tpu.memory_space<vmem>>, %arg3: memref<1x289x32xbf16, #tpu.memory_space<vmem>>) attributes {dimension_semantics = [#tpu.dimension_semantics<parallel>], iteration_bounds = array<i64: 2>, scalar_prefetch = 0 : i64, scratch_operands = 0 : i64, tpu.core_type = #tpu.core_type<tc>, window_params = [{transform_indices = @transform_0, window_bounds = array<i64: 1, 289, 64>}, {pipeline_mode = #tpu.pipeline_mode<synchronous>, transform_indices = @transform_1, window_bounds = array<i64: 64, 32>}, {transform_indices = @transform_2, window_bounds = array<i64: 1, 289, 32>}]} {
    %c0 = arith.constant 0 : index
    %c0_0 = arith.constant 0 : index
    %c0_1 = arith.constant 0 : index
    %0 = vector.load %arg1[%c0, %c0_0, %c0_1] : memref<1x289x64xbf16, #tpu.memory_space<vmem>>, vector<1x289x64xbf16>
    %1 = vector.shape_cast %0 : vector<1x289x64xbf16> to vector<289x64xbf16>
    %c0_2 = arith.constant 0 : index
    %c0_3 = arith.constant 0 : index
    %2 = vector.load %arg2[%c0_2, %c0_3] : memref<64x32xbf16, #tpu.memory_space<vmem>>, vector<64x32xbf16>
    %cst = arith.constant dense<0.000000e+00> : vector<289x32xf32>
    %3 = tpu.matmul %1, %2, %cst {dimension_numbers = #tpu.dot_dimension_numbers<[1], [0], [0], [1], [0, 0, 1, 1], [], []>} : vector<289x64xbf16>, vector<64x32xbf16>, vector<289x32xf32> -> vector<289x32xf32>
    %cst_4 = arith.constant 0.000000e+00 : f32
    %4 = vector.broadcast %cst_4 : f32 to vector<289x32xf32>
    %5 = arith.maximumf %3, %4 : vector<289x32xf32>
    %6 = arith.truncf %5 : vector<289x32xf32> to vector<289x32xbf16>
    %c0_5 = arith.constant 0 : index
    %c0_6 = arith.constant 0 : index
    %c0_7 = arith.constant 0 : index
    %7 = vector.load %arg3[%c0_5, %c0_6, %c0_7] : memref<1x289x32xbf16, #tpu.memory_space<vmem>>, vector<1x289x32xbf16>
    %8 = vector.shape_cast %7 : vector<1x289x32xbf16> to vector<289x32xbf16>
    %9 = vector.shape_cast %6 : vector<289x32xbf16> to vector<1x289x32xbf16>
    tpu.vector_store %arg3[%c0_5, %c0_6, %c0_7], %9 {strides = array<i32>} : memref<1x289x32xbf16, #tpu.memory_space<vmem>>, vector<1x289x32xbf16>,
    return
  }
  func.func @transform_0(%arg0: i32) -> (i32, i32, i32) {
    %c0_i32 = arith.constant 0 : i32
    %c0_i32_0 = arith.constant 0 : i32
    %c0_i32_1 = arith.constant 0 : i32
    return %arg0, %c0_i32, %c0_i32_0 : i32, i32, i32
  }
  func.func @transform_1(%arg0: i32) -> (i32, i32) {
    %c0_i32 = arith.constant 0 : i32
    %c0_i32_0 = arith.constant 0 : i32
    %c0_i32_1 = arith.constant 0 : i32
    return %c0_i32, %c0_i32_0 : i32, i32
  }
  func.func @transform_2(%arg0: i32) -> (i32, i32, i32) {
    %c0_i32 = arith.constant 0 : i32
    %c0_i32_0 = arith.constant 0 : i32
    %c0_i32_1 = arith.constant 0 : i32
    return %arg0, %c0_i32, %c0_i32_0 : i32, i32, i32
  }
}

module attributes {stable_mosaic.version = 11 : i64} {
  func.func @_matmul_act_kernel(%arg0: i32, %arg1: memref<1x1089x32xbf16, #tpu.memory_space<vmem>>, %arg2: memref<32x12xbf16, #tpu.memory_space<vmem>>, %arg3: memref<1x1089x12xbf16, #tpu.memory_space<vmem>>) attributes {dimension_semantics = [#tpu.dimension_semantics<parallel>], iteration_bounds = array<i64: 2>, scalar_prefetch = 0 : i64, scratch_operands = 0 : i64, tpu.core_type = #tpu.core_type<tc>, window_params = [{transform_indices = @transform_0, window_bounds = array<i64: 1, 1089, 32>}, {pipeline_mode = #tpu.pipeline_mode<synchronous>, transform_indices = @transform_1, window_bounds = array<i64: 32, 12>}, {transform_indices = @transform_2, window_bounds = array<i64: 1, 1089, 12>}]} {
    %c0 = arith.constant 0 : index
    %c0_0 = arith.constant 0 : index
    %c0_1 = arith.constant 0 : index
    %0 = vector.load %arg1[%c0, %c0_0, %c0_1] : memref<1x1089x32xbf16, #tpu.memory_space<vmem>>, vector<1x1089x32xbf16>
    %1 = vector.shape_cast %0 : vector<1x1089x32xbf16> to vector<1089x32xbf16>
    %c0_2 = arith.constant 0 : index
    %c0_3 = arith.constant 0 : index
    %2 = vector.load %arg2[%c0_2, %c0_3] : memref<32x12xbf16, #tpu.memory_space<vmem>>, vector<32x12xbf16>
    %cst = arith.constant dense<0.000000e+00> : vector<1089x12xf32>
    %3 = tpu.matmul %1, %2, %cst {dimension_numbers = #tpu.dot_dimension_numbers<[1], [0], [0], [1], [0, 0, 1, 1], [], []>} : vector<1089x32xbf16>, vector<32x12xbf16>, vector<1089x12xf32> -> vector<1089x12xf32>
    %4 = math.tanh %3 : vector<1089x12xf32>
    %5 = arith.truncf %4 : vector<1089x12xf32> to vector<1089x12xbf16>
    %c0_4 = arith.constant 0 : index
    %c0_5 = arith.constant 0 : index
    %c0_6 = arith.constant 0 : index
    %6 = vector.load %arg3[%c0_4, %c0_5, %c0_6] : memref<1x1089x12xbf16, #tpu.memory_space<vmem>>, vector<1x1089x12xbf16>
    %7 = vector.shape_cast %6 : vector<1x1089x12xbf16> to vector<1089x12xbf16>
    %8 = vector.shape_cast %5 : vector<1089x12xbf16> to vector<1x1089x12xbf16>
    tpu.vector_store %arg3[%c0_4, %c0_5, %c0_6], %8 {strides = array<i32>} : memref<1x1089x12xbf16, #tpu.memory_space<vmem>>, vector<1x1089x12xbf16>,
    return
  }
  func.func @transform_0(%arg0: i32) -> (i32, i32, i32) {
    %c0_i32 = arith.constant 0 : i32
    %c0_i32_0 = arith.constant 0 : i32
    %c0_i32_1 = arith.constant 0 : i32
    return %arg0, %c0_i32, %c0_i32_0 : i32, i32, i32
  }
  func.func @transform_1(%arg0: i32) -> (i32, i32) {
    %c0_i32 = arith.constant 0 : i32
    %c0_i32_0 = arith.constant 0 : i32
    %c0_i32_1 = arith.constant 0 : i32
    return %c0_i32, %c0_i32_0 : i32, i32
  }
  func.func @transform_2(%arg0: i32) -> (i32, i32, i32) {
    %c0_i32 = arith.constant 0 : i32
    %c0_i32_0 = arith.constant 0 : i32
    %c0_i32_1 = arith.constant 0 : i32
    return %arg0, %c0_i32, %c0_i32_0 : i32, i32, i32
  }
}

</mosaic_0001>

<llo_original>
// kernel: generator_forward.5
$region0: #{generator_forward.5}
  #allocation0 [shape = 'u32[]', space=smem, size = 0x4, offset = 0x4, fixed_abs, tag = 'smem constant byte address 0x4 - core index']
  #allocation1 [shape = 'u32[144,128]{1,0:T(1,128)}', space=vmem, size = 0x12000, scoped, tag = 'internal scratch']
  %s0 = inlined_call_operand.vmem [shape: bf16[1,2,32], index: 0, kind: input, shape index: {}]
  %s1 = inlined_call_operand.hbm [shape: bf16[32,1024], index: 1, kind: input, shape index: {}]
  %s2 = inlined_call_operand.vmem [shape: bf16[1,2,1024], index: 2, kind: output, shape index: {}]
  %s3 = sld [smem:[#allocation0]]
  $region22: #{generator_forward.5} parent=0
    _
  %s5 = ssub.s32 1, %s3
  %s6 = scalar_select 0, %s5, %s3
  $region1: #{generator_forward.5} parent=0
    #allocation2 [shape = 'u8[65536]{0}', space=vmem, size = 0x10000, scoped, tag = 'input window, operand 1, single buffered']
    #allocation3 [shape = 's32[1]{0}', space=sflag, size = 0x4, scoped, tag = 'scoped memory for generator_forward.5']
    %7 = vsyncpa [#allocation3], 0
    // Predicated region
    $region2: #{generator_forward.5} parent=1 // pred_check
      _
    $region3: #{generator_forward.5} parent=1 // pred_check_branch
      %9 = sbr.rel (0) target = $region5
    $region4: #{generator_forward.5} parent=1 // pred_region
      _
    $region5: #{generator_forward.5} parent=1 // pred_fallthru
      _
    // Predicated region
    $region6: #{generator_forward.5} parent=1 // pred_check
      _
    $region7: #{generator_forward.5} parent=1 // pred_check_branch
      %11 = sbr.rel (0) target = $region9
    $region8: #{generator_forward.5} parent=1 // pred_region
      %s13 = ssub.s32 2048, 2048
      %14 = vsyncadd [#allocation3], %s13
      %s15 = sshll.u32 [#allocation2], 4
      %s16 = int_to_ptr.vmem [resolvable:$true] %s15
      %21 = dma.hbm_to_vmem [thread:$0]  %s1, 2048, %s16, [#allocation3], 512, 512, 32
    $region9: #{generator_forward.5} parent=1 // pred_fallthru
      _
    // Predicated region
    $region10: #{generator_forward.5} parent=1 // pred_check
      _
    $region11: #{generator_forward.5} parent=1 // pred_check_branch
      %23 = sbr.rel (0) target = $region13
    $region12: #{generator_forward.5} parent=1 // pred_region
      %24 = dma.done [#allocation3], 2048
    $region13: #{generator_forward.5} parent=1 // pred_fallthru
      _
    %v26 = vld [vmem:[%s0] sm:$0x1]
    %v27 = vld [vmem:[#allocation2] sm:$0xff]
    %v28 = vld [vmem:[#allocation2 + $0x8] sm:$0xff]
    %v29 = vld [vmem:[#allocation2 + $0x10] sm:$0xff]
    %v30 = vld [vmem:[#allocation2 + $0x18] sm:$0xff]
    %v31 = vld [vmem:[#allocation2 + $0x20] sm:$0xff]
    %v32 = vld [vmem:[#allocation2 + $0x28] sm:$0xff]
    %v33 = vld [vmem:[#allocation2 + $0x30] sm:$0xff]
    %v34 = vld [vmem:[#allocation2 + $0x38] sm:$0xff]
    %v35 = vld [vmem:[#allocation2 + $0x40] sm:$0xff]
    %v36 = vld [vmem:[#allocation2 + $0x48] sm:$0xff]
    %v37 = vld [vmem:[#allocation2 + $0x50] sm:$0xff]
    %v38 = vld [vmem:[#allocation2 + $0x58] sm:$0xff]
    %v39 = vld [vmem:[#allocation2 + $0x60] sm:$0xff]
    %v40 = vld [vmem:[#allocation2 + $0x68] sm:$0xff]
    %v41 = vld [vmem:[#allocation2 + $0x70] sm:$0xff]
    %v42 = vld [vmem:[#allocation2 + $0x78] sm:$0xff]
    %v59 = vunpack.c.l.b16 %v27
    %v60 = vunpack.c.h.b16 %v27
    %v61 = vunpack.c.l.b16 %v28
    %v62 = vunpack.c.h.b16 %v28
    %v63 = vunpack.c.l.b16 %v29
    %v64 = vunpack.c.h.b16 %v29
    %v65 = vunpack.c.l.b16 %v30
    %v66 = vunpack.c.h.b16 %v30
    %v67 = vunpack.c.l.b16 %v31
    %v68 = vunpack.c.h.b16 %v31
    %v69 = vunpack.c.l.b16 %v32
    %v70 = vunpack.c.h.b16 %v32
    %v71 = vunpack.c.l.b16 %v33
    %v72 = vunpack.c.h.b16 %v33
    %v73 = vunpack.c.l.b16 %v34
    %v74 = vunpack.c.h.b16 %v34
    %v75 = vunpack.c.l.b16 %v35
    %v76 = vunpack.c.h.b16 %v35
    %v77 = vunpack.c.l.b16 %v36
    %v78 = vunpack.c.h.b16 %v36
    %v79 = vunpack.c.l.b16 %v37
    %v80 = vunpack.c.h.b16 %v37
    %v81 = vunpack.c.l.b16 %v38
    %v82 = vunpack.c.h.b16 %v38
    %v83 = vunpack.c.l.b16 %v39
    %v84 = vunpack.c.h.b16 %v39
    %v85 = vunpack.c.l.b16 %v40
    %v86 = vunpack.c.h.b16 %v40
    %v87 = vunpack.c.l.b16 %v41
    %v88 = vunpack.c.h.b16 %v41
    %v89 = vunpack.c.l.b16 %v42
    %v90 = vunpack.c.h.b16 %v42
    %v91 = vpack.c.b16 %v67, %v59
    %v92 = vpack.c.b16 %v68, %v60
    %v93 = vpack.c.b16 %v69, %v61
    %v94 = vpack.c.b16 %v70, %v62
    %v95 = vpack.c.b16 %v71, %v63
    %v96 = vpack.c.b16 %v72, %v64
    %v97 = vpack.c.b16 %v73, %v65
    %v98 = vpack.c.b16 %v74, %v66
    %v99 = vpack.c.b16 %v83, %v75
    %v100 = vpack.c.b16 %v84, %v76
    %v101 = vpack.c.b16 %v85, %v77
    %v102 = vpack.c.b16 %v86, %v78
    %v103 = vpack.c.b16 %v87, %v79
    %v104 = vpack.c.b16 %v88, %v80
    %v105 = vpack.c.b16 %v89, %v81
    %v106 = vpack.c.b16 %v90, %v82
    %vm123 = vcmask 261120
    %v125 = vsel %vm123, %v26, 0
    %127 = vmatprep.subr.bf16.mxu0 0
    %128 = vmatpush1.bf16.msra.mxu0 0
    %129 = vmatprep.subr.bf16.mxu0 0
    %130 = vmatpush1.bf16.msra.mxu0 0
    %131 = vmatprep.subr.bf16.mxu0 0
    %132 = vmatpush1.bf16.msra.mxu0 0
    %133 = vmatprep.subr.bf16.mxu0 0
    %134 = vmatpush1.bf16.msra.mxu0 0
    %135 = vmatprep.subr.bf16.mxu0 0
    %136 = vmatpush1.bf16.msra.mxu0 0
    %137 = vmatprep.subr.bf16.mxu0 0
    %138 = vmatpush1.bf16.msra.mxu0 0
    %139 = vmatprep.subr.bf16.mxu0 %v100
    %140 = vmatpush1.bf16.msra.mxu0 %v99
    %141 = vmatprep.subr.bf16.mxu0 %v92
    %142 = vmatpush1.bf16.msra.mxu0 %v91
    %143 = vmatprep.subr.bf16.mxu0 0
    %144 = vmatpush2.bf16.msra.mxu0 0
    %145 = vmatprep.subr.bf16.mxu0 0
    %146 = vmatpush2.bf16.msra.mxu0 0
    %147 = vmatprep.subr.bf16.mxu0 0
    %148 = vmatpush2.bf16.msra.mxu0 0
    %149 = vmatprep.subr.bf16.mxu0 0
    %150 = vmatpush2.bf16.msra.mxu0 0
    %151 = vmatprep.subr.bf16.mxu0 0
    %152 = vmatpush2.bf16.msra.mxu0 0
    %153 = vmatprep.subr.bf16.mxu0 0
    %154 = vmatpush2.bf16.msra.mxu0 0
    %155 = vmatprep.subr.bf16.mxu0 0
    %156 = vmatpush2.bf16.msra.mxu0 0
    %157 = vmatprep.subr.bf16.mxu0 0
    %158 = vmatpush2.bf16.msra.mxu0 0
    %159 = vmatprep.mubr.bf16.mxu0 0
    %160 = vmatmul.mubr.bf16.gmra.mxu0 %v125
    %v161 = vpop.f32.mrf.mxu0
    %v162 = vadd.f32 0.0, %v161
    %v163 = vpop.f32.mrf.mxu0
    %v164 = vadd.f32 0.0, %v163
    %v165 = vpop.f32.mrf.mxu0
    %v166 = vpop.f32.mrf.mxu0
    %167 = vdwg.mxu0
    %168 = vmatprep.subr.bf16.mxu0 0
    %169 = vmatpush1.bf16.msra.mxu0 0
    %170 = vmatprep.subr.bf16.mxu0 0
    %171 = vmatpush1.bf16.msra.mxu0 0
    %172 = vmatprep.subr.bf16.mxu0 0
    %173 = vmatpush1.bf16.msra.mxu0 0
    %174 = vmatprep.subr.bf16.mxu0 0
    %175 = vmatpush1.bf16.msra.mxu0 0
    %176 = vmatprep.subr.bf16.mxu0 0
    %177 = vmatpush1.bf16.msra.mxu0 0
    %178 = vmatprep.subr.bf16.mxu0 0
    %179 = vmatpush1.bf16.msra.mxu0 0
    %180 = vmatprep.subr.bf16.mxu0 %v102
    %181 = vmatpush1.bf16.msra.mxu0 %v101
    %182 = vmatprep.subr.bf16.mxu0 %v94
    %183 = vmatpush1.bf16.msra.mxu0 %v93
    %184 = vmatprep.subr.bf16.mxu0 0
    %185 = vmatpush2.bf16.msra.mxu0 0
    %186 = vmatprep.subr.bf16.mxu0 0
    %187 = vmatpush2.bf16.msra.mxu0 0
    %188 = vmatprep.subr.bf16.mxu0 0
    %189 = vmatpush2.bf16.msra.mxu0 0
    %190 = vmatprep.subr.bf16.mxu0 0
    %191 = vmatpush2.bf16.msra.mxu0 0
    %192 = vmatprep.subr.bf16.mxu0 0
    %193 = vmatpush2.bf16.msra.mxu0 0
    %194 = vmatprep.subr.bf16.mxu0 0
    %195 = vmatpush2.bf16.msra.mxu0 0
    %196 = vmatprep.subr.bf16.mxu0 0
    %197 = vmatpush2.bf16.msra.mxu0 0
    %198 = vmatprep.subr.bf16.mxu0 0
    %199 = vmatpush2.bf16.msra.mxu0 0
    %200 = vmatprep.mubr.bf16.mxu0 0
    %201 = vmatmul.mubr.bf16.gmra.mxu0 %v125
    %v202 = vpop.f32.mrf.mxu0
    %v203 = vadd.f32 0.0, %v202
    %v204 = vpop.f32.mrf.mxu0
    %v205 = vadd.f32 0.0, %v204
    %v206 = vpop.f32.mrf.mxu0
    %v207 = vpop.f32.mrf.mxu0
    %208 = vdwg.mxu0
    %209 = vmatprep.subr.bf16.mxu0 0
    %210 = vmatpush1.bf16.msra.mxu0 0
    %211 = vmatprep.subr.bf16.mxu0 0
    %212 = vmatpush1.bf16.msra.mxu0 0
    %213 = vmatprep.subr.bf16.mxu0 0
    %214 = vmatpush1.bf16.msra.mxu0 0
    %215 = vmatprep.subr.bf16.mxu0 0
    %216 = vmatpush1.bf16.msra.mxu0 0
    %217 = vmatprep.subr.bf16.mxu0 0
    %218 = vmatpush1.bf16.msra.mxu0 0
    %219 = vmatprep.subr.bf16.mxu0 0
    %220 = vmatpush1.bf16.msra.mxu0 0
    %221 = vmatprep.subr.bf16.mxu0 %v104
    %222 = vmatpush1.bf16.msra.mxu0 %v103
    %223 = vmatprep.subr.bf16.mxu0 %v96
    %224 = vmatpush1.bf16.msra.mxu0 %v95
    %225 = vmatprep.subr.bf16.mxu0 0
    %226 = vmatpush2.bf16.msra.mxu0 0
    %227 = vmatprep.subr.bf16.mxu0 0
    %228 = vmatpush2.bf16.msra.mxu0 0
    %229 = vmatprep.subr.bf16.mxu0 0
    %230 = vmatpush2.bf16.msra.mxu0 0
    %231 = vmatprep.subr.bf16.mxu0 0
    %232 = vmatpush2.bf16.msra.mxu0 0
    %233 = vmatprep.subr.bf16.mxu0 0
    %234 = vmatpush2.bf16.msra.mxu0 0
    %235 = vmatprep.subr.bf16.mxu0 0
    %236 = vmatpush2.bf16.msra.mxu0 0
    %237 = vmatprep.subr.bf16.mxu0 0
    %238 = vmatpush2.bf16.msra.mxu0 0
    %239 = vmatprep.subr.bf16.mxu0 0
    %240 = vmatpush2.bf16.msra.mxu0 0
    %241 = vmatprep.mubr.bf16.mxu0 0
    %242 = vmatmul.mubr.bf16.gmra.mxu0 %v125
    %v243 = vpop.f32.mrf.mxu0
    %v244 = vadd.f32 0.0, %v243
    %v245 = vpop.f32.mrf.mxu0
    %v246 = vadd.f32 0.0, %v245
    %v247 = vpop.f32.mrf.mxu0
    %v248 = vpop.f32.mrf.mxu0
    %249 = vdwg.mxu0
    %250 = vmatprep.subr.bf16.mxu0 0
    %251 = vmatpush1.bf16.msra.mxu0 0
    %252 = vmatprep.subr.bf16.mxu0 0
    %253 = vmatpush1.bf16.msra.mxu0 0
    %254 = vmatprep.subr.bf16.mxu0 0
    %255 = vmatpush1.bf16.msra.mxu0 0
    %256 = vmatprep.subr.bf16.mxu0 0
    %257 = vmatpush1.bf16.msra.mxu0 0
    %258 = vmatprep.subr.bf16.mxu0 0
    %259 = vmatpush1.bf16.msra.mxu0 0
    %260 = vmatprep.subr.bf16.mxu0 0
    %261 = vmatpush1.bf16.msra.mxu0 0
    %262 = vmatprep.subr.bf16.mxu0 %v106
    %263 = vmatpush1.bf16.msra.mxu0 %v105
    %264 = vmatprep.subr.bf16.mxu0 %v98
    %265 = vmatpush1.bf16.msra.mxu0 %v97
    %266 = vmatprep.subr.bf16.mxu0 0
    %267 = vmatpush2.bf16.msra.mxu0 0
    %268 = vmatprep.subr.bf16.mxu0 0
    %269 = vmatpush2.bf16.msra.mxu0 0
    %270 = vmatprep.subr.bf16.mxu0 0
    %271 = vmatpush2.bf16.msra.mxu0 0
    %272 = vmatprep.subr.bf16.mxu0 0
    %273 = vmatpush2.bf16.msra.mxu0 0
    %274 = vmatprep.subr.bf16.mxu0 0
    %275 = vmatpush2.bf16.msra.mxu0 0
    %276 = vmatprep.subr.bf16.mxu0 0
    %277 = vmatpush2.bf16.msra.mxu0 0
    %278 = vmatprep.subr.bf16.mxu0 0
    %279 = vmatpush2.bf16.msra.mxu0 0
    %280 = vmatprep.subr.bf16.mxu0 0
    %281 = vmatpush2.bf16.msra.mxu0 0
    %282 = vmatprep.mubr.bf16.mxu0 0
    %283 = vmatmul.mubr.bf16.gmra.mxu0 %v125
    %v284 = vpop.f32.mrf.mxu0
    %v285 = vadd.f32 0.0, %v284
    %v286 = vpop.f32.mrf.mxu0
    %v287 = vadd.f32 0.0, %v286
    %v288 = vpop.f32.mrf.mxu0
    %v289 = vpop.f32.mrf.mxu0
    %290 = vdwg.mxu0
    %v291 = vmax.f32 %v162, 0.0
    %v292 = vmax.f32 %v164, 0.0
    %v293 = vmax.f32 %v203, 0.0
    %v294 = vmax.f32 %v205, 0.0
    %v295 = vmax.f32 %v244, 0.0
    %v296 = vmax.f32 %v246, 0.0
    %v297 = vmax.f32 %v285, 0.0
    %v298 = vmax.f32 %v287, 0.0
    %v299 = vpack.c.bf16 %v291, %v291
    %v300 = vpack.c.bf16 %v292, %v292
    %v301 = vpack.c.bf16 %v293, %v293
    %v302 = vpack.c.bf16 %v294, %v294
    %v303 = vpack.c.bf16 %v295, %v295
    %v304 = vpack.c.bf16 %v296, %v296
    %v305 = vpack.c.bf16 %v297, %v297
    %v306 = vpack.c.bf16 %v298, %v298
    %v315 = vcombine.low %v299, %v300
    %v316 = vcombine.low %v301, %v302
    %v317 = vcombine.low %v303, %v304
    %v318 = vcombine.low %v305, %v306
    %v320 = vunpack.c.l.s4 1966171168
    %v321 = vunpack.c.0.s8 %v320
    %v322 = vlaneseq
    %v323 = vshrl.u32 %v322, 7
    %v324 = vsub.s32 %v321, %v323
    %v325 = vrot.slane %v315, %v324
    %v327 = vunpack.c.l.s4 1966171168
    %v328 = vunpack.c.0.s8 %v327
    %v329 = vlaneseq
    %v330 = vshrl.u32 %v329, 7
    %v331 = vsub.s32 %v328, %v330
    %v332 = vrot.slane %v316, %v331
    %v334 = vunpack.c.l.s4 1966171168
    %v335 = vunpack.c.0.s8 %v334
    %v336 = vlaneseq
    %v337 = vshrl.u32 %v336, 7
    %v338 = vsub.s32 %v335, %v337
    %v339 = vrot.slane %v317, %v338
    %v341 = vunpack.c.l.s4 1966171168
    %v342 = vunpack.c.0.s8 %v341
    %v343 = vlaneseq
    %v344 = vshrl.u32 %v343, 7
    %v345 = vsub.s32 %v342, %v344
    %v346 = vrot.slane %v318, %v345
    %v347 = vcombine.low %v325, %v332
    %v348 = vcombine.low %v339, %v346
    %v350 = vunpack.c.l.s4 1966171168
    %v351 = vunpack.c.0.s8 %v350
    %v352 = vlaneseq
    %v353 = vshrl.u32 %v352, 7
    %v354 = vsub.s32 %v351, %v353
    %v355 = vrot.slane %v347, %v354
    %v357 = vunpack.c.l.s4 1966171168
    %v358 = vunpack.c.0.s8 %v357
    %v359 = vlaneseq
    %v360 = vshrl.u32 %v359, 7
    %v361 = vsub.s32 %v358, %v360
    %v362 = vrot.slane %v348, %v361
    %v363 = vcombine.low %v355, %v362
    %365 = vst [vmem:[%s2] sm:$0xff] %v363
    // Predicated region
    $region14: #{generator_forward.5} parent=1 // pred_check
      _
    $region15: #{generator_forward.5} parent=1 // pred_check_branch
      %367 = sbr.rel (0) target = $region17
    $region16: #{generator_forward.5} parent=1 // pred_region
      _
    $region17: #{generator_forward.5} parent=1 // pred_fallthru
      _
    // Predicated region
    $region18: #{generator_forward.5} parent=1 // pred_check
      _
    $region19: #{generator_forward.5} parent=1 // pred_check_branch
      %369 = sbr.rel (0) target = $region21
    $region20: #{generator_forward.5} parent=1 // pred_region
      _
    $region21: #{generator_forward.5} parent=1 // pred_fallthru
      _
    %370 = vsyncpa [#allocation3], 1

// kernel: generator_forward.6
$region0: #{generator_forward.6}
  #allocation0 [shape = 'u32[]', space=smem, size = 0x4, offset = 0x4, fixed_abs, tag = 'smem constant byte address 0x4 - core index']
  #allocation1 [shape = 'u32[144,128]{1,0:T(1,128)}', space=vmem, size = 0x12000, scoped, tag = 'internal scratch']
  %s0 = inlined_call_operand.vmem [shape: bf16[1,50,256], index: 0, kind: input, shape index: {}]
  %s1 = inlined_call_operand.hbm [shape: bf16[256,128], index: 1, kind: input, shape index: {}]
  %s2 = inlined_call_operand.vmem [shape: bf16[1,50,128], index: 2, kind: output, shape index: {}]
  %s3 = sld [smem:[#allocation0]]
  $region22: #{generator_forward.6} parent=0
    _
  %s5 = ssub.s32 1, %s3
  %s6 = scalar_select 0, %s5, %s3
  $region1: #{generator_forward.6} parent=0
    #allocation2 [shape = 'u8[65536]{0}', space=vmem, size = 0x10000, scoped, tag = 'input window, operand 1, single buffered']
    #allocation3 [shape = 's32[1]{0}', space=sflag, size = 0x4, scoped, tag = 'scoped memory for generator_forward.6']
    %7 = vsyncpa [#allocation3], 0
    // Predicated region
    $region2: #{generator_forward.6} parent=1 // pred_check
      _
    $region3: #{generator_forward.6} parent=1 // pred_check_branch
      %9 = sbr.rel (0) target = $region5
    $region4: #{generator_forward.6} parent=1 // pred_region
      _
    $region5: #{generator_forward.6} parent=1 // pred_fallthru
      _
    // Predicated region
    $region6: #{generator_forward.6} parent=1 // pred_check
      _
    $region7: #{generator_forward.6} parent=1 // pred_check_branch
      %11 = sbr.rel (0) target = $region9
    $region8: #{generator_forward.6} parent=1 // pred_region
      %s13 = ssub.s32 2048, 2048
      %14 = vsyncadd [#allocation3], %s13
      %s15 = sshll.u32 [#allocation2], 4
      %s16 = int_to_ptr.vmem [resolvable:$true] %s15
      %21 = dma.hbm_to_vmem [thread:$0]  %s1, 2048, %s16, [#allocation3], 64, 64, 4
    $region9: #{generator_forward.6} parent=1 // pred_fallthru
      _
    // Predicated region
    $region10: #{generator_forward.6} parent=1 // pred_check
      _
    $region11: #{generator_forward.6} parent=1 // pred_check_branch
      %23 = sbr.rel (0) target = $region13
    $region12: #{generator_forward.6} parent=1 // pred_region
      %24 = dma.done [#allocation3], 2048
    $region13: #{generator_forward.6} parent=1 // pred_fallthru
      _
    %v26 = vld [vmem:[%s0] sm:$0xff]
    %v27 = vld [vmem:[%s0 + $0x8] sm:$0xff]
    %v28 = vld [vmem:[%s0 + $0x10] sm:$0xff]
    %v29 = vld [vmem:[%s0 + $0x18] sm:$0xff]
    %v30 = vld [vmem:[%s0 + $0x20] sm:$0xff]
    %v31 = vld [vmem:[%s0 + $0x28] sm:$0xff]
    %v32 = vld [vmem:[%s0 + $0x30] sm:$0x11]
    %v33 = vld [vmem:[#allocation2] sm:$0xf]
    %v34 = vld [vmem:[#allocation2 + $0x4] sm:$0xf]
    %v35 = vld [vmem:[#allocation2 + $0x8] sm:$0xf]
    %v36 = vld [vmem:[#allocation2 + $0xc] sm:$0xf]
    %v37 = vld [vmem:[#allocation2 + $0x10] sm:$0xf]
    %v38 = vld [vmem:[#allocation2 + $0x14] sm:$0xf]
    %v39 = vld [vmem:[#allocation2 + $0x18] sm:$0xf]
    %v40 = vld [vmem:[#allocation2 + $0x1c] sm:$0xf]
    %v41 = vld [vmem:[#allocation2 + $0x20] sm:$0xf]
    %v42 = vld [vmem:[#allocation2 + $0x24] sm:$0xf]
    %v43 = vld [vmem:[#allocation2 + $0x28] sm:$0xf]
    %v44 = vld [vmem:[#allocation2 + $0x2c] sm:$0xf]
    %v45 = vld [vmem:[#allocation2 + $0x30] sm:$0xf]
    %v46 = vld [vmem:[#allocation2 + $0x34] sm:$0xf]
    %v47 = vld [vmem:[#allocation2 + $0x38] sm:$0xf]
    %v48 = vld [vmem:[#allocation2 + $0x3c] sm:$0xf]
    %v49 = vld [vmem:[#allocation2 + $0x40] sm:$0xf]
    %v50 = vld [vmem:[#allocation2 + $0x44] sm:$0xf]
    %v51 = vld [vmem:[#allocation2 + $0x48] sm:$0xf]
    %v52 = vld [vmem:[#allocation2 + $0x4c] sm:$0xf]
    %v53 = vld [vmem:[#allocation2 + $0x50] sm:$0xf]
    %v54 = vld [vmem:[#allocation2 + $0x54] sm:$0xf]
    %v55 = vld [vmem:[#allocation2 + $0x58] sm:$0xf]
    %v56 = vld [vmem:[#allocation2 + $0x5c] sm:$0xf]
    %v57 = vld [vmem:[#allocation2 + $0x60] sm:$0xf]
    %v58 = vld [vmem:[#allocation2 + $0x64] sm:$0xf]
    %v59 = vld [vmem:[#allocation2 + $0x68] sm:$0xf]
    %v60 = vld [vmem:[#allocation2 + $0x6c] sm:$0xf]
    %v61 = vld [vmem:[#allocation2 + $0x70] sm:$0xf]
    %v62 = vld [vmem:[#allocation2 + $0x74] sm:$0xf]
    %v63 = vld [vmem:[#allocation2 + $0x78] sm:$0xf]
    %v64 = vld [vmem:[#allocation2 + $0x7c] sm:$0xf]
    %v72 = vunpack.c.l.b16 %v26
    %v73 = vunpack.c.h.b16 %v26
    %v74 = vunpack.c.l.b16 %v27
    %v75 = vunpack.c.h.b16 %v27
    %v76 = vunpack.c.l.b16 %v28
    %v77 = vunpack.c.h.b16 %v28
    %v78 = vunpack.c.l.b16 %v29
    %v79 = vunpack.c.h.b16 %v29
    %v80 = vunpack.c.l.b16 %v30
    %v81 = vunpack.c.h.b16 %v30
    %v82 = vunpack.c.l.b16 %v31
    %v83 = vunpack.c.h.b16 %v31
    %v84 = vunpack.c.l.b16 %v32
    %v85 = vunpack.c.h.b16 %v32
    %v86 = vpack.c.b16 %v74, %v72
    %v87 = vpack.c.b16 %v75, %v73
    %v88 = vpack.c.b16 %v78, %v76
    %v89 = vpack.c.b16 %v79, %v77
    %v90 = vpack.c.b16 %v82, %v80
    %v91 = vpack.c.b16 %v83, %v81
    %v92 = vpack.c.b16 %v84, %v84
    %v93 = vpack.c.b16 %v85, %v85
    %v134 = vunpack.c.l.b16 %v33
    %v135 = vunpack.c.l.b16 %v34
    %v136 = vunpack.c.l.b16 %v35
    %v137 = vunpack.c.l.b16 %v36
    %v138 = vunpack.c.l.b16 %v37
    %v139 = vunpack.c.l.b16 %v38
    %v140 = vunpack.c.l.b16 %v39
    %v141 = vunpack.c.l.b16 %v40
    %v142 = vunpack.c.l.b16 %v41
    %v143 = vunpack.c.l.b16 %v42
    %v144 = vunpack.c.l.b16 %v43
    %v145 = vunpack.c.l.b16 %v44
    %v146 = vunpack.c.l.b16 %v45
    %v147 = vunpack.c.l.b16 %v46
    %v148 = vunpack.c.l.b16 %v47
    %v149 = vunpack.c.l.b16 %v48
    %v150 = vunpack.c.l.b16 %v49
    %v151 = vunpack.c.l.b16 %v50
    %v152 = vunpack.c.l.b16 %v51
    %v153 = vunpack.c.l.b16 %v52
    %v154 = vunpack.c.l.b16 %v53
    %v155 = vunpack.c.l.b16 %v54
    %v156 = vunpack.c.l.b16 %v55
    %v157 = vunpack.c.l.b16 %v56
    %v158 = vunpack.c.l.b16 %v57
    %v159 = vunpack.c.l.b16 %v58
    %v160 = vunpack.c.l.b16 %v59
    %v161 = vunpack.c.l.b16 %v60
    %v162 = vunpack.c.l.b16 %v61
    %v163 = vunpack.c.l.b16 %v62
    %v164 = vunpack.c.l.b16 %v63
    %v165 = vunpack.c.l.b16 %v64
    %v166 = vpack.c.b16 %v135, %v134
    %v167 = vpack.c.b16 %v137, %v136
    %v168 = vpack.c.b16 %v139, %v138
    %v169 = vpack.c.b16 %v141, %v140
    %v170 = vpack.c.b16 %v143, %v142
    %v171 = vpack.c.b16 %v145, %v144
    %v172 = vpack.c.b16 %v147, %v146
    %v173 = vpack.c.b16 %v149, %v148
    %v174 = vpack.c.b16 %v151, %v150
    %v175 = vpack.c.b16 %v153, %v152
    %v176 = vpack.c.b16 %v155, %v154
    %v177 = vpack.c.b16 %v157, %v156
    %v178 = vpack.c.b16 %v159, %v158
    %v179 = vpack.c.b16 %v161, %v160
    %v180 = vpack.c.b16 %v163, %v162
    %v181 = vpack.c.b16 %v165, %v164
    %198 = vmatprep.subr.bf16.mxu0 0
    %199 = vmatpush1.bf16.msra.mxu0 %v173
    %200 = vmatprep.subr.bf16.mxu0 0
    %201 = vmatpush1.bf16.msra.mxu0 %v172
    %202 = vmatprep.subr.bf16.mxu0 0
    %203 = vmatpush1.bf16.msra.mxu0 %v171
    %204 = vmatprep.subr.bf16.mxu0 0
    %205 = vmatpush1.bf16.msra.mxu0 %v170
    %206 = vmatprep.subr.bf16.mxu0 0
    %207 = vmatpush1.bf16.msra.mxu0 %v169
    %208 = vmatprep.subr.bf16.mxu0 0
    %209 = vmatpush1.bf16.msra.mxu0 %v168
    %210 = vmatprep.subr.bf16.mxu0 0
    %211 = vmatpush1.bf16.msra.mxu0 %v167
    %212 = vmatprep.subr.bf16.mxu0 0
    %213 = vmatpush1.bf16.msra.mxu0 %v166
    %214 = vmatprep.subr.bf16.mxu0 0
    %215 = vmatpush2.bf16.msra.mxu0 %v181
    %216 = vmatprep.subr.bf16.mxu0 0
    %217 = vmatpush2.bf16.msra.mxu0 %v180
    %218 = vmatprep.subr.bf16.mxu0 0
    %219 = vmatpush2.bf16.msra.mxu0 %v179
    %220 = vmatprep.subr.bf16.mxu0 0
    %221 = vmatpush2.bf16.msra.mxu0 %v178
    %222 = vmatprep.subr.bf16.mxu0 0
    %223 = vmatpush2.bf16.msra.mxu0 %v177
    %224 = vmatprep.subr.bf16.mxu0 0
    %225 = vmatpush2.bf16.msra.mxu0 %v176
    %226 = vmatprep.subr.bf16.mxu0 0
    %227 = vmatpush2.bf16.msra.mxu0 %v175
    %228 = vmatprep.subr.bf16.mxu0 0
    %229 = vmatpush2.bf16.msra.mxu0 %v174
    %230 = vmatprep.mubr.bf16.mxu0 %v87
    %231 = vmatmul.mubr.bf16.gmra.mxu0 %v86
    %v232 = vpop.f32.mrf.mxu0
    %v233 = vadd.f32 0.0, %v232
    %v234 = vpop.f32.mrf.mxu0
    %v235 = vpop.f32.mrf.mxu0
    %v236 = vadd.f32 0.0, %v235
    %v237 = vpop.f32.mrf.mxu0
    %238 = vmatprep.mubr.bf16.mxu0 %v89
    %239 = vmatmul.mubr.bf16.gmra.mxu0 %v88
    %v240 = vpop.f32.mrf.mxu0
    %v241 = vadd.f32 0.0, %v240
    %v242 = vpop.f32.mrf.mxu0
    %v243 = vpop.f32.mrf.mxu0
    %v244 = vadd.f32 0.0, %v243
    %v245 = vpop.f32.mrf.mxu0
    %246 = vmatprep.mubr.bf16.mxu0 %v91
    %247 = vmatmul.mubr.bf16.gmra.mxu0 %v90
    %v248 = vpop.f32.mrf.mxu0
    %v249 = vadd.f32 0.0, %v248
    %v250 = vpop.f32.mrf.mxu0
    %v251 = vpop.f32.mrf.mxu0
    %v252 = vadd.f32 0.0, %v251
    %v253 = vpop.f32.mrf.mxu0
    %254 = vmatprep.mubr.bf16.mxu0 %v93
    %255 = vmatmul.mubr.bf16.gmra.mxu0 %v92
    %v256 = vpop.f32.mrf.mxu0
    %v257 = vadd.f32 0.0, %v256
    %v258 = vpop.f32.mrf.mxu0
    %v259 = vpop.f32.mrf.mxu0
    %v260 = vpop.f32.mrf.mxu0
    %261 = vdwg.mxu0
    %v262 = vmax.f32 %v233, 0.0
    %v263 = vmax.f32 %v236, 0.0
    %v264 = vmax.f32 %v241, 0.0
    %v265 = vmax.f32 %v244, 0.0
    %v266 = vmax.f32 %v249, 0.0
    %v267 = vmax.f32 %v252, 0.0
    %v268 = vmax.f32 %v257, 0.0
    %v269 = vpack.c.bf16 %v263, %v262
    %v270 = vpack.c.bf16 %v265, %v264
    %v271 = vpack.c.bf16 %v267, %v266
    %v272 = vpack.c.bf16 %v268, %v268
    %v277 = vunpack.c.l.b16 %v269
    %v278 = vunpack.c.h.b16 %v269
    %v279 = vunpack.c.l.b16 %v270
    %v280 = vunpack.c.h.b16 %v270
    %v281 = vunpack.c.l.b16 %v271
    %v282 = vunpack.c.h.b16 %v271
    %v283 = vunpack.c.l.b16 %v272
    %v284 = vpack.c.b16 %v277, %v277
    %v285 = vpack.c.b16 %v278, %v278
    %v286 = vpack.c.b16 %v279, %v279
    %v287 = vpack.c.b16 %v280, %v280
    %v288 = vpack.c.b16 %v281, %v281
    %v289 = vpack.c.b16 %v282, %v282
    %v290 = vpack.c.b16 %v283, %v283
    %298 = vst [vmem:[%s2] sm:$0xf] %v284
    %299 = vst [vmem:[%s2 + $0x4] sm:$0xf] %v285
    %300 = vst [vmem:[%s2 + $0x8] sm:$0xf] %v286
    %301 = vst [vmem:[%s2 + $0xc] sm:$0xf] %v287
    %302 = vst [vmem:[%s2 + $0x10] sm:$0xf] %v288
    %303 = vst [vmem:[%s2 + $0x14] sm:$0xf] %v289
    %304 = vst [vmem:[%s2 + $0x18] sm:$0x1] %v290
    // Predicated region
    $region14: #{generator_forward.6} parent=1 // pred_check
      _
    $region15: #{generator_forward.6} parent=1 // pred_check_branch
      %306 = sbr.rel (0) target = $region17
    $region16: #{generator_forward.6} parent=1 // pred_region
      _
    $region17: #{generator_forward.6} parent=1 // pred_fallthru
      _
    // Predicated region
    $region18: #{generator_forward.6} parent=1 // pred_check
      _
    $region19: #{generator_forward.6} parent=1 // pred_check_branch
      %308 = sbr.rel (0) target = $region21
    $region20: #{generator_forward.6} parent=1 // pred_region
      _
    $region21: #{generator_forward.6} parent=1 // pred_fallthru
      _
    %309 = vsyncpa [#allocation3], 1

// kernel: generator_forward.7
$region0: #{generator_forward.7}
  #allocation0 [shape = 'u32[]', space=smem, size = 0x4, offset = 0x4, fixed_abs, tag = 'smem constant byte address 0x4 - core index']
  #allocation1 [shape = 'u32[144,128]{1,0:T(1,128)}', space=vmem, size = 0x12000, scoped, tag = 'internal scratch']
  %s0 = inlined_call_operand.vmem [shape: bf16[1,162,128], index: 0, kind: input, shape index: {}]
  %s1 = inlined_call_operand.vmem [shape: bf16[128,64], index: 1, kind: input, shape index: {}]
  %s2 = inlined_call_operand.vmem [shape: bf16[1,162,64], index: 2, kind: output, shape index: {}]
  %s3 = sld [smem:[#allocation0]]
  $region18: #{generator_forward.7} parent=0
    _
  %s5 = ssub.s32 1, %s3
  %s6 = scalar_select 0, %s5, %s3
  // Predicated region
  $region2: #{generator_forward.7} parent=0 // pred_check
    _
  $region3: #{generator_forward.7} parent=0 // pred_check_branch
    %8 = sbr.rel (0) target = $region5
  $region4: #{generator_forward.7} parent=0 // pred_region
    _
  $region5: #{generator_forward.7} parent=0 // pred_fallthru
    _
  // Predicated region
  $region6: #{generator_forward.7} parent=0 // pred_check
    _
  $region7: #{generator_forward.7} parent=0 // pred_check_branch
    %10 = sbr.rel (0) target = $region9
  $region8: #{generator_forward.7} parent=0 // pred_region
    _
  $region9: #{generator_forward.7} parent=0 // pred_fallthru
    _
  %v12 = vld [vmem:[%s0] sm:$0xf]
  %v13 = vld [vmem:[%s0 + $0x4] sm:$0xf]
  %v14 = vld [vmem:[%s0 + $0x8] sm:$0xf]
  %v15 = vld [vmem:[%s0 + $0xc] sm:$0xf]
  %v16 = vld [vmem:[%s0 + $0x10] sm:$0xf]
  %v17 = vld [vmem:[%s0 + $0x14] sm:$0xf]
  %v18 = vld [vmem:[%s0 + $0x18] sm:$0xf]
  %v19 = vld [vmem:[%s0 + $0x1c] sm:$0xf]
  %v20 = vld [vmem:[%s0 + $0x20] sm:$0xf]
  %v21 = vld [vmem:[%s0 + $0x24] sm:$0xf]
  %v22 = vld [vmem:[%s0 + $0x28] sm:$0xf]
  %v23 = vld [vmem:[%s0 + $0x2c] sm:$0xf]
  %v24 = vld [vmem:[%s0 + $0x30] sm:$0xf]
  %v25 = vld [vmem:[%s0 + $0x34] sm:$0xf]
  %v26 = vld [vmem:[%s0 + $0x38] sm:$0xf]
  %v27 = vld [vmem:[%s0 + $0x3c] sm:$0xf]
  %v28 = vld [vmem:[%s0 + $0x40] sm:$0xf]
  %v29 = vld [vmem:[%s0 + $0x44] sm:$0xf]
  %v30 = vld [vmem:[%s0 + $0x48] sm:$0xf]
  %v31 = vld [vmem:[%s0 + $0x4c] sm:$0xf]
  %v32 = vld [vmem:[%s0 + $0x50] sm:$0x1]
  %v33 = vld [vmem:[%s1] sm:$0xf]
  %v34 = vld [vmem:[%s1 + $0x4] sm:$0xf]
  %v35 = vld [vmem:[%s1 + $0x8] sm:$0xf]
  %v36 = vld [vmem:[%s1 + $0xc] sm:$0xf]
  %v37 = vld [vmem:[%s1 + $0x10] sm:$0xf]
  %v38 = vld [vmem:[%s1 + $0x14] sm:$0xf]
  %v39 = vld [vmem:[%s1 + $0x18] sm:$0xf]
  %v40 = vld [vmem:[%s1 + $0x1c] sm:$0xf]
  %v41 = vld [vmem:[%s1 + $0x20] sm:$0xf]
  %v42 = vld [vmem:[%s1 + $0x24] sm:$0xf]
  %v43 = vld [vmem:[%s1 + $0x28] sm:$0xf]
  %v44 = vld [vmem:[%s1 + $0x2c] sm:$0xf]
  %v45 = vld [vmem:[%s1 + $0x30] sm:$0xf]
  %v46 = vld [vmem:[%s1 + $0x34] sm:$0xf]
  %v47 = vld [vmem:[%s1 + $0x38] sm:$0xf]
  %v48 = vld [vmem:[%s1 + $0x3c] sm:$0xf]
  %v70 = vunpack.c.l.b16 %v12
  %v71 = vunpack.c.l.b16 %v13
  %v72 = vunpack.c.l.b16 %v14
  %v73 = vunpack.c.l.b16 %v15
  %v74 = vunpack.c.l.b16 %v16
  %v75 = vunpack.c.l.b16 %v17
  %v76 = vunpack.c.l.b16 %v18
  %v77 = vunpack.c.l.b16 %v19
  %v78 = vunpack.c.l.b16 %v20
  %v79 = vunpack.c.l.b16 %v21
  %v80 = vunpack.c.l.b16 %v22
  %v81 = vunpack.c.l.b16 %v23
  %v82 = vunpack.c.l.b16 %v24
  %v83 = vunpack.c.l.b16 %v25
  %v84 = vunpack.c.l.b16 %v26
  %v85 = vunpack.c.l.b16 %v27
  %v86 = vunpack.c.l.b16 %v28
  %v87 = vunpack.c.l.b16 %v29
  %v88 = vunpack.c.l.b16 %v30
  %v89 = vunpack.c.l.b16 %v31
  %v90 = vunpack.c.l.b16 %v32
  %v91 = vpack.c.b16 %v71, %v70
  %v92 = vpack.c.b16 %v73, %v72
  %v93 = vpack.c.b16 %v75, %v74
  %v94 = vpack.c.b16 %v77, %v76
  %v95 = vpack.c.b16 %v79, %v78
  %v96 = vpack.c.b16 %v81, %v80
  %v97 = vpack.c.b16 %v83, %v82
  %v98 = vpack.c.b16 %v85, %v84
  %v99 = vpack.c.b16 %v87, %v86
  %v100 = vpack.c.b16 %v89, %v88
  %v101 = vpack.c.b16 %v90, %v90
  %v129 = vunpack.c.l.b16 %v33
  %v130 = vunpack.c.l.b16 %v34
  %v131 = vunpack.c.l.b16 %v35
  %v132 = vunpack.c.l.b16 %v36
  %v133 = vunpack.c.l.b16 %v37
  %v134 = vunpack.c.l.b16 %v38
  %v135 = vunpack.c.l.b16 %v39
  %v136 = vunpack.c.l.b16 %v40
  %v137 = vunpack.c.l.b16 %v41
  %v138 = vunpack.c.l.b16 %v42
  %v139 = vunpack.c.l.b16 %v43
  %v140 = vunpack.c.l.b16 %v44
  %v141 = vunpack.c.l.b16 %v45
  %v142 = vunpack.c.l.b16 %v46
  %v143 = vunpack.c.l.b16 %v47
  %v144 = vunpack.c.l.b16 %v48
  %v145 = vpack.c.b16 %v130, %v129
  %v146 = vpack.c.b16 %v132, %v131
  %v147 = vpack.c.b16 %v134, %v133
  %v148 = vpack.c.b16 %v136, %v135
  %v149 = vpack.c.b16 %v138, %v137
  %v150 = vpack.c.b16 %v140, %v139
  %v151 = vpack.c.b16 %v142, %v141
  %v152 = vpack.c.b16 %v144, %v143
  %161 = vmatprep.subr.bf16.mxu0 0
  %162 = vmatpush1.bf16.msra.mxu0 %v152
  %163 = vmatprep.subr.bf16.mxu0 0
  %164 = vmatpush1.bf16.msra.mxu0 %v151
  %165 = vmatprep.subr.bf16.mxu0 0
  %166 = vmatpush1.bf16.msra.mxu0 %v150
  %167 = vmatprep.subr.bf16.mxu0 0
  %168 = vmatpush1.bf16.msra.mxu0 %v149
  %169 = vmatprep.subr.bf16.mxu0 0
  %170 = vmatpush1.bf16.msra.mxu0 %v148
  %171 = vmatprep.subr.bf16.mxu0 0
  %172 = vmatpush1.bf16.msra.mxu0 %v147
  %173 = vmatprep.subr.bf16.mxu0 0
  %174 = vmatpush1.bf16.msra.mxu0 %v146
  %175 = vmatprep.subr.bf16.mxu0 0
  %176 = vmatpush1.bf16.msra.mxu0 %v145
  %177 = vmatprep.subr.bf16.mxu0 0
  %178 = vmatpush2.bf16.msra.mxu0 0
  %179 = vmatprep.subr.bf16.mxu0 0
  %180 = vmatpush2.bf16.msra.mxu0 0
  %181 = vmatprep.subr.bf16.mxu0 0
  %182 = vmatpush2.bf16.msra.mxu0 0
  %183 = vmatprep.subr.bf16.mxu0 0
  %184 = vmatpush2.bf16.msra.mxu0 0
  %185 = vmatprep.subr.bf16.mxu0 0
  %186 = vmatpush2.bf16.msra.mxu0 0
  %187 = vmatprep.subr.bf16.mxu0 0
  %188 = vmatpush2.bf16.msra.mxu0 0
  %189 = vmatprep.subr.bf16.mxu0 0
  %190 = vmatpush2.bf16.msra.mxu0 0
  %191 = vmatprep.subr.bf16.mxu0 0
  %192 = vmatpush2.bf16.msra.mxu0 0
  %193 = vmatprep.mubr.bf16.mxu0 0
  %194 = vmatmul.mubr.bf16.gmra.mxu0 %v91
  %v195 = vpop.f32.mrf.mxu0
  %v196 = vadd.f32 0.0, %v195
  %v197 = vpop.f32.mrf.mxu0
  %v198 = vpop.f32.mrf.mxu0
  %v199 = vadd.f32 0.0, %v198
  %v200 = vpop.f32.mrf.mxu0
  %201 = vmatprep.mubr.bf16.mxu0 0
  %202 = vmatmul.mubr.bf16.gmra.mxu0 %v92
  %v203 = vpop.f32.mrf.mxu0
  %v204 = vadd.f32 0.0, %v203
  %v205 = vpop.f32.mrf.mxu0
  %v206 = vpop.f32.mrf.mxu0
  %v207 = vadd.f32 0.0, %v206
  %v208 = vpop.f32.mrf.mxu0
  %209 = vmatprep.mubr.bf16.mxu0 0
  %210 = vmatmul.mubr.bf16.gmra.mxu0 %v93
  %v211 = vpop.f32.mrf.mxu0
  %v212 = vadd.f32 0.0, %v211
  %v213 = vpop.f32.mrf.mxu0
  %v214 = vpop.f32.mrf.mxu0
  %v215 = vadd.f32 0.0, %v214
  %v216 = vpop.f32.mrf.mxu0
  %217 = vmatprep.mubr.bf16.mxu0 0
  %218 = vmatmul.mubr.bf16.gmra.mxu0 %v94
  %v219 = vpop.f32.mrf.mxu0
  %v220 = vadd.f32 0.0, %v219
  %v221 = vpop.f32.mrf.mxu0
  %v222 = vpop.f32.mrf.mxu0
  %v223 = vadd.f32 0.0, %v222
  %v224 = vpop.f32.mrf.mxu0
  %225 = vmatprep.mubr.bf16.mxu0 0
  %226 = vmatmul.mubr.bf16.gmra.mxu0 %v95
  %v227 = vpop.f32.mrf.mxu0
  %v228 = vadd.f32 0.0, %v227
  %v229 = vpop.f32.mrf.mxu0
  %v230 = vpop.f32.mrf.mxu0
  %v231 = vadd.f32 0.0, %v230
  %v232 = vpop.f32.mrf.mxu0
  %233 = vmatprep.mubr.bf16.mxu0 0
  %234 = vmatmul.mubr.bf16.gmra.mxu0 %v96
  %v235 = vpop.f32.mrf.mxu0
  %v236 = vadd.f32 0.0, %v235
  %v237 = vpop.f32.mrf.mxu0
  %v238 = vpop.f32.mrf.mxu0
  %v239 = vadd.f32 0.0, %v238
  %v240 = vpop.f32.mrf.mxu0
  %241 = vmatprep.mubr.bf16.mxu0 0
  %242 = vmatmul.mubr.bf16.gmra.mxu0 %v97
  %v243 = vpop.f32.mrf.mxu0
  %v244 = vadd.f32 0.0, %v243
  %v245 = vpop.f32.mrf.mxu0
  %v246 = vpop.f32.mrf.mxu0
  %v247 = vadd.f32 0.0, %v246
  %v248 = vpop.f32.mrf.mxu0
  %249 = vmatprep.mubr.bf16.mxu0 0
  %250 = vmatmul.mubr.bf16.gmra.mxu0 %v98
  %v251 = vpop.f32.mrf.mxu0
  %v252 = vadd.f32 0.0, %v251
  %v253 = vpop.f32.mrf.mxu0
  %v254 = vpop.f32.mrf.mxu0
  %v255 = vadd.f32 0.0, %v254
  %v256 = vpop.f32.mrf.mxu0
  %257 = vmatprep.mubr.bf16.mxu0 0
  %258 = vmatmul.mubr.bf16.gmra.mxu0 %v99
  %v259 = vpop.f32.mrf.mxu0
  %v260 = vadd.f32 0.0, %v259
  %v261 = vpop.f32.mrf.mxu0
  %v262 = vpop.f32.mrf.mxu0
  %v263 = vadd.f32 0.0, %v262
  %v264 = vpop.f32.mrf.mxu0
  %265 = vmatprep.mubr.bf16.mxu0 0
  %266 = vmatmul.mubr.bf16.gmra.mxu0 %v100
  %v267 = vpop.f32.mrf.mxu0
  %v268 = vadd.f32 0.0, %v267
  %v269 = vpop.f32.mrf.mxu0
  %v270 = vpop.f32.mrf.mxu0
  %v271 = vadd.f32 0.0, %v270
  %v272 = vpop.f32.mrf.mxu0
  %273 = vmatprep.mubr.bf16.mxu0 0
  %274 = vmatmul.mubr.bf16.gmra.mxu0 %v101
  %v275 = vpop.f32.mrf.mxu0
  %v276 = vadd.f32 0.0, %v275
  %v277 = vpop.f32.mrf.mxu0
  %v278 = vpop.f32.mrf.mxu0
  %v279 = vpop.f32.mrf.mxu0
  %280 = vdwg.mxu0
  %v281 = vmax.f32 %v196, 0.0
  %v282 = vmax.f32 %v199, 0.0
  %v283 = vmax.f32 %v204, 0.0
  %v284 = vmax.f32 %v207, 0.0
  %v285 = vmax.f32 %v212, 0.0
  %v286 = vmax.f32 %v215, 0.0
  %v287 = vmax.f32 %v220, 0.0
  %v288 = vmax.f32 %v223, 0.0
  %v289 = vmax.f32 %v228, 0.0
  %v290 = vmax.f32 %v231, 0.0
  %v291 = vmax.f32 %v236, 0.0
  %v292 = vmax.f32 %v239, 0.0
  %v293 = vmax.f32 %v244, 0.0
  %v294 = vmax.f32 %v247, 0.0
  %v295 = vmax.f32 %v252, 0.0
  %v296 = vmax.f32 %v255, 0.0
  %v297 = vmax.f32 %v260, 0.0
  %v298 = vmax.f32 %v263, 0.0
  %v299 = vmax.f32 %v268, 0.0
  %v300 = vmax.f32 %v271, 0.0
  %v301 = vmax.f32 %v276, 0.0
  %v302 = vpack.c.bf16 %v282, %v281
  %v303 = vpack.c.bf16 %v284, %v283
  %v304 = vpack.c.bf16 %v286, %v285
  %v305 = vpack.c.bf16 %v288, %v287
  %v306 = vpack.c.bf16 %v290, %v289
  %v307 = vpack.c.bf16 %v292, %v291
  %v308 = vpack.c.bf16 %v294, %v293
  %v309 = vpack.c.bf16 %v296, %v295
  %v310 = vpack.c.bf16 %v298, %v297
  %v311 = vpack.c.bf16 %v300, %v299
  %v312 = vpack.c.bf16 %v301, %v301
  %v324 = vunpack.c.l.b16 %v302
  %v325 = vunpack.c.h.b16 %v302
  %v326 = vunpack.c.l.b16 %v303
  %v327 = vunpack.c.h.b16 %v303
  %v328 = vunpack.c.l.b16 %v304
  %v329 = vunpack.c.h.b16 %v304
  %v330 = vunpack.c.l.b16 %v305
  %v331 = vunpack.c.h.b16 %v305
  %v332 = vunpack.c.l.b16 %v306
  %v333 = vunpack.c.h.b16 %v306
  %v334 = vunpack.c.l.b16 %v307
  %v335 = vunpack.c.h.b16 %v307
  %v336 = vunpack.c.l.b16 %v308
  %v337 = vunpack.c.h.b16 %v308
  %v338 = vunpack.c.l.b16 %v309
  %v339 = vunpack.c.h.b16 %v309
  %v340 = vunpack.c.l.b16 %v310
  %v341 = vunpack.c.h.b16 %v310
  %v342 = vunpack.c.l.b16 %v311
  %v343 = vunpack.c.h.b16 %v311
  %v344 = vunpack.c.l.b16 %v312
  %v345 = vpack.c.b16 %v324, %v324
  %v346 = vpack.c.b16 %v325, %v325
  %v347 = vpack.c.b16 %v326, %v326
  %v348 = vpack.c.b16 %v327, %v327
  %v349 = vpack.c.b16 %v328, %v328
  %v350 = vpack.c.b16 %v329, %v329
  %v351 = vpack.c.b16 %v330, %v330
  %v352 = vpack.c.b16 %v331, %v331
  %v353 = vpack.c.b16 %v332, %v332
  %v354 = vpack.c.b16 %v333, %v333
  %v355 = vpack.c.b16 %v334, %v334
  %v356 = vpack.c.b16 %v335, %v335
  %v357 = vpack.c.b16 %v336, %v336
  %v358 = vpack.c.b16 %v337, %v337
  %v359 = vpack.c.b16 %v338, %v338
  %v360 = vpack.c.b16 %v339, %v339
  %v361 = vpack.c.b16 %v340, %v340
  %v362 = vpack.c.b16 %v341, %v341
  %v363 = vpack.c.b16 %v342, %v342
  %v364 = vpack.c.b16 %v343, %v343
  %v365 = vpack.c.b16 %v344, %v344
  %vm387 = vcmask 519168
  %388 = vst.msk [vmem:[%s2] sm:$0xf] %vm387, %v345
  %389 = vst.msk [vmem:[%s2 + $0x4] sm:$0xf] %vm387, %v346
  %390 = vst.msk [vmem:[%s2 + $0x8] sm:$0xf] %vm387, %v347
  %391 = vst.msk [vmem:[%s2 + $0xc] sm:$0xf] %vm387, %v348
  %392 = vst.msk [vmem:[%s2 + $0x10] sm:$0xf] %vm387, %v349
  %393 = vst.msk [vmem:[%s2 + $0x14] sm:$0xf] %vm387, %v350
  %394 = vst.msk [vmem:[%s2 + $0x18] sm:$0xf] %vm387, %v351
  %395 = vst.msk [vmem:[%s2 + $0x1c] sm:$0xf] %vm387, %v352
  %396 = vst.msk [vmem:[%s2 + $0x20] sm:$0xf] %vm387, %v353
  %397 = vst.msk [vmem:[%s2 + $0x24] sm:$0xf] %vm387, %v354
  %398 = vst.msk [vmem:[%s2 + $0x28] sm:$0xf] %vm387, %v355
  %399 = vst.msk [vmem:[%s2 + $0x2c] sm:$0xf] %vm387, %v356
  %400 = vst.msk [vmem:[%s2 + $0x30] sm:$0xf] %vm387, %v357
  %401 = vst.msk [vmem:[%s2 + $0x34] sm:$0xf] %vm387, %v358
  %402 = vst.msk [vmem:[%s2 + $0x38] sm:$0xf] %vm387, %v359
  %403 = vst.msk [vmem:[%s2 + $0x3c] sm:$0xf] %vm387, %v360
  %404 = vst.msk [vmem:[%s2 + $0x40] sm:$0xf] %vm387, %v361
  %405 = vst.msk [vmem:[%s2 + $0x44] sm:$0xf] %vm387, %v362
  %406 = vst.msk [vmem:[%s2 + $0x48] sm:$0xf] %vm387, %v363
  %407 = vst.msk [vmem:[%s2 + $0x4c] sm:$0xf] %vm387, %v364
  %vm408 = vcmask 516096
  %409 = vst.msk [vmem:[%s2 + $0x50] sm:$0x1] %vm408, %v365
  // Predicated region
  $region10: #{generator_forward.7} parent=0 // pred_check
    _
  $region11: #{generator_forward.7} parent=0 // pred_check_branch
    %411 = sbr.rel (0) target = $region13
  $region12: #{generator_forward.7} parent=0 // pred_region
    _
  $region13: #{generator_forward.7} parent=0 // pred_fallthru
    _
  // Predicated region
  $region14: #{generator_forward.7} parent=0 // pred_check
    _
  $region15: #{generator_forward.7} parent=0 // pred_check_branch
    %413 = sbr.rel (0) target = $region17
  $region16: #{generator_forward.7} parent=0 // pred_region
    _
  $region17: #{generator_forward.7} parent=0 // pred_fallthru
    _

// kernel: generator_forward.8
$region0: #{generator_forward.8}
  #allocation0 [shape = 'u32[]', space=smem, size = 0x4, offset = 0x4, fixed_abs, tag = 'smem constant byte address 0x4 - core index']
  #allocation1 [shape = 'u32[144,128]{1,0:T(1,128)}', space=vmem, size = 0x12000, scoped, tag = 'internal scratch']
  %s0 = inlined_call_operand.vmem [shape: bf16[2,289,64], index: 0, kind: input, shape index: {}]
  %s1 = inlined_call_operand.vmem [shape: bf16[64,32], index: 1, kind: input, shape index: {}]
  %s2 = inlined_call_operand.vmem [shape: bf16[2,289,32], index: 2, kind: output, shape index: {}]
  %s3 = sld [smem:[#allocation0]]
  $region41: #{generator_forward.8} parent=0
    _
  %s5 = ssub.s32 1, %s3
  %s6 = scalar_select 0, %s5, %s3
  loop: start=0, step=1, limit=4
  $region2: #{generator_forward.8} parent=0 // loop_pre_header
    _
  $region3: #{generator_forward.8} parent=0 // loop_header
    %s8 = sphi 0, %s12
    %p9 = scmp.ge.s32.totalorder %s8, 4
    %s18 = sphi 0, %s20
    %s21 = sphi 0, %s18
    %s22 = sphi 0, %s21
    %s38 = sphi 0, %s22
    %s42 = sphi 0, %s42
    %s44 = sphi 0, %s42
    %s45 = sphi 0, %s44
    %s59 = sphi 0, %s45
    %s65 = sphi 0, %s67
    %s68 = sphi 0, %s65
    %s69 = sphi 0, %s68
    %s85 = sphi 0, %s69
  $region4: #{generator_forward.8} parent=0 // loop_header_branch
    %11 = sbr.rel (%p9) target = $region8
  $region5: #{generator_forward.8} parent=0 // loop_body
    %s13 = ssub.s32 %s8, 1
    %s14 = ssub.s32 %s8, 2
    %s15 = sadd.s32 %s8, 1
    %s16 = ssub.s32 %s8, %s15
    %p17 = scmp.eq.s32.totalorder %s16, 0
    %s19 = sadd.s32 %s18, 1
    %s20 = scalar_select %p17, %s18, %s19
    %p23 = pneg %p17
    %p24 = scmp.eq.s32.totalorder %s8, 1
    %p25 = por %p23, %p24
    %p26 = scmp.ne.s32.totalorder %s18, %s21
    %p27 = scmp.eq.s32.totalorder %s8, 0
    %p28 = por %p26, %p27
    %p29 = scmp.ne.s32.totalorder %s18, %s21
    %p30 = scmp.eq.s32.totalorder %s13, 1
    %p31 = por %p29, %p30
    %p32 = scmp.ne.s32.totalorder %s21, %s22
    %p33 = scmp.eq.s32.totalorder %s13, 0
    %p34 = por %p32, %p33
    %p35 = scmp.ne.s32.totalorder %s21, %s22
    %p36 = scmp.eq.s32.totalorder %s14, 1
    %p37 = por %p35, %p36
    %p39 = scmp.ne.s32.totalorder %s22, %s38
    %p40 = scmp.eq.s32.totalorder %s14, 0
    %p41 = por %p39, %p40
    %s43 = sadd.s32 %s42, 1
    %p46 = scmp.eq.s32.totalorder %s8, 1
    %p47 = scmp.ne.s32.totalorder %s42, %s44
    %p48 = scmp.eq.s32.totalorder %s8, 0
    %p49 = por %p47, %p48
    %p50 = scmp.ne.s32.totalorder %s42, %s44
    %p51 = scmp.eq.s32.totalorder %s13, 1
    %p52 = por %p50, %p51
    %p53 = scmp.ne.s32.totalorder %s44, %s45
    %p54 = scmp.eq.s32.totalorder %s13, 0
    %p55 = por %p53, %p54
    %p56 = scmp.ne.s32.totalorder %s44, %s45
    %p57 = scmp.eq.s32.totalorder %s14, 1
    %p58 = por %p56, %p57
    %p60 = scmp.ne.s32.totalorder %s45, %s59
    %p61 = scmp.eq.s32.totalorder %s14, 0
    %p62 = por %p60, %p61
    %s63 = ssub.s32 %s8, %s15
    %p64 = scmp.eq.s32.totalorder %s63, 0
    %s66 = sadd.s32 %s65, 1
    %s67 = scalar_select %p64, %s65, %s66
    %p70 = pneg %p64
    %p71 = scmp.eq.s32.totalorder %s8, 1
    %p72 = por %p70, %p71
    %p73 = scmp.ne.s32.totalorder %s65, %s68
    %p74 = scmp.eq.s32.totalorder %s8, 0
    %p75 = por %p73, %p74
    %p76 = scmp.ne.s32.totalorder %s65, %s68
    %p77 = scmp.eq.s32.totalorder %s13, 1
    %p78 = por %p76, %p77
    %p79 = scmp.ne.s32.totalorder %s68, %s69
    %p80 = scmp.eq.s32.totalorder %s13, 0
    %p81 = por %p79, %p80
    %p82 = scmp.ne.s32.totalorder %s68, %s69
    %p83 = scmp.eq.s32.totalorder %s14, 1
    %p84 = por %p82, %p83
    %p86 = scmp.ne.s32.totalorder %s69, %s85
    %p87 = scmp.eq.s32.totalorder %s14, 0
    %p88 = por %p86, %p87
    %p89 = scmp.le.s32.totalorder 1, %s8
    %p90 = scmp.lt.s32.totalorder %s8, 3
    %p91 = pnand %p89, %p90
    %p92 = pneg %p91
    // Predicated region
    $region9: #{generator_forward.8} parent=5 // pred_check
      _
    $region10: #{generator_forward.8} parent=5 // pred_check_branch
      %94 = sbr.rel (%p91) target = $region12
    $region11: #{generator_forward.8} parent=5 // pred_region
      %s95 = ssub.s32 %s8, 1
      // Predicated region
      $region13: #{generator_forward.8} parent=11 // pred_check
        %p96 = pneg %p55
      $region14: #{generator_forward.8} parent=11 // pred_check_branch
        %98 = sbr.rel (%p96) target = $region16
      $region15: #{generator_forward.8} parent=11 // pred_region
        _
      $region16: #{generator_forward.8} parent=11 // pred_fallthru
        _
    $region12: #{generator_forward.8} parent=5 // pred_fallthru
      _
    %p99 = scmp.lt.s32.totalorder %s8, 2
    // Predicated region
    $region17: #{generator_forward.8} parent=5 // pred_check
      %p100 = pneg %p99
    $region18: #{generator_forward.8} parent=5 // pred_check_branch
      %102 = sbr.rel (%p100) target = $region20
    $region19: #{generator_forward.8} parent=5 // pred_region
      // Predicated region
      $region21: #{generator_forward.8} parent=19 // pred_check
        %p103 = pneg %p28
      $region22: #{generator_forward.8} parent=19 // pred_check_branch
        %105 = sbr.rel (%p103) target = $region24
      $region23: #{generator_forward.8} parent=19 // pred_region
        %p106 = scmp.lt.s32.totalorder %s8, 1
        %s107 = scalar_select %p106, %s8, 1
        %s108 = smul.addr %s107, 37
        %s109 = smul.addr %s108, 4
        %s110 = scalar_lea.vmem %s0, %s109
      $region24: #{generator_forward.8} parent=19 // pred_fallthru
        _
    $region20: #{generator_forward.8} parent=5 // pred_fallthru
      _
    %p111 = scmp.le.s32.totalorder 1, %s8
    %p112 = scmp.lt.s32.totalorder %s8, 3
    %p113 = pnand %p111, %p112
    %p114 = pneg %p113
    // Predicated region
    $region25: #{generator_forward.8} parent=5 // pred_check
      _
    $region26: #{generator_forward.8} parent=5 // pred_check_branch
      %116 = sbr.rel (%p113) target = $region28
    $region27: #{generator_forward.8} parent=5 // pred_region
      %s117 = ssub.s32 %s8, 1
      %p118 = scmp.lt.s32.totalorder %s13, 1
      %s119 = scalar_select %p118, %s13, 1
      %s120 = smul.addr %s119, 37
      %s121 = smul.addr %s120, 4
      %s122 = scalar_lea.vmem %s0, %s121
      %p123 = pneg %p34
      %p124 = pneg %p31
      %p125 = pneg %p55
      %p126 = pneg %p52
      %p127 = pneg %p81
      %p128 = pneg %p78
      %p129 = scmp.lt.s32.totalorder %s13, 1
      %s130 = scalar_select %p129, %s13, 1
      %s131 = smul.addr %s130, 37
      %s132 = smul.addr %s131, 4
      %s133 = scalar_lea.vmem %s2, %s132
      %p134 = scmp.lt.s32.totalorder %s13, 1
      %s135 = scalar_select %p134, %s13, 1
      %s136 = smul.addr %s135, 37
      %s137 = smul.addr %s136, 4
      %s138 = scalar_lea.vmem %s0, %s137
      %p139 = scmp.lt.s32.totalorder %s13, 1
      %s140 = scalar_select %p139, %s13, 1
      %s141 = smul.addr %s140, 37
      %s142 = smul.addr %s141, 4
      %s143 = scalar_lea.vmem %s2, %s142
      %v145 = vld [vmem:[%s138] sm:$0xf]
      %v146 = vld [vmem:[%s138 + $0x4] sm:$0xf]
      %v147 = vld [vmem:[%s138 + $0x8] sm:$0xf]
      %v148 = vld [vmem:[%s138 + $0xc] sm:$0xf]
      %v149 = vld [vmem:[%s138 + $0x10] sm:$0xf]
      %v150 = vld [vmem:[%s138 + $0x14] sm:$0xf]
      %v151 = vld [vmem:[%s138 + $0x18] sm:$0xf]
      %v152 = vld [vmem:[%s138 + $0x1c] sm:$0xf]
      %v153 = vld [vmem:[%s138 + $0x20] sm:$0xf]
      %v154 = vld [vmem:[%s138 + $0x24] sm:$0xf]
      %v155 = vld [vmem:[%s138 + $0x28] sm:$0xf]
      %v156 = vld [vmem:[%s138 + $0x2c] sm:$0xf]
      %v157 = vld [vmem:[%s138 + $0x30] sm:$0xf]
      %v158 = vld [vmem:[%s138 + $0x34] sm:$0xf]
      %v159 = vld [vmem:[%s138 + $0x38] sm:$0xf]
      %v160 = vld [vmem:[%s138 + $0x3c] sm:$0xf]
      %v161 = vld [vmem:[%s138 + $0x40] sm:$0xf]
      %v162 = vld [vmem:[%s138 + $0x44] sm:$0xf]
      %v163 = vld [vmem:[%s138 + $0x48] sm:$0xf]
      %v164 = vld [vmem:[%s138 + $0x4c] sm:$0xf]
      %v165 = vld [vmem:[%s138 + $0x50] sm:$0xf]
      %v166 = vld [vmem:[%s138 + $0x54] sm:$0xf]
      %v167 = vld [vmem:[%s138 + $0x58] sm:$0xf]
      %v168 = vld [vmem:[%s138 + $0x5c] sm:$0xf]
      %v169 = vld [vmem:[%s138 + $0x60] sm:$0xf]
      %v170 = vld [vmem:[%s138 + $0x64] sm:$0xf]
      %v171 = vld [vmem:[%s138 + $0x68] sm:$0xf]
      %v172 = vld [vmem:[%s138 + $0x6c] sm:$0xf]
      %v173 = vld [vmem:[%s138 + $0x70] sm:$0xf]
      %v174 = vld [vmem:[%s138 + $0x74] sm:$0xf]
      %v175 = vld [vmem:[%s138 + $0x78] sm:$0xf]
      %v176 = vld [vmem:[%s138 + $0x7c] sm:$0xf]
      %v177 = vld [vmem:[%s138 + $0x80] sm:$0xf]
      %v178 = vld [vmem:[%s138 + $0x84] sm:$0xf]
      %v179 = vld [vmem:[%s138 + $0x88] sm:$0xf]
      %v180 = vld [vmem:[%s138 + $0x8c] sm:$0xf]
      %v181 = vld [vmem:[%s138 + $0x90] sm:$0x1]
      %v182 = vld [vmem:[%s1] sm:$0xf]
      %v183 = vld [vmem:[%s1 + $0x4] sm:$0xf]
      %v184 = vld [vmem:[%s1 + $0x8] sm:$0xf]
      %v185 = vld [vmem:[%s1 + $0xc] sm:$0xf]
      %v186 = vld [vmem:[%s1 + $0x10] sm:$0xf]
      %v187 = vld [vmem:[%s1 + $0x14] sm:$0xf]
      %v188 = vld [vmem:[%s1 + $0x18] sm:$0xf]
      %v189 = vld [vmem:[%s1 + $0x1c] sm:$0xf]
      %v227 = vunpack.c.l.b16 %v145
      %v228 = vunpack.c.l.b16 %v146
      %v229 = vunpack.c.l.b16 %v147
      %v230 = vunpack.c.l.b16 %v148
      %v231 = vunpack.c.l.b16 %v149
      %v232 = vunpack.c.l.b16 %v150
      %v233 = vunpack.c.l.b16 %v151
      %v234 = vunpack.c.l.b16 %v152
      %v235 = vunpack.c.l.b16 %v153
      %v236 = vunpack.c.l.b16 %v154
      %v237 = vunpack.c.l.b16 %v155
      %v238 = vunpack.c.l.b16 %v156
      %v239 = vunpack.c.l.b16 %v157
      %v240 = vunpack.c.l.b16 %v158
      %v241 = vunpack.c.l.b16 %v159
      %v242 = vunpack.c.l.b16 %v160
      %v243 = vunpack.c.l.b16 %v161
      %v244 = vunpack.c.l.b16 %v162
      %v245 = vunpack.c.l.b16 %v163
      %v246 = vunpack.c.l.b16 %v164
      %v247 = vunpack.c.l.b16 %v165
      %v248 = vunpack.c.l.b16 %v166
      %v249 = vunpack.c.l.b16 %v167
      %v250 = vunpack.c.l.b16 %v168
      %v251 = vunpack.c.l.b16 %v169
      %v252 = vunpack.c.l.b16 %v170
      %v253 = vunpack.c.l.b16 %v171
      %v254 = vunpack.c.l.b16 %v172
      %v255 = vunpack.c.l.b16 %v173
      %v256 = vunpack.c.l.b16 %v174
      %v257 = vunpack.c.l.b16 %v175
      %v258 = vunpack.c.l.b16 %v176
      %v259 = vunpack.c.l.b16 %v177
      %v260 = vunpack.c.l.b16 %v178
      %v261 = vunpack.c.l.b16 %v179
      %v262 = vunpack.c.l.b16 %v180
      %v263 = vunpack.c.l.b16 %v181
      %v264 = vpack.c.b16 %v228, %v227
      %v265 = vpack.c.b16 %v230, %v229
      %v266 = vpack.c.b16 %v232, %v231
      %v267 = vpack.c.b16 %v234, %v233
      %v268 = vpack.c.b16 %v236, %v235
      %v269 = vpack.c.b16 %v238, %v237
      %v270 = vpack.c.b16 %v240, %v239
      %v271 = vpack.c.b16 %v242, %v241
      %v272 = vpack.c.b16 %v244, %v243
      %v273 = vpack.c.b16 %v246, %v245
      %v274 = vpack.c.b16 %v248, %v247
      %v275 = vpack.c.b16 %v250, %v249
      %v276 = vpack.c.b16 %v252, %v251
      %v277 = vpack.c.b16 %v254, %v253
      %v278 = vpack.c.b16 %v256, %v255
      %v279 = vpack.c.b16 %v258, %v257
      %v280 = vpack.c.b16 %v260, %v259
      %v281 = vpack.c.b16 %v262, %v261
      %v282 = vpack.c.b16 %v263, %v263
      %v291 = vunpack.c.l.b16 %v182
      %v292 = vunpack.c.l.b16 %v183
      %v293 = vunpack.c.l.b16 %v184
      %v294 = vunpack.c.l.b16 %v185
      %v295 = vunpack.c.l.b16 %v186
      %v296 = vunpack.c.l.b16 %v187
      %v297 = vunpack.c.l.b16 %v188
      %v298 = vunpack.c.l.b16 %v189
      %v299 = vpack.c.b16 %v292, %v291
      %v300 = vpack.c.b16 %v294, %v293
      %v301 = vpack.c.b16 %v296, %v295
      %v302 = vpack.c.b16 %v298, %v297
      %vm307 = vcmask 523264
      %v309 = vsel %vm307, %v264, 0
      %v312 = vsel %vm307, %v265, 0
      %v315 = vsel %vm307, %v266, 0
      %v318 = vsel %vm307, %v267, 0
      %v321 = vsel %vm307, %v268, 0
      %v324 = vsel %vm307, %v269, 0
      %v327 = vsel %vm307, %v270, 0
      %v330 = vsel %vm307, %v271, 0
      %v333 = vsel %vm307, %v272, 0
      %v336 = vsel %vm307, %v273, 0
      %v339 = vsel %vm307, %v274, 0
      %v342 = vsel %vm307, %v275, 0
      %v345 = vsel %vm307, %v276, 0
      %v348 = vsel %vm307, %v277, 0
      %v351 = vsel %vm307, %v278, 0
      %v354 = vsel %vm307, %v279, 0
      %v357 = vsel %vm307, %v280, 0
      %v360 = vsel %vm307, %v281, 0
      %v363 = vsel %vm307, %v282, 0
      %365 = vmatprep.subr.bf16.mxu0 0
      %366 = vmatpush1.bf16.msra.mxu0 0
      %367 = vmatprep.subr.bf16.mxu0 0
      %368 = vmatpush1.bf16.msra.mxu0 0
      %369 = vmatprep.subr.bf16.mxu0 0
      %370 = vmatpush1.bf16.msra.mxu0 0
      %371 = vmatprep.subr.bf16.mxu0 0
      %372 = vmatpush1.bf16.msra.mxu0 0
      %373 = vmatprep.subr.bf16.mxu0 0
      %374 = vmatpush1.bf16.msra.mxu0 %v302
      %375 = vmatprep.subr.bf16.mxu0 0
      %376 = vmatpush1.bf16.msra.mxu0 %v301
      %377 = vmatprep.subr.bf16.mxu0 0
      %378 = vmatpush1.bf16.msra.mxu0 %v300
      %379 = vmatprep.subr.bf16.mxu0 0
      %380 = vmatpush1.bf16.msra.mxu0 %v299
      %381 = vmatprep.subr.bf16.mxu0 0
      %382 = vmatpush2.bf16.msra.mxu0 0
      %383 = vmatprep.subr.bf16.mxu0 0
      %384 = vmatpush2.bf16.msra.mxu0 0
      %385 = vmatprep.subr.bf16.mxu0 0
      %386 = vmatpush2.bf16.msra.mxu0 0
      %387 = vmatprep.subr.bf16.mxu0 0
      %388 = vmatpush2.bf16.msra.mxu0 0
      %389 = vmatprep.subr.bf16.mxu0 0
      %390 = vmatpush2.bf16.msra.mxu0 0
      %391 = vmatprep.subr.bf16.mxu0 0
      %392 = vmatpush2.bf16.msra.mxu0 0
      %393 = vmatprep.subr.bf16.mxu0 0
      %394 = vmatpush2.bf16.msra.mxu0 0
      %395 = vmatprep.subr.bf16.mxu0 0
      %396 = vmatpush2.bf16.msra.mxu0 0
      %397 = vmatprep.mubr.bf16.mxu0 0
      %398 = vmatmul.mubr.bf16.gmra.mxu0 %v309
      %v399 = vpop.f32.mrf.mxu0
      %v400 = vadd.f32 0.0, %v399
      %v401 = vpop.f32.mrf.mxu0
      %v402 = vpop.f32.mrf.mxu0
      %v403 = vadd.f32 0.0, %v402
      %v404 = vpop.f32.mrf.mxu0
      %405 = vmatprep.mubr.bf16.mxu0 0
      %406 = vmatmul.mubr.bf16.gmra.mxu0 %v312
      %v407 = vpop.f32.mrf.mxu0
      %v408 = vadd.f32 0.0, %v407
      %v409 = vpop.f32.mrf.mxu0
      %v410 = vpop.f32.mrf.mxu0
      %v411 = vadd.f32 0.0, %v410
      %v412 = vpop.f32.mrf.mxu0
      %413 = vmatprep.mubr.bf16.mxu0 0
      %414 = vmatmul.mubr.bf16.gmra.mxu0 %v315
      %v415 = vpop.f32.mrf.mxu0
      %v416 = vadd.f32 0.0, %v415
      %v417 = vpop.f32.mrf.mxu0
      %v418 = vpop.f32.mrf.mxu0
      %v419 = vadd.f32 0.0, %v418
      %v420 = vpop.f32.mrf.mxu0
      %421 = vmatprep.mubr.bf16.mxu0 0
      %422 = vmatmul.mubr.bf16.gmra.mxu0 %v318
      %v423 = vpop.f32.mrf.mxu0
      %v424 = vadd.f32 0.0, %v423
      %v425 = vpop.f32.mrf.mxu0
      %v426 = vpop.f32.mrf.mxu0
      %v427 = vadd.f32 0.0, %v426
      %v428 = vpop.f32.mrf.mxu0
      %429 = vmatprep.mubr.bf16.mxu0 0
      %430 = vmatmul.mubr.bf16.gmra.mxu0 %v321
      %v431 = vpop.f32.mrf.mxu0
      %v432 = vadd.f32 0.0, %v431
      %v433 = vpop.f32.mrf.mxu0
      %v434 = vpop.f32.mrf.mxu0
      %v435 = vadd.f32 0.0, %v434
      %v436 = vpop.f32.mrf.mxu0
      %437 = vmatprep.mubr.bf16.mxu0 0
      %438 = vmatmul.mubr.bf16.gmra.mxu0 %v324
      %v439 = vpop.f32.mrf.mxu0
      %v440 = vadd.f32 0.0, %v439
      %v441 = vpop.f32.mrf.mxu0
      %v442 = vpop.f32.mrf.mxu0
      %v443 = vadd.f32 0.0, %v442
      %v444 = vpop.f32.mrf.mxu0
      %445 = vmatprep.mubr.bf16.mxu0 0
      %446 = vmatmul.mubr.bf16.gmra.mxu0 %v327
      %v447 = vpop.f32.mrf.mxu0
      %v448 = vadd.f32 0.0, %v447
      %v449 = vpop.f32.mrf.mxu0
      %v450 = vpop.f32.mrf.mxu0
      %v451 = vadd.f32 0.0, %v450
      %v452 = vpop.f32.mrf.mxu0
      %453 = vmatprep.mubr.bf16.mxu0 0
      %454 = vmatmul.mubr.bf16.gmra.mxu0 %v330
      %v455 = vpop.f32.mrf.mxu0
      %v456 = vadd.f32 0.0, %v455
      %v457 = vpop.f32.mrf.mxu0
      %v458 = vpop.f32.mrf.mxu0
      %v459 = vadd.f32 0.0, %v458
      %v460 = vpop.f32.mrf.mxu0
      %461 = vmatprep.mubr.bf16.mxu0 0
      %462 = vmatmul.mubr.bf16.gmra.mxu0 %v333
      %v463 = vpop.f32.mrf.mxu0
      %v464 = vadd.f32 0.0, %v463
      %v465 = vpop.f32.mrf.mxu0
      %v466 = vpop.f32.mrf.mxu0
      %v467 = vadd.f32 0.0, %v466
      %v468 = vpop.f32.mrf.mxu0
      %469 = vmatprep.mubr.bf16.mxu0 0
      %470 = vmatmul.mubr.bf16.gmra.mxu0 %v336
      %v471 = vpop.f32.mrf.mxu0
      %v472 = vadd.f32 0.0, %v471
      %v473 = vpop.f32.mrf.mxu0
      %v474 = vpop.f32.mrf.mxu0
      %v475 = vadd.f32 0.0, %v474
      %v476 = vpop.f32.mrf.mxu0
      %477 = vmatprep.mubr.bf16.mxu0 0
      %478 = vmatmul.mubr.bf16.gmra.mxu0 %v339
      %v479 = vpop.f32.mrf.mxu0
      %v480 = vadd.f32 0.0, %v479
      %v481 = vpop.f32.mrf.mxu0
      %v482 = vpop.f32.mrf.mxu0
      %v483 = vadd.f32 0.0, %v482
      %v484 = vpop.f32.mrf.mxu0
      %485 = vmatprep.mubr.bf16.mxu0 0
      %486 = vmatmul.mubr.bf16.gmra.mxu0 %v342
      %v487 = vpop.f32.mrf.mxu0
      %v488 = vadd.f32 0.0, %v487
      %v489 = vpop.f32.mrf.mxu0
      %v490 = vpop.f32.mrf.mxu0
      %v491 = vadd.f32 0.0, %v490
      %v492 = vpop.f32.mrf.mxu0
      %493 = vmatprep.mubr.bf16.mxu0 0
      %494 = vmatmul.mubr.bf16.gmra.mxu0 %v345
      %v495 = vpop.f32.mrf.mxu0
      %v496 = vadd.f32 0.0, %v495
      %v497 = vpop.f32.mrf.mxu0
      %v498 = vpop.f32.mrf.mxu0
      %v499 = vadd.f32 0.0, %v498
      %v500 = vpop.f32.mrf.mxu0
      %501 = vmatprep.mubr.bf16.mxu0 0
      %502 = vmatmul.mubr.bf16.gmra.mxu0 %v348
      %v503 = vpop.f32.mrf.mxu0
      %v504 = vadd.f32 0.0, %v503
      %v505 = vpop.f32.mrf.mxu0
      %v506 = vpop.f32.mrf.mxu0
      %v507 = vadd.f32 0.0, %v506
      %v508 = vpop.f32.mrf.mxu0
      %509 = vmatprep.mubr.bf16.mxu0 0
      %510 = vmatmul.mubr.bf16.gmra.mxu0 %v351
      %v511 = vpop.f32.mrf.mxu0
      %v512 = vadd.f32 0.0, %v511
      %v513 = vpop.f32.mrf.mxu0
      %v514 = vpop.f32.mrf.mxu0
      %v515 = vadd.f32 0.0, %v514
      %v516 = vpop.f32.mrf.mxu0
      %517 = vmatprep.mubr.bf16.mxu0 0
      %518 = vmatmul.mubr.bf16.gmra.mxu0 %v354
      %v519 = vpop.f32.mrf.mxu0
      %v520 = vadd.f32 0.0, %v519
      %v521 = vpop.f32.mrf.mxu0
      %v522 = vpop.f32.mrf.mxu0
      %v523 = vadd.f32 0.0, %v522
      %v524 = vpop.f32.mrf.mxu0
      %525 = vmatprep.mubr.bf16.mxu0 0
      %526 = vmatmul.mubr.bf16.gmra.mxu0 %v357
      %v527 = vpop.f32.mrf.mxu0
      %v528 = vadd.f32 0.0, %v527
      %v529 = vpop.f32.mrf.mxu0
      %v530 = vpop.f32.mrf.mxu0
      %v531 = vadd.f32 0.0, %v530
      %v532 = vpop.f32.mrf.mxu0
      %533 = vmatprep.mubr.bf16.mxu0 0
      %534 = vmatmul.mubr.bf16.gmra.mxu0 %v360
      %v535 = vpop.f32.mrf.mxu0
      %v536 = vadd.f32 0.0, %v535
      %v537 = vpop.f32.mrf.mxu0
      %v538 = vpop.f32.mrf.mxu0
      %v539 = vadd.f32 0.0, %v538
      %v540 = vpop.f32.mrf.mxu0
      %541 = vmatprep.mubr.bf16.mxu0 0
      %542 = vmatmul.mubr.bf16.gmra.mxu0 %v363
      %v543 = vpop.f32.mrf.mxu0
      %v544 = vadd.f32 0.0, %v543
      %v545 = vpop.f32.mrf.mxu0
      %v546 = vpop.f32.mrf.mxu0
      %v547 = vpop.f32.mrf.mxu0
      %548 = vdwg.mxu0
      %v549 = vmax.f32 %v400, 0.0
      %v550 = vmax.f32 %v403, 0.0
      %v551 = vmax.f32 %v408, 0.0
      %v552 = vmax.f32 %v411, 0.0
      %v553 = vmax.f32 %v416, 0.0
      %v554 = vmax.f32 %v419, 0.0
      %v555 = vmax.f32 %v424, 0.0
      %v556 = vmax.f32 %v427, 0.0
      %v557 = vmax.f32 %v432, 0.0
      %v558 = vmax.f32 %v435, 0.0
      %v559 = vmax.f32 %v440, 0.0
      %v560 = vmax.f32 %v443, 0.0
      %v561 = vmax.f32 %v448, 0.0
      %v562 = vmax.f32 %v451, 0.0
      %v563 = vmax.f32 %v456, 0.0
      %v564 = vmax.f32 %v459, 0.0
      %v565 = vmax.f32 %v464, 0.0
      %v566 = vmax.f32 %v467, 0.0
      %v567 = vmax.f32 %v472, 0.0
      %v568 = vmax.f32 %v475, 0.0
      %v569 = vmax.f32 %v480, 0.0
      %v570 = vmax.f32 %v483, 0.0
      %v571 = vmax.f32 %v488, 0.0
      %v572 = vmax.f32 %v491, 0.0
      %v573 = vmax.f32 %v496, 0.0
      %v574 = vmax.f32 %v499, 0.0
      %v575 = vmax.f32 %v504, 0.0
      %v576 = vmax.f32 %v507, 0.0
      %v577 = vmax.f32 %v512, 0.0
      %v578 = vmax.f32 %v515, 0.0
      %v579 = vmax.f32 %v520, 0.0
      %v580 = vmax.f32 %v523, 0.0
      %v581 = vmax.f32 %v528, 0.0
      %v582 = vmax.f32 %v531, 0.0
      %v583 = vmax.f32 %v536, 0.0
      %v584 = vmax.f32 %v539, 0.0
      %v585 = vmax.f32 %v544, 0.0
      %v586 = vpack.c.bf16 %v550, %v549
      %v587 = vpack.c.bf16 %v552, %v551
      %v588 = vpack.c.bf16 %v554, %v553
      %v589 = vpack.c.bf16 %v556, %v555
      %v590 = vpack.c.bf16 %v558, %v557
      %v591 = vpack.c.bf16 %v560, %v559
      %v592 = vpack.c.bf16 %v562, %v561
      %v593 = vpack.c.bf16 %v564, %v563
      %v594 = vpack.c.bf16 %v566, %v565
      %v595 = vpack.c.bf16 %v568, %v567
      %v596 = vpack.c.bf16 %v570, %v569
      %v597 = vpack.c.bf16 %v572, %v571
      %v598 = vpack.c.bf16 %v574, %v573
      %v599 = vpack.c.bf16 %v576, %v575
      %v600 = vpack.c.bf16 %v578, %v577
      %v601 = vpack.c.bf16 %v580, %v579
      %v602 = vpack.c.bf16 %v582, %v581
      %v603 = vpack.c.bf16 %v584, %v583
      %v604 = vpack.c.bf16 %v585, %v585
      %v624 = vunpack.c.l.b16 %v586
      %v625 = vunpack.c.h.b16 %v586
      %v626 = vunpack.c.l.b16 %v587
      %v627 = vunpack.c.h.b16 %v587
      %v628 = vunpack.c.l.b16 %v588
      %v629 = vunpack.c.h.b16 %v588
      %v630 = vunpack.c.l.b16 %v589
      %v631 = vunpack.c.h.b16 %v589
      %v632 = vunpack.c.l.b16 %v590
      %v633 = vunpack.c.h.b16 %v590
      %v634 = vunpack.c.l.b16 %v591
      %v635 = vunpack.c.h.b16 %v591
      %v636 = vunpack.c.l.b16 %v592
      %v637 = vunpack.c.h.b16 %v592
      %v638 = vunpack.c.l.b16 %v593
      %v639 = vunpack.c.h.b16 %v593
      %v640 = vunpack.c.l.b16 %v594
      %v641 = vunpack.c.h.b16 %v594
      %v642 = vunpack.c.l.b16 %v595
      %v643 = vunpack.c.h.b16 %v595
      %v644 = vunpack.c.l.b16 %v596
      %v645 = vunpack.c.h.b16 %v596
      %v646 = vunpack.c.l.b16 %v597
      %v647 = vunpack.c.h.b16 %v597
      %v648 = vunpack.c.l.b16 %v598
      %v649 = vunpack.c.h.b16 %v598
      %v650 = vunpack.c.l.b16 %v599
      %v651 = vunpack.c.h.b16 %v599
      %v652 = vunpack.c.l.b16 %v600
      %v653 = vunpack.c.h.b16 %v600
      %v654 = vunpack.c.l.b16 %v601
      %v655 = vunpack.c.h.b16 %v601
      %v656 = vunpack.c.l.b16 %v602
      %v657 = vunpack.c.h.b16 %v602
      %v658 = vunpack.c.l.b16 %v603
      %v659 = vunpack.c.h.b16 %v603
      %v660 = vunpack.c.l.b16 %v604
      %v661 = vpack.c.b16 %v624, %v624
      %v662 = vpack.c.b16 %v625, %v625
      %v663 = vpack.c.b16 %v626, %v626
      %v664 = vpack.c.b16 %v627, %v627
      %v665 = vpack.c.b16 %v628, %v628
      %v666 = vpack.c.b16 %v629, %v629
      %v667 = vpack.c.b16 %v630, %v630
      %v668 = vpack.c.b16 %v631, %v631
      %v669 = vpack.c.b16 %v632, %v632
      %v670 = vpack.c.b16 %v633, %v633
      %v671 = vpack.c.b16 %v634, %v634
      %v672 = vpack.c.b16 %v635, %v635
      %v673 = vpack.c.b16 %v636, %v636
      %v674 = vpack.c.b16 %v637, %v637
      %v675 = vpack.c.b16 %v638, %v638
      %v676 = vpack.c.b16 %v639, %v639
      %v677 = vpack.c.b16 %v640, %v640
      %v678 = vpack.c.b16 %v641, %v641
      %v679 = vpack.c.b16 %v642, %v642
      %v680 = vpack.c.b16 %v643, %v643
      %v681 = vpack.c.b16 %v644, %v644
      %v682 = vpack.c.b16 %v645, %v645
      %v683 = vpack.c.b16 %v646, %v646
      %v684 = vpack.c.b16 %v647, %v647
      %v685 = vpack.c.b16 %v648, %v648
      %v686 = vpack.c.b16 %v649, %v649
      %v687 = vpack.c.b16 %v650, %v650
      %v688 = vpack.c.b16 %v651, %v651
      %v689 = vpack.c.b16 %v652, %v652
      %v690 = vpack.c.b16 %v653, %v653
      %v691 = vpack.c.b16 %v654, %v654
      %v692 = vpack.c.b16 %v655, %v655
      %v693 = vpack.c.b16 %v656, %v656
      %v694 = vpack.c.b16 %v657, %v657
      %v695 = vpack.c.b16 %v658, %v658
      %v696 = vpack.c.b16 %v659, %v659
      %v697 = vpack.c.b16 %v660, %v660
      %vm735 = vcmask 257024
      %736 = vst.msk [vmem:[%s143] sm:$0xf] %vm735, %v661
      %737 = vst.msk [vmem:[%s143 + $0x4] sm:$0xf] %vm735, %v662
      %738 = vst.msk [vmem:[%s143 + $0x8] sm:$0xf] %vm735, %v663
      %739 = vst.msk [vmem:[%s143 + $0xc] sm:$0xf] %vm735, %v664
      %740 = vst.msk [vmem:[%s143 + $0x10] sm:$0xf] %vm735, %v665
      %741 = vst.msk [vmem:[%s143 + $0x14] sm:$0xf] %vm735, %v666
      %742 = vst.msk [vmem:[%s143 + $0x18] sm:$0xf] %vm735, %v667
      %743 = vst.msk [vmem:[%s143 + $0x1c] sm:$0xf] %vm735, %v668
      %744 = vst.msk [vmem:[%s143 + $0x20] sm:$0xf] %vm735, %v669
      %745 = vst.msk [vmem:[%s143 + $0x24] sm:$0xf] %vm735, %v670
      %746 = vst.msk [vmem:[%s143 + $0x28] sm:$0xf] %vm735, %v671
      %747 = vst.msk [vmem:[%s143 + $0x2c] sm:$0xf] %vm735, %v672
      %748 = vst.msk [vmem:[%s143 + $0x30] sm:$0xf] %vm735, %v673
      %749 = vst.msk [vmem:[%s143 + $0x34] sm:$0xf] %vm735, %v674
      %750 = vst.msk [vmem:[%s143 + $0x38] sm:$0xf] %vm735, %v675
      %751 = vst.msk [vmem:[%s143 + $0x3c] sm:$0xf] %vm735, %v676
      %752 = vst.msk [vmem:[%s143 + $0x40] sm:$0xf] %vm735, %v677
      %753 = vst.msk [vmem:[%s143 + $0x44] sm:$0xf] %vm735, %v678
      %754 = vst.msk [vmem:[%s143 + $0x48] sm:$0xf] %vm735, %v679
      %755 = vst.msk [vmem:[%s143 + $0x4c] sm:$0xf] %vm735, %v680
      %756 = vst.msk [vmem:[%s143 + $0x50] sm:$0xf] %vm735, %v681
      %757 = vst.msk [vmem:[%s143 + $0x54] sm:$0xf] %vm735, %v682
      %758 = vst.msk [vmem:[%s143 + $0x58] sm:$0xf] %vm735, %v683
      %759 = vst.msk [vmem:[%s143 + $0x5c] sm:$0xf] %vm735, %v684
      %760 = vst.msk [vmem:[%s143 + $0x60] sm:$0xf] %vm735, %v685
      %761 = vst.msk [vmem:[%s143 + $0x64] sm:$0xf] %vm735, %v686
      %762 = vst.msk [vmem:[%s143 + $0x68] sm:$0xf] %vm735, %v687
      %763 = vst.msk [vmem:[%s143 + $0x6c] sm:$0xf] %vm735, %v688
      %764 = vst.msk [vmem:[%s143 + $0x70] sm:$0xf] %vm735, %v689
      %765 = vst.msk [vmem:[%s143 + $0x74] sm:$0xf] %vm735, %v690
      %766 = vst.msk [vmem:[%s143 + $0x78] sm:$0xf] %vm735, %v691
      %767 = vst.msk [vmem:[%s143 + $0x7c] sm:$0xf] %vm735, %v692
      %768 = vst.msk [vmem:[%s143 + $0x80] sm:$0xf] %vm735, %v693
      %769 = vst.msk [vmem:[%s143 + $0x84] sm:$0xf] %vm735, %v694
      %770 = vst.msk [vmem:[%s143 + $0x88] sm:$0xf] %vm735, %v695
      %771 = vst.msk [vmem:[%s143 + $0x8c] sm:$0xf] %vm735, %v696
      %vm772 = vcmask 253952
      %vm773 = vsmask.f32 256
      %vm774 = vmand %vm772, %vm773
      %v775 = vld [vmem:[%s143 + $0x90] sm:$0x1]
      %v776 = vsel %vm774, %v697, %v775
      %777 = vst [vmem:[%s143 + $0x90] sm:$0x1] %v776
      %p778 = scmp.lt.s32.totalorder %s13, 1
      %s779 = scalar_select %p778, %s13, 1
      %s780 = smul.addr %s779, 37
      %s781 = smul.addr %s780, 4
      %s782 = scalar_lea.vmem %s2, %s781
      // Predicated region
      $region29: #{generator_forward.8} parent=27 // pred_check
        %p783 = pneg %p78
      $region30: #{generator_forward.8} parent=27 // pred_check_branch
        %785 = sbr.rel (%p783) target = $region32
      $region31: #{generator_forward.8} parent=27 // pred_region
        _
      $region32: #{generator_forward.8} parent=27 // pred_fallthru
        _
    $region28: #{generator_forward.8} parent=5 // pred_fallthru
      _
    %p786 = scmp.le.s32.totalorder 2, %s8
    // Predicated region
    $region33: #{generator_forward.8} parent=5 // pred_check
      %p787 = pneg %p786
    $region34: #{generator_forward.8} parent=5 // pred_check_branch
      %789 = sbr.rel (%p787) target = $region36
    $region35: #{generator_forward.8} parent=5 // pred_region
      %s790 = ssub.s32 %s8, 2
      // Predicated region
      $region37: #{generator_forward.8} parent=35 // pred_check
        %p791 = pneg %p84
      $region38: #{generator_forward.8} parent=35 // pred_check_branch
        %793 = sbr.rel (%p791) target = $region40
      $region39: #{generator_forward.8} parent=35 // pred_region
        %p794 = scmp.lt.s32.totalorder %s14, 1
        %s795 = scalar_select %p794, %s14, 1
        %s796 = smul.addr %s795, 37
        %s797 = smul.addr %s796, 4
        %s798 = scalar_lea.vmem %s2, %s797
      $region40: #{generator_forward.8} parent=35 // pred_fallthru
        _
    $region36: #{generator_forward.8} parent=5 // pred_fallthru
      _
  $region6: #{generator_forward.8} parent=0 // loop_footer
    %s12 = sadd.s32 1, %s8
  $region7: #{generator_forward.8} parent=0 // loop_footer_branch
    %7 = sbr.rel target = $region3
  $region8: #{generator_forward.8} parent=0 // loop_exit
    _

// kernel: generator_forward.9
$region0: #{generator_forward.9}
  #allocation0 [shape = 'u32[]', space=smem, size = 0x4, offset = 0x4, fixed_abs, tag = 'smem constant byte address 0x4 - core index']
  #allocation1 [shape = 'u32[144,128]{1,0:T(1,128)}', space=vmem, size = 0x12000, scoped, tag = 'internal scratch']
  %s0 = inlined_call_operand.vmem [shape: bf16[2,1089,32], index: 0, kind: input, shape index: {}]
  %s1 = inlined_call_operand.vmem [shape: bf16[32,12], index: 1, kind: input, shape index: {}]
  %s2 = inlined_call_operand.vmem [shape: bf16[2,1089,12], index: 2, kind: output, shape index: {}]
  %s3 = sld [smem:[#allocation0]]
  $region41: #{generator_forward.9} parent=0
    _
  %s5 = ssub.s32 1, %s3
  %s6 = scalar_select 0, %s5, %s3
  loop: start=0, step=1, limit=4
  $region2: #{generator_forward.9} parent=0 // loop_pre_header
    _
  $region3: #{generator_forward.9} parent=0 // loop_header
    %s8 = sphi 0, %s12
    %p9 = scmp.ge.s32.totalorder %s8, 4
    %s18 = sphi 0, %s20
    %s21 = sphi 0, %s18
    %s22 = sphi 0, %s21
    %s38 = sphi 0, %s22
    %s42 = sphi 0, %s42
    %s44 = sphi 0, %s42
    %s45 = sphi 0, %s44
    %s59 = sphi 0, %s45
    %s65 = sphi 0, %s67
    %s68 = sphi 0, %s65
    %s69 = sphi 0, %s68
    %s85 = sphi 0, %s69
  $region4: #{generator_forward.9} parent=0 // loop_header_branch
    %11 = sbr.rel (%p9) target = $region8
  $region5: #{generator_forward.9} parent=0 // loop_body
    %s13 = ssub.s32 %s8, 1
    %s14 = ssub.s32 %s8, 2
    %s15 = sadd.s32 %s8, 1
    %s16 = ssub.s32 %s8, %s15
    %p17 = scmp.eq.s32.totalorder %s16, 0
    %s19 = sadd.s32 %s18, 1
    %s20 = scalar_select %p17, %s18, %s19
    %p23 = pneg %p17
    %p24 = scmp.eq.s32.totalorder %s8, 1
    %p25 = por %p23, %p24
    %p26 = scmp.ne.s32.totalorder %s18, %s21
    %p27 = scmp.eq.s32.totalorder %s8, 0
    %p28 = por %p26, %p27
    %p29 = scmp.ne.s32.totalorder %s18, %s21
    %p30 = scmp.eq.s32.totalorder %s13, 1
    %p31 = por %p29, %p30
    %p32 = scmp.ne.s32.totalorder %s21, %s22
    %p33 = scmp.eq.s32.totalorder %s13, 0
    %p34 = por %p32, %p33
    %p35 = scmp.ne.s32.totalorder %s21, %s22
    %p36 = scmp.eq.s32.totalorder %s14, 1
    %p37 = por %p35, %p36
    %p39 = scmp.ne.s32.totalorder %s22, %s38
    %p40 = scmp.eq.s32.totalorder %s14, 0
    %p41 = por %p39, %p40
    %s43 = sadd.s32 %s42, 1
    %p46 = scmp.eq.s32.totalorder %s8, 1
    %p47 = scmp.ne.s32.totalorder %s42, %s44
    %p48 = scmp.eq.s32.totalorder %s8, 0
    %p49 = por %p47, %p48
    %p50 = scmp.ne.s32.totalorder %s42, %s44
    %p51 = scmp.eq.s32.totalorder %s13, 1
    %p52 = por %p50, %p51
    %p53 = scmp.ne.s32.totalorder %s44, %s45
    %p54 = scmp.eq.s32.totalorder %s13, 0
    %p55 = por %p53, %p54
    %p56 = scmp.ne.s32.totalorder %s44, %s45
    %p57 = scmp.eq.s32.totalorder %s14, 1
    %p58 = por %p56, %p57
    %p60 = scmp.ne.s32.totalorder %s45, %s59
    %p61 = scmp.eq.s32.totalorder %s14, 0
    %p62 = por %p60, %p61
    %s63 = ssub.s32 %s8, %s15
    %p64 = scmp.eq.s32.totalorder %s63, 0
    %s66 = sadd.s32 %s65, 1
    %s67 = scalar_select %p64, %s65, %s66
    %p70 = pneg %p64
    %p71 = scmp.eq.s32.totalorder %s8, 1
    %p72 = por %p70, %p71
    %p73 = scmp.ne.s32.totalorder %s65, %s68
    %p74 = scmp.eq.s32.totalorder %s8, 0
    %p75 = por %p73, %p74
    %p76 = scmp.ne.s32.totalorder %s65, %s68
    %p77 = scmp.eq.s32.totalorder %s13, 1
    %p78 = por %p76, %p77
    %p79 = scmp.ne.s32.totalorder %s68, %s69
    %p80 = scmp.eq.s32.totalorder %s13, 0
    %p81 = por %p79, %p80
    %p82 = scmp.ne.s32.totalorder %s68, %s69
    %p83 = scmp.eq.s32.totalorder %s14, 1
    %p84 = por %p82, %p83
    %p86 = scmp.ne.s32.totalorder %s69, %s85
    %p87 = scmp.eq.s32.totalorder %s14, 0
    %p88 = por %p86, %p87
    %p89 = scmp.le.s32.totalorder 1, %s8
    %p90 = scmp.lt.s32.totalorder %s8, 3
    %p91 = pnand %p89, %p90
    %p92 = pneg %p91
    // Predicated region
    $region9: #{generator_forward.9} parent=5 // pred_check
      _
    $region10: #{generator_forward.9} parent=5 // pred_check_branch
      %94 = sbr.rel (%p91) target = $region12
    $region11: #{generator_forward.9} parent=5 // pred_region
      %s95 = ssub.s32 %s8, 1
      // Predicated region
      $region13: #{generator_forward.9} parent=11 // pred_check
        %p96 = pneg %p55
      $region14: #{generator_forward.9} parent=11 // pred_check_branch
        %98 = sbr.rel (%p96) target = $region16
      $region15: #{generator_forward.9} parent=11 // pred_region
        _
      $region16: #{generator_forward.9} parent=11 // pred_fallthru
        _
    $region12: #{generator_forward.9} parent=5 // pred_fallthru
      _
    %p99 = scmp.lt.s32.totalorder %s8, 2
    // Predicated region
    $region17: #{generator_forward.9} parent=5 // pred_check
      %p100 = pneg %p99
    $region18: #{generator_forward.9} parent=5 // pred_check_branch
      %102 = sbr.rel (%p100) target = $region20
    $region19: #{generator_forward.9} parent=5 // pred_region
      // Predicated region
      $region21: #{generator_forward.9} parent=19 // pred_check
        %p103 = pneg %p28
      $region22: #{generator_forward.9} parent=19 // pred_check_branch
        %105 = sbr.rel (%p103) target = $region24
      $region23: #{generator_forward.9} parent=19 // pred_region
        %p106 = scmp.lt.s32.totalorder %s8, 1
        %s107 = scalar_select %p106, %s8, 1
        %s108 = smul.addr %s107, 137
        %s109 = smul.addr %s108, 4
        %s110 = scalar_lea.vmem %s0, %s109
      $region24: #{generator_forward.9} parent=19 // pred_fallthru
        _
    $region20: #{generator_forward.9} parent=5 // pred_fallthru
      _
    %p111 = scmp.le.s32.totalorder 1, %s8
    %p112 = scmp.lt.s32.totalorder %s8, 3
    %p113 = pnand %p111, %p112
    %p114 = pneg %p113
    // Predicated region
    $region25: #{generator_forward.9} parent=5 // pred_check
      _
    $region26: #{generator_forward.9} parent=5 // pred_check_branch
      %116 = sbr.rel (%p113) target = $region28
    $region27: #{generator_forward.9} parent=5 // pred_region
      %s117 = ssub.s32 %s8, 1
      %p118 = scmp.lt.s32.totalorder %s13, 1
      %s119 = scalar_select %p118, %s13, 1
      %s120 = smul.addr %s119, 137
      %s121 = smul.addr %s120, 4
      %s122 = scalar_lea.vmem %s0, %s121
      %p123 = pneg %p34
      %p124 = pneg %p31
      %p125 = pneg %p55
      %p126 = pneg %p52
      %p127 = pneg %p81
      %p128 = pneg %p78
      %p129 = scmp.lt.s32.totalorder %s13, 1
      %s130 = scalar_select %p129, %s13, 1
      %s131 = smul.addr %s130, 137
      %s132 = smul.addr %s131, 4
      %s133 = scalar_lea.vmem %s2, %s132
      %p134 = scmp.lt.s32.totalorder %s13, 1
      %s135 = scalar_select %p134, %s13, 1
      %s136 = smul.addr %s135, 137
      %s137 = smul.addr %s136, 4
      %s138 = scalar_lea.vmem %s0, %s137
      %p139 = scmp.lt.s32.totalorder %s13, 1
      %s140 = scalar_select %p139, %s13, 1
      %s141 = smul.addr %s140, 137
      %s142 = smul.addr %s141, 4
      %s143 = scalar_lea.vmem %s2, %s142
      %v145 = vld [vmem:[%s138] sm:$0xf]
      %v146 = vld [vmem:[%s138 + $0x4] sm:$0xf]
      %v147 = vld [vmem:[%s138 + $0x8] sm:$0xf]
      %v148 = vld [vmem:[%s138 + $0xc] sm:$0xf]
      %v149 = vld [vmem:[%s138 + $0x10] sm:$0xf]
      %v150 = vld [vmem:[%s138 + $0x14] sm:$0xf]
      %v151 = vld [vmem:[%s138 + $0x18] sm:$0xf]
      %v152 = vld [vmem:[%s138 + $0x1c] sm:$0xf]
      %v153 = vld [vmem:[%s138 + $0x20] sm:$0xf]
      %v154 = vld [vmem:[%s138 + $0x24] sm:$0xf]
      %v155 = vld [vmem:[%s138 + $0x28] sm:$0xf]
      %v156 = vld [vmem:[%s138 + $0x2c] sm:$0xf]
      %v157 = vld [vmem:[%s138 + $0x30] sm:$0xf]
      %v158 = vld [vmem:[%s138 + $0x34] sm:$0xf]
      %v159 = vld [vmem:[%s138 + $0x38] sm:$0xf]
      %v160 = vld [vmem:[%s138 + $0x3c] sm:$0xf]
      %v161 = vld [vmem:[%s138 + $0x40] sm:$0xf]
      %v162 = vld [vmem:[%s138 + $0x44] sm:$0xf]
      %v163 = vld [vmem:[%s138 + $0x48] sm:$0xf]
      %v164 = vld [vmem:[%s138 + $0x4c] sm:$0xf]
      %v165 = vld [vmem:[%s138 + $0x50] sm:$0xf]
      %v166 = vld [vmem:[%s138 + $0x54] sm:$0xf]
      %v167 = vld [vmem:[%s138 + $0x58] sm:$0xf]
      %v168 = vld [vmem:[%s138 + $0x5c] sm:$0xf]
      %v169 = vld [vmem:[%s138 + $0x60] sm:$0xf]
      %v170 = vld [vmem:[%s138 + $0x64] sm:$0xf]
      %v171 = vld [vmem:[%s138 + $0x68] sm:$0xf]
      %v172 = vld [vmem:[%s138 + $0x6c] sm:$0xf]
      %v173 = vld [vmem:[%s138 + $0x70] sm:$0xf]
      %v174 = vld [vmem:[%s138 + $0x74] sm:$0xf]
      %v175 = vld [vmem:[%s138 + $0x78] sm:$0xf]
      %v176 = vld [vmem:[%s138 + $0x7c] sm:$0xf]
      %v177 = vld [vmem:[%s138 + $0x80] sm:$0xf]
      %v178 = vld [vmem:[%s138 + $0x84] sm:$0xf]
      %v179 = vld [vmem:[%s138 + $0x88] sm:$0xf]
      %v180 = vld [vmem:[%s138 + $0x8c] sm:$0xf]
      %v181 = vld [vmem:[%s138 + $0x90] sm:$0xf]
      %v182 = vld [vmem:[%s138 + $0x94] sm:$0xf]
      %v183 = vld [vmem:[%s138 + $0x98] sm:$0xf]
      %v184 = vld [vmem:[%s138 + $0x9c] sm:$0xf]
      %v185 = vld [vmem:[%s138 + $0xa0] sm:$0xf]
      %v186 = vld [vmem:[%s138 + $0xa4] sm:$0xf]
      %v187 = vld [vmem:[%s138 + $0xa8] sm:$0xf]
      %v188 = vld [vmem:[%s138 + $0xac] sm:$0xf]
      %v189 = vld [vmem:[%s138 + $0xb0] sm:$0xf]
      %v190 = vld [vmem:[%s138 + $0xb4] sm:$0xf]
      %v191 = vld [vmem:[%s138 + $0xb8] sm:$0xf]
      %v192 = vld [vmem:[%s138 + $0xbc] sm:$0xf]
      %v193 = vld [vmem:[%s138 + $0xc0] sm:$0xf]
      %v194 = vld [vmem:[%s138 + $0xc4] sm:$0xf]
      %v195 = vld [vmem:[%s138 + $0xc8] sm:$0xf]
      %v196 = vld [vmem:[%s138 + $0xcc] sm:$0xf]
      %v197 = vld [vmem:[%s138 + $0xd0] sm:$0xf]
      %v198 = vld [vmem:[%s138 + $0xd4] sm:$0xf]
      %v199 = vld [vmem:[%s138 + $0xd8] sm:$0xf]
      %v200 = vld [vmem:[%s138 + $0xdc] sm:$0xf]
      %v201 = vld [vmem:[%s138 + $0xe0] sm:$0xf]
      %v202 = vld [vmem:[%s138 + $0xe4] sm:$0xf]
      %v203 = vld [vmem:[%s138 + $0xe8] sm:$0xf]
      %v204 = vld [vmem:[%s138 + $0xec] sm:$0xf]
      %v205 = vld [vmem:[%s138 + $0xf0] sm:$0xf]
      %v206 = vld [vmem:[%s138 + $0xf4] sm:$0xf]
      %v207 = vld [vmem:[%s138 + $0xf8] sm:$0xf]
      %v208 = vld [vmem:[%s138 + $0xfc] sm:$0xf]
      %v209 = vld [vmem:[%s138 + $0x100] sm:$0xf]
      %v210 = vld [vmem:[%s138 + $0x104] sm:$0xf]
      %v211 = vld [vmem:[%s138 + $0x108] sm:$0xf]
      %v212 = vld [vmem:[%s138 + $0x10c] sm:$0xf]
      %v213 = vld [vmem:[%s138 + $0x110] sm:$0xf]
      %v214 = vld [vmem:[%s138 + $0x114] sm:$0xf]
      %v215 = vld [vmem:[%s138 + $0x118] sm:$0xf]
      %v216 = vld [vmem:[%s138 + $0x11c] sm:$0xf]
      %v217 = vld [vmem:[%s138 + $0x120] sm:$0xf]
      %v218 = vld [vmem:[%s138 + $0x124] sm:$0xf]
      %v219 = vld [vmem:[%s138 + $0x128] sm:$0xf]
      %v220 = vld [vmem:[%s138 + $0x12c] sm:$0xf]
      %v221 = vld [vmem:[%s138 + $0x130] sm:$0xf]
      %v222 = vld [vmem:[%s138 + $0x134] sm:$0xf]
      %v223 = vld [vmem:[%s138 + $0x138] sm:$0xf]
      %v224 = vld [vmem:[%s138 + $0x13c] sm:$0xf]
      %v225 = vld [vmem:[%s138 + $0x140] sm:$0xf]
      %v226 = vld [vmem:[%s138 + $0x144] sm:$0xf]
      %v227 = vld [vmem:[%s138 + $0x148] sm:$0xf]
      %v228 = vld [vmem:[%s138 + $0x14c] sm:$0xf]
      %v229 = vld [vmem:[%s138 + $0x150] sm:$0xf]
      %v230 = vld [vmem:[%s138 + $0x154] sm:$0xf]
      %v231 = vld [vmem:[%s138 + $0x158] sm:$0xf]
      %v232 = vld [vmem:[%s138 + $0x15c] sm:$0xf]
      %v233 = vld [vmem:[%s138 + $0x160] sm:$0xf]
      %v234 = vld [vmem:[%s138 + $0x164] sm:$0xf]
      %v235 = vld [vmem:[%s138 + $0x168] sm:$0xf]
      %v236 = vld [vmem:[%s138 + $0x16c] sm:$0xf]
      %v237 = vld [vmem:[%s138 + $0x170] sm:$0xf]
      %v238 = vld [vmem:[%s138 + $0x174] sm:$0xf]
      %v239 = vld [vmem:[%s138 + $0x178] sm:$0xf]
      %v240 = vld [vmem:[%s138 + $0x17c] sm:$0xf]
      %v241 = vld [vmem:[%s138 + $0x180] sm:$0xf]
      %v242 = vld [vmem:[%s138 + $0x184] sm:$0xf]
      %v243 = vld [vmem:[%s138 + $0x188] sm:$0xf]
      %v244 = vld [vmem:[%s138 + $0x18c] sm:$0xf]
      %v245 = vld [vmem:[%s138 + $0x190] sm:$0xf]
      %v246 = vld [vmem:[%s138 + $0x194] sm:$0xf]
      %v247 = vld [vmem:[%s138 + $0x198] sm:$0xf]
      %v248 = vld [vmem:[%s138 + $0x19c] sm:$0xf]
      %v249 = vld [vmem:[%s138 + $0x1a0] sm:$0xf]
      %v250 = vld [vmem:[%s138 + $0x1a4] sm:$0xf]
      %v251 = vld [vmem:[%s138 + $0x1a8] sm:$0xf]
      %v252 = vld [vmem:[%s138 + $0x1ac] sm:$0xf]
      %v253 = vld [vmem:[%s138 + $0x1b0] sm:$0xf]
      %v254 = vld [vmem:[%s138 + $0x1b4] sm:$0xf]
      %v255 = vld [vmem:[%s138 + $0x1b8] sm:$0xf]
      %v256 = vld [vmem:[%s138 + $0x1bc] sm:$0xf]
      %v257 = vld [vmem:[%s138 + $0x1c0] sm:$0xf]
      %v258 = vld [vmem:[%s138 + $0x1c4] sm:$0xf]
      %v259 = vld [vmem:[%s138 + $0x1c8] sm:$0xf]
      %v260 = vld [vmem:[%s138 + $0x1cc] sm:$0xf]
      %v261 = vld [vmem:[%s138 + $0x1d0] sm:$0xf]
      %v262 = vld [vmem:[%s138 + $0x1d4] sm:$0xf]
      %v263 = vld [vmem:[%s138 + $0x1d8] sm:$0xf]
      %v264 = vld [vmem:[%s138 + $0x1dc] sm:$0xf]
      %v265 = vld [vmem:[%s138 + $0x1e0] sm:$0xf]
      %v266 = vld [vmem:[%s138 + $0x1e4] sm:$0xf]
      %v267 = vld [vmem:[%s138 + $0x1e8] sm:$0xf]
      %v268 = vld [vmem:[%s138 + $0x1ec] sm:$0xf]
      %v269 = vld [vmem:[%s138 + $0x1f0] sm:$0xf]
      %v270 = vld [vmem:[%s138 + $0x1f4] sm:$0xf]
      %v271 = vld [vmem:[%s138 + $0x1f8] sm:$0xf]
      %v272 = vld [vmem:[%s138 + $0x1fc] sm:$0xf]
      %v273 = vld [vmem:[%s138 + $0x200] sm:$0xf]
      %v274 = vld [vmem:[%s138 + $0x204] sm:$0xf]
      %v275 = vld [vmem:[%s138 + $0x208] sm:$0xf]
      %v276 = vld [vmem:[%s138 + $0x20c] sm:$0xf]
      %v277 = vld [vmem:[%s138 + $0x210] sm:$0xf]
      %v278 = vld [vmem:[%s138 + $0x214] sm:$0xf]
      %v279 = vld [vmem:[%s138 + $0x218] sm:$0xf]
      %v280 = vld [vmem:[%s138 + $0x21c] sm:$0xf]
      %v281 = vld [vmem:[%s138 + $0x220] sm:$0x1]
      %v282 = vld [vmem:[%s1] sm:$0xf]
      %v283 = vld [vmem:[%s1 + $0x4] sm:$0xf]
      %v284 = vld [vmem:[%s1 + $0x8] sm:$0xf]
      %v285 = vld [vmem:[%s1 + $0xc] sm:$0xf]
      %v423 = vunpack.c.l.b16 %v145
      %v424 = vunpack.c.l.b16 %v146
      %v425 = vunpack.c.l.b16 %v147
      %v426 = vunpack.c.l.b16 %v148
      %v427 = vunpack.c.l.b16 %v149
      %v428 = vunpack.c.l.b16 %v150
      %v429 = vunpack.c.l.b16 %v151
      %v430 = vunpack.c.l.b16 %v152
      %v431 = vunpack.c.l.b16 %v153
      %v432 = vunpack.c.l.b16 %v154
      %v433 = vunpack.c.l.b16 %v155
      %v434 = vunpack.c.l.b16 %v156
      %v435 = vunpack.c.l.b16 %v157
      %v436 = vunpack.c.l.b16 %v158
      %v437 = vunpack.c.l.b16 %v159
      %v438 = vunpack.c.l.b16 %v160
      %v439 = vunpack.c.l.b16 %v161
      %v440 = vunpack.c.l.b16 %v162
      %v441 = vunpack.c.l.b16 %v163
      %v442 = vunpack.c.l.b16 %v164
      %v443 = vunpack.c.l.b16 %v165
      %v444 = vunpack.c.l.b16 %v166
      %v445 = vunpack.c.l.b16 %v167
      %v446 = vunpack.c.l.b16 %v168
      %v447 = vunpack.c.l.b16 %v169
      %v448 = vunpack.c.l.b16 %v170
      %v449 = vunpack.c.l.b16 %v171
      %v450 = vunpack.c.l.b16 %v172
      %v451 = vunpack.c.l.b16 %v173
      %v452 = vunpack.c.l.b16 %v174
      %v453 = vunpack.c.l.b16 %v175
      %v454 = vunpack.c.l.b16 %v176
      %v455 = vunpack.c.l.b16 %v177
      %v456 = vunpack.c.l.b16 %v178
      %v457 = vunpack.c.l.b16 %v179
      %v458 = vunpack.c.l.b16 %v180
      %v459 = vunpack.c.l.b16 %v181
      %v460 = vunpack.c.l.b16 %v182
      %v461 = vunpack.c.l.b16 %v183
      %v462 = vunpack.c.l.b16 %v184
      %v463 = vunpack.c.l.b16 %v185
      %v464 = vunpack.c.l.b16 %v186
      %v465 = vunpack.c.l.b16 %v187
      %v466 = vunpack.c.l.b16 %v188
      %v467 = vunpack.c.l.b16 %v189
      %v468 = vunpack.c.l.b16 %v190
      %v469 = vunpack.c.l.b16 %v191
      %v470 = vunpack.c.l.b16 %v192
      %v471 = vunpack.c.l.b16 %v193
      %v472 = vunpack.c.l.b16 %v194
      %v473 = vunpack.c.l.b16 %v195
      %v474 = vunpack.c.l.b16 %v196
      %v475 = vunpack.c.l.b16 %v197
      %v476 = vunpack.c.l.b16 %v198
      %v477 = vunpack.c.l.b16 %v199
      %v478 = vunpack.c.l.b16 %v200
      %v479 = vunpack.c.l.b16 %v201
      %v480 = vunpack.c.l.b16 %v202
      %v481 = vunpack.c.l.b16 %v203
      %v482 = vunpack.c.l.b16 %v204
      %v483 = vunpack.c.l.b16 %v205
      %v484 = vunpack.c.l.b16 %v206
      %v485 = vunpack.c.l.b16 %v207
      %v486 = vunpack.c.l.b16 %v208
      %v487 = vunpack.c.l.b16 %v209
      %v488 = vunpack.c.l.b16 %v210
      %v489 = vunpack.c.l.b16 %v211
      %v490 = vunpack.c.l.b16 %v212
      %v491 = vunpack.c.l.b16 %v213
      %v492 = vunpack.c.l.b16 %v214
      %v493 = vunpack.c.l.b16 %v215
      %v494 = vunpack.c.l.b16 %v216
      %v495 = vunpack.c.l.b16 %v217
      %v496 = vunpack.c.l.b16 %v218
      %v497 = vunpack.c.l.b16 %v219
      %v498 = vunpack.c.l.b16 %v220
      %v499 = vunpack.c.l.b16 %v221
      %v500 = vunpack.c.l.b16 %v222
      %v501 = vunpack.c.l.b16 %v223
      %v502 = vunpack.c.l.b16 %v224
      %v503 = vunpack.c.l.b16 %v225
      %v504 = vunpack.c.l.b16 %v226
      %v505 = vunpack.c.l.b16 %v227
      %v506 = vunpack.c.l.b16 %v228
      %v507 = vunpack.c.l.b16 %v229
      %v508 = vunpack.c.l.b16 %v230
      %v509 = vunpack.c.l.b16 %v231
      %v510 = vunpack.c.l.b16 %v232
      %v511 = vunpack.c.l.b16 %v233
      %v512 = vunpack.c.l.b16 %v234
      %v513 = vunpack.c.l.b16 %v235
      %v514 = vunpack.c.l.b16 %v236
      %v515 = vunpack.c.l.b16 %v237
      %v516 = vunpack.c.l.b16 %v238
      %v517 = vunpack.c.l.b16 %v239
      %v518 = vunpack.c.l.b16 %v240
      %v519 = vunpack.c.l.b16 %v241
      %v520 = vunpack.c.l.b16 %v242
      %v521 = vunpack.c.l.b16 %v243
      %v522 = vunpack.c.l.b16 %v244
      %v523 = vunpack.c.l.b16 %v245
      %v524 = vunpack.c.l.b16 %v246
      %v525 = vunpack.c.l.b16 %v247
      %v526 = vunpack.c.l.b16 %v248
      %v527 = vunpack.c.l.b16 %v249
      %v528 = vunpack.c.l.b16 %v250
      %v529 = vunpack.c.l.b16 %v251
      %v530 = vunpack.c.l.b16 %v252
      %v531 = vunpack.c.l.b16 %v253
      %v532 = vunpack.c.l.b16 %v254
      %v533 = vunpack.c.l.b16 %v255
      %v534 = vunpack.c.l.b16 %v256
      %v535 = vunpack.c.l.b16 %v257
      %v536 = vunpack.c.l.b16 %v258
      %v537 = vunpack.c.l.b16 %v259
      %v538 = vunpack.c.l.b16 %v260
      %v539 = vunpack.c.l.b16 %v261
      %v540 = vunpack.c.l.b16 %v262
      %v541 = vunpack.c.l.b16 %v263
      %v542 = vunpack.c.l.b16 %v264
      %v543 = vunpack.c.l.b16 %v265
      %v544 = vunpack.c.l.b16 %v266
      %v545 = vunpack.c.l.b16 %v267
      %v546 = vunpack.c.l.b16 %v268
      %v547 = vunpack.c.l.b16 %v269
      %v548 = vunpack.c.l.b16 %v270
      %v549 = vunpack.c.l.b16 %v271
      %v550 = vunpack.c.l.b16 %v272
      %v551 = vunpack.c.l.b16 %v273
      %v552 = vunpack.c.l.b16 %v274
      %v553 = vunpack.c.l.b16 %v275
      %v554 = vunpack.c.l.b16 %v276
      %v555 = vunpack.c.l.b16 %v277
      %v556 = vunpack.c.l.b16 %v278
      %v557 = vunpack.c.l.b16 %v279
      %v558 = vunpack.c.l.b16 %v280
      %v559 = vunpack.c.l.b16 %v281
      %v560 = vpack.c.b16 %v424, %v423
      %v561 = vpack.c.b16 %v426, %v425
      %v562 = vpack.c.b16 %v428, %v427
      %v563 = vpack.c.b16 %v430, %v429
      %v564 = vpack.c.b16 %v432, %v431
      %v565 = vpack.c.b16 %v434, %v433
      %v566 = vpack.c.b16 %v436, %v435
      %v567 = vpack.c.b16 %v438, %v437
      %v568 = vpack.c.b16 %v440, %v439
      %v569 = vpack.c.b16 %v442, %v441
      %v570 = vpack.c.b16 %v444, %v443
      %v571 = vpack.c.b16 %v446, %v445
      %v572 = vpack.c.b16 %v448, %v447
      %v573 = vpack.c.b16 %v450, %v449
      %v574 = vpack.c.b16 %v452, %v451
      %v575 = vpack.c.b16 %v454, %v453
      %v576 = vpack.c.b16 %v456, %v455
      %v577 = vpack.c.b16 %v458, %v457
      %v578 = vpack.c.b16 %v460, %v459
      %v579 = vpack.c.b16 %v462, %v461
      %v580 = vpack.c.b16 %v464, %v463
      %v581 = vpack.c.b16 %v466, %v465
      %v582 = vpack.c.b16 %v468, %v467
      %v583 = vpack.c.b16 %v470, %v469
      %v584 = vpack.c.b16 %v472, %v471
      %v585 = vpack.c.b16 %v474, %v473
      %v586 = vpack.c.b16 %v476, %v475
      %v587 = vpack.c.b16 %v478, %v477
      %v588 = vpack.c.b16 %v480, %v479
      %v589 = vpack.c.b16 %v482, %v481
      %v590 = vpack.c.b16 %v484, %v483
      %v591 = vpack.c.b16 %v486, %v485
      %v592 = vpack.c.b16 %v488, %v487
      %v593 = vpack.c.b16 %v490, %v489
      %v594 = vpack.c.b16 %v492, %v491
      %v595 = vpack.c.b16 %v494, %v493
      %v596 = vpack.c.b16 %v496, %v495
      %v597 = vpack.c.b16 %v498, %v497
      %v598 = vpack.c.b16 %v500, %v499
      %v599 = vpack.c.b16 %v502, %v501
      %v600 = vpack.c.b16 %v504, %v503
      %v601 = vpack.c.b16 %v506, %v505
      %v602 = vpack.c.b16 %v508, %v507
      %v603 = vpack.c.b16 %v510, %v509
      %v604 = vpack.c.b16 %v512, %v511
      %v605 = vpack.c.b16 %v514, %v513
      %v606 = vpack.c.b16 %v516, %v515
      %v607 = vpack.c.b16 %v518, %v517
      %v608 = vpack.c.b16 %v520, %v519
      %v609 = vpack.c.b16 %v522, %v521
      %v610 = vpack.c.b16 %v524, %v523
      %v611 = vpack.c.b16 %v526, %v525
      %v612 = vpack.c.b16 %v528, %v527
      %v613 = vpack.c.b16 %v530, %v529
      %v614 = vpack.c.b16 %v532, %v531
      %v615 = vpack.c.b16 %v534, %v533
      %v616 = vpack.c.b16 %v536, %v535
      %v617 = vpack.c.b16 %v538, %v537
      %v618 = vpack.c.b16 %v540, %v539
      %v619 = vpack.c.b16 %v542, %v541
      %v620 = vpack.c.b16 %v544, %v543
      %v621 = vpack.c.b16 %v546, %v545
      %v622 = vpack.c.b16 %v548, %v547
      %v623 = vpack.c.b16 %v550, %v549
      %v624 = vpack.c.b16 %v552, %v551
      %v625 = vpack.c.b16 %v554, %v553
      %v626 = vpack.c.b16 %v556, %v555
      %v627 = vpack.c.b16 %v558, %v557
      %v628 = vpack.c.b16 %v559, %v559
      %v633 = vunpack.c.l.b16 %v282
      %v634 = vunpack.c.l.b16 %v283
      %v635 = vunpack.c.l.b16 %v284
      %v636 = vunpack.c.l.b16 %v285
      %v637 = vpack.c.b16 %v634, %v633
      %v638 = vpack.c.b16 %v636, %v635
      %vm641 = vcmask 261120
      %v643 = vsel %vm641, %v560, 0
      %v646 = vsel %vm641, %v561, 0
      %v649 = vsel %vm641, %v562, 0
      %v652 = vsel %vm641, %v563, 0
      %v655 = vsel %vm641, %v564, 0
      %v658 = vsel %vm641, %v565, 0
      %v661 = vsel %vm641, %v566, 0
      %v664 = vsel %vm641, %v567, 0
      %v667 = vsel %vm641, %v568, 0
      %v670 = vsel %vm641, %v569, 0
      %v673 = vsel %vm641, %v570, 0
      %v676 = vsel %vm641, %v571, 0
      %v679 = vsel %vm641, %v572, 0
      %v682 = vsel %vm641, %v573, 0
      %v685 = vsel %vm641, %v574, 0
      %v688 = vsel %vm641, %v575, 0
      %v691 = vsel %vm641, %v576, 0
      %v694 = vsel %vm641, %v577, 0
      %v697 = vsel %vm641, %v578, 0
      %v700 = vsel %vm641, %v579, 0
      %v703 = vsel %vm641, %v580, 0
      %v706 = vsel %vm641, %v581, 0
      %v709 = vsel %vm641, %v582, 0
      %v712 = vsel %vm641, %v583, 0
      %v715 = vsel %vm641, %v584, 0
      %v718 = vsel %vm641, %v585, 0
      %v721 = vsel %vm641, %v586, 0
      %v724 = vsel %vm641, %v587, 0
      %v727 = vsel %vm641, %v588, 0
      %v730 = vsel %vm641, %v589, 0
      %v733 = vsel %vm641, %v590, 0
      %v736 = vsel %vm641, %v591, 0
      %v739 = vsel %vm641, %v592, 0
      %v742 = vsel %vm641, %v593, 0
      %v745 = vsel %vm641, %v594, 0
      %v748 = vsel %vm641, %v595, 0
      %v751 = vsel %vm641, %v596, 0
      %v754 = vsel %vm641, %v597, 0
      %v757 = vsel %vm641, %v598, 0
      %v760 = vsel %vm641, %v599, 0
      %v763 = vsel %vm641, %v600, 0
      %v766 = vsel %vm641, %v601, 0
      %v769 = vsel %vm641, %v602, 0
      %v772 = vsel %vm641, %v603, 0
      %v775 = vsel %vm641, %v604, 0
      %v778 = vsel %vm641, %v605, 0
      %v781 = vsel %vm641, %v606, 0
      %v784 = vsel %vm641, %v607, 0
      %v787 = vsel %vm641, %v608, 0
      %v790 = vsel %vm641, %v609, 0
      %v793 = vsel %vm641, %v610, 0
      %v796 = vsel %vm641, %v611, 0
      %v799 = vsel %vm641, %v612, 0
      %v802 = vsel %vm641, %v613, 0
      %v805 = vsel %vm641, %v614, 0
      %v808 = vsel %vm641, %v615, 0
      %v811 = vsel %vm641, %v616, 0
      %v814 = vsel %vm641, %v617, 0
      %v817 = vsel %vm641, %v618, 0
      %v820 = vsel %vm641, %v619, 0
      %v823 = vsel %vm641, %v620, 0
      %v826 = vsel %vm641, %v621, 0
      %v829 = vsel %vm641, %v622, 0
      %v832 = vsel %vm641, %v623, 0
      %v835 = vsel %vm641, %v624, 0
      %v838 = vsel %vm641, %v625, 0
      %v841 = vsel %vm641, %v626, 0
      %v844 = vsel %vm641, %v627, 0
      %v847 = vsel %vm641, %v628, 0
      %849 = vmatprep.subr.bf16.mxu0 0
      %850 = vmatpush1.bf16.msra.mxu0 0
      %851 = vmatprep.subr.bf16.mxu0 0
      %852 = vmatpush1.bf16.msra.mxu0 0
      %853 = vmatprep.subr.bf16.mxu0 0
      %854 = vmatpush1.bf16.msra.mxu0 0
      %855 = vmatprep.subr.bf16.mxu0 0
      %856 = vmatpush1.bf16.msra.mxu0 0
      %857 = vmatprep.subr.bf16.mxu0 0
      %858 = vmatpush1.bf16.msra.mxu0 0
      %859 = vmatprep.subr.bf16.mxu0 0
      %860 = vmatpush1.bf16.msra.mxu0 0
      %861 = vmatprep.subr.bf16.mxu0 0
      %862 = vmatpush1.bf16.msra.mxu0 %v638
      %863 = vmatprep.subr.bf16.mxu0 0
      %864 = vmatpush1.bf16.msra.mxu0 %v637
      %865 = vmatprep.subr.bf16.mxu0 0
      %866 = vmatpush2.bf16.msra.mxu0 0
      %867 = vmatprep.subr.bf16.mxu0 0
      %868 = vmatpush2.bf16.msra.mxu0 0
      %869 = vmatprep.subr.bf16.mxu0 0
      %870 = vmatpush2.bf16.msra.mxu0 0
      %871 = vmatprep.subr.bf16.mxu0 0
      %872 = vmatpush2.bf16.msra.mxu0 0
      %873 = vmatprep.subr.bf16.mxu0 0
      %874 = vmatpush2.bf16.msra.mxu0 0
      %875 = vmatprep.subr.bf16.mxu0 0
      %876 = vmatpush2.bf16.msra.mxu0 0
      %877 = vmatprep.subr.bf16.mxu0 0
      %878 = vmatpush2.bf16.msra.mxu0 0
      %879 = vmatprep.subr.bf16.mxu0 0
      %880 = vmatpush2.bf16.msra.mxu0 0
      %881 = vmatprep.mubr.bf16.mxu0 0
      %882 = vmatmul.mubr.bf16.gmra.mxu0 %v643
      %v883 = vpop.f32.mrf.mxu0
      %v884 = vadd.f32 0.0, %v883
      %v885 = vpop.f32.mrf.mxu0
      %v886 = vpop.f32.mrf.mxu0
      %v887 = vadd.f32 0.0, %v886
      %v888 = vpop.f32.mrf.mxu0
      %889 = vmatprep.mubr.bf16.mxu0 0
      %890 = vmatmul.mubr.bf16.gmra.mxu0 %v646
      %v891 = vpop.f32.mrf.mxu0
      %v892 = vadd.f32 0.0, %v891
      %v893 = vpop.f32.mrf.mxu0
      %v894 = vpop.f32.mrf.mxu0
      %v895 = vadd.f32 0.0, %v894
      %v896 = vpop.f32.mrf.mxu0
      %897 = vmatprep.mubr.bf16.mxu0 0
      %898 = vmatmul.mubr.bf16.gmra.mxu0 %v649
      %v899 = vpop.f32.mrf.mxu0
      %v900 = vadd.f32 0.0, %v899
      %v901 = vpop.f32.mrf.mxu0
      %v902 = vpop.f32.mrf.mxu0
      %v903 = vadd.f32 0.0, %v902
      %v904 = vpop.f32.mrf.mxu0
      %905 = vmatprep.mubr.bf16.mxu0 0
      %906 = vmatmul.mubr.bf16.gmra.mxu0 %v652
      %v907 = vpop.f32.mrf.mxu0
      %v908 = vadd.f32 0.0, %v907
      %v909 = vpop.f32.mrf.mxu0
      %v910 = vpop.f32.mrf.mxu0
      %v911 = vadd.f32 0.0, %v910
      %v912 = vpop.f32.mrf.mxu0
      %913 = vmatprep.mubr.bf16.mxu0 0
      %914 = vmatmul.mubr.bf16.gmra.mxu0 %v655
      %v915 = vpop.f32.mrf.mxu0
      %v916 = vadd.f32 0.0, %v915
      %v917 = vpop.f32.mrf.mxu0
      %v918 = vpop.f32.mrf.mxu0
      %v919 = vadd.f32 0.0, %v918
      %v920 = vpop.f32.mrf.mxu0
      %921 = vmatprep.mubr.bf16.mxu0 0
      %922 = vmatmul.mubr.bf16.gmra.mxu0 %v658
      %v923 = vpop.f32.mrf.mxu0
      %v924 = vadd.f32 0.0, %v923
      %v925 = vpop.f32.mrf.mxu0
      %v926 = vpop.f32.mrf.mxu0
      %v927 = vadd.f32 0.0, %v926
      %v928 = vpop.f32.mrf.mxu0
      %929 = vmatprep.mubr.bf16.mxu0 0
      %930 = vmatmul.mubr.bf16.gmra.mxu0 %v661
      %v931 = vpop.f32.mrf.mxu0
      %v932 = vadd.f32 0.0, %v931
      %v933 = vpop.f32.mrf.mxu0
      %v934 = vpop.f32.mrf.mxu0
      %v935 = vadd.f32 0.0, %v934
      %v936 = vpop.f32.mrf.mxu0
      %937 = vmatprep.mubr.bf16.mxu0 0
      %938 = vmatmul.mubr.bf16.gmra.mxu0 %v664
      %v939 = vpop.f32.mrf.mxu0
      %v940 = vadd.f32 0.0, %v939
      %v941 = vpop.f32.mrf.mxu0
      %v942 = vpop.f32.mrf.mxu0
      %v943 = vadd.f32 0.0, %v942
      %v944 = vpop.f32.mrf.mxu0
      %945 = vmatprep.mubr.bf16.mxu0 0
      %946 = vmatmul.mubr.bf16.gmra.mxu0 %v667
      %v947 = vpop.f32.mrf.mxu0
      %v948 = vadd.f32 0.0, %v947
      %v949 = vpop.f32.mrf.mxu0
      %v950 = vpop.f32.mrf.mxu0
      %v951 = vadd.f32 0.0, %v950
      %v952 = vpop.f32.mrf.mxu0
      %953 = vmatprep.mubr.bf16.mxu0 0
      %954 = vmatmul.mubr.bf16.gmra.mxu0 %v670
      %v955 = vpop.f32.mrf.mxu0
      %v956 = vadd.f32 0.0, %v955
      %v957 = vpop.f32.mrf.mxu0
      %v958 = vpop.f32.mrf.mxu0
      %v959 = vadd.f32 0.0, %v958
      %v960 = vpop.f32.mrf.mxu0
      %961 = vmatprep.mubr.bf16.mxu0 0
      %962 = vmatmul.mubr.bf16.gmra.mxu0 %v673
      %v963 = vpop.f32.mrf.mxu0
      %v964 = vadd.f32 0.0, %v963
      %v965 = vpop.f32.mrf.mxu0
      %v966 = vpop.f32.mrf.mxu0
      %v967 = vadd.f32 0.0, %v966
      %v968 = vpop.f32.mrf.mxu0
      %969 = vmatprep.mubr.bf16.mxu0 0
      %970 = vmatmul.mubr.bf16.gmra.mxu0 %v676
      %v971 = vpop.f32.mrf.mxu0
      %v972 = vadd.f32 0.0, %v971
      %v973 = vpop.f32.mrf.mxu0
      %v974 = vpop.f32.mrf.mxu0
      %v975 = vadd.f32 0.0, %v974
      %v976 = vpop.f32.mrf.mxu0
      %977 = vmatprep.mubr.bf16.mxu0 0
      %978 = vmatmul.mubr.bf16.gmra.mxu0 %v679
      %v979 = vpop.f32.mrf.mxu0
      %v980 = vadd.f32 0.0, %v979
      %v981 = vpop.f32.mrf.mxu0
      %v982 = vpop.f32.mrf.mxu0
      %v983 = vadd.f32 0.0, %v982
      %v984 = vpop.f32.mrf.mxu0
      %985 = vmatprep.mubr.bf16.mxu0 0
      %986 = vmatmul.mubr.bf16.gmra.mxu0 %v682
      %v987 = vpop.f32.mrf.mxu0
      %v988 = vadd.f32 0.0, %v987
      %v989 = vpop.f32.mrf.mxu0
      %v990 = vpop.f32.mrf.mxu0
      %v991 = vadd.f32 0.0, %v990
      %v992 = vpop.f32.mrf.mxu0
      %993 = vmatprep.mubr.bf16.mxu0 0
      %994 = vmatmul.mubr.bf16.gmra.mxu0 %v685
      %v995 = vpop.f32.mrf.mxu0
      %v996 = vadd.f32 0.0, %v995
      %v997 = vpop.f32.mrf.mxu0
      %v998 = vpop.f32.mrf.mxu0
      %v999 = vadd.f32 0.0, %v998
      %v1000 = vpop.f32.mrf.mxu0
      %1001 = vmatprep.mubr.bf16.mxu0 0
      %1002 = vmatmul.mubr.bf16.gmra.mxu0 %v688
      %v1003 = vpop.f32.mrf.mxu0
      %v1004 = vadd.f32 0.0, %v1003
      %v1005 = vpop.f32.mrf.mxu0
      %v1006 = vpop.f32.mrf.mxu0
      %v1007 = vadd.f32 0.0, %v1006
      %v1008 = vpop.f32.mrf.mxu0
      %1009 = vmatprep.mubr.bf16.mxu0 0
      %1010 = vmatmul.mubr.bf16.gmra.mxu0 %v691
      %v1011 = vpop.f32.mrf.mxu0
      %v1012 = vadd.f32 0.0, %v1011
      %v1013 = vpop.f32.mrf.mxu0
      %v1014 = vpop.f32.mrf.mxu0
      %v1015 = vadd.f32 0.0, %v1014
      %v1016 = vpop.f32.mrf.mxu0
      %1017 = vmatprep.mubr.bf16.mxu0 0
      %1018 = vmatmul.mubr.bf16.gmra.mxu0 %v694
      %v1019 = vpop.f32.mrf.mxu0
      %v1020 = vadd.f32 0.0, %v1019
      %v1021 = vpop.f32.mrf.mxu0
      %v1022 = vpop.f32.mrf.mxu0
      %v1023 = vadd.f32 0.0, %v1022
      %v1024 = vpop.f32.mrf.mxu0
      %1025 = vmatprep.mubr.bf16.mxu0 0
      %1026 = vmatmul.mubr.bf16.gmra.mxu0 %v697
      %v1027 = vpop.f32.mrf.mxu0
      %v1028 = vadd.f32 0.0, %v1027
      %v1029 = vpop.f32.mrf.mxu0
      %v1030 = vpop.f32.mrf.mxu0
      %v1031 = vadd.f32 0.0, %v1030
      %v1032 = vpop.f32.mrf.mxu0
      %1033 = vmatprep.mubr.bf16.mxu0 0
      %1034 = vmatmul.mubr.bf16.gmra.mxu0 %v700
      %v1035 = vpop.f32.mrf.mxu0
      %v1036 = vadd.f32 0.0, %v1035
      %v1037 = vpop.f32.mrf.mxu0
      %v1038 = vpop.f32.mrf.mxu0
      %v1039 = vadd.f32 0.0, %v1038
      %v1040 = vpop.f32.mrf.mxu0
      %1041 = vmatprep.mubr.bf16.mxu0 0
      %1042 = vmatmul.mubr.bf16.gmra.mxu0 %v703
      %v1043 = vpop.f32.mrf.mxu0
      %v1044 = vadd.f32 0.0, %v1043
      %v1045 = vpop.f32.mrf.mxu0
      %v1046 = vpop.f32.mrf.mxu0
      %v1047 = vadd.f32 0.0, %v1046
      %v1048 = vpop.f32.mrf.mxu0
      %1049 = vmatprep.mubr.bf16.mxu0 0
      %1050 = vmatmul.mubr.bf16.gmra.mxu0 %v706
      %v1051 = vpop.f32.mrf.mxu0
      %v1052 = vadd.f32 0.0, %v1051
      %v1053 = vpop.f32.mrf.mxu0
      %v1054 = vpop.f32.mrf.mxu0
      %v1055 = vadd.f32 0.0, %v1054
      %v1056 = vpop.f32.mrf.mxu0
      %1057 = vmatprep.mubr.bf16.mxu0 0
      %1058 = vmatmul.mubr.bf16.gmra.mxu0 %v709
      %v1059 = vpop.f32.mrf.mxu0
      %v1060 = vadd.f32 0.0, %v1059
      %v1061 = vpop.f32.mrf.mxu0
      %v1062 = vpop.f32.mrf.mxu0
      %v1063 = vadd.f32 0.0, %v1062
      %v1064 = vpop.f32.mrf.mxu0
      %1065 = vmatprep.mubr.bf16.mxu0 0
      %1066 = vmatmul.mubr.bf16.gmra.mxu0 %v712
      %v1067 = vpop.f32.mrf.mxu0
      %v1068 = vadd.f32 0.0, %v1067
      %v1069 = vpop.f32.mrf.mxu0
      %v1070 = vpop.f32.mrf.mxu0
      %v1071 = vadd.f32 0.0, %v1070
      %v1072 = vpop.f32.mrf.mxu0
      %1073 = vmatprep.mubr.bf16.mxu0 0
      %1074 = vmatmul.mubr.bf16.gmra.mxu0 %v715
      %v1075 = vpop.f32.mrf.mxu0
      %v1076 = vadd.f32 0.0, %v1075
      %v1077 = vpop.f32.mrf.mxu0
      %v1078 = vpop.f32.mrf.mxu0
      %v1079 = vadd.f32 0.0, %v1078
      %v1080 = vpop.f32.mrf.mxu0
      %1081 = vmatprep.mubr.bf16.mxu0 0
      %1082 = vmatmul.mubr.bf16.gmra.mxu0 %v718
      %v1083 = vpop.f32.mrf.mxu0
      %v1084 = vadd.f32 0.0, %v1083
      %v1085 = vpop.f32.mrf.mxu0
      %v1086 = vpop.f32.mrf.mxu0
      %v1087 = vadd.f32 0.0, %v1086
      %v1088 = vpop.f32.mrf.mxu0
      %1089 = vmatprep.mubr.bf16.mxu0 0
      %1090 = vmatmul.mubr.bf16.gmra.mxu0 %v721
      %v1091 = vpop.f32.mrf.mxu0
      %v1092 = vadd.f32 0.0, %v1091
      %v1093 = vpop.f32.mrf.mxu0
      %v1094 = vpop.f32.mrf.mxu0
      %v1095 = vadd.f32 0.0, %v1094
      %v1096 = vpop.f32.mrf.mxu0
      %1097 = vmatprep.mubr.bf16.mxu0 0
      %1098 = vmatmul.mubr.bf16.gmra.mxu0 %v724
      %v1099 = vpop.f32.mrf.mxu0
      %v1100 = vadd.f32 0.0, %v1099
      %v1101 = vpop.f32.mrf.mxu0
      %v1102 = vpop.f32.mrf.mxu0
      %v1103 = vadd.f32 0.0, %v1102
      %v1104 = vpop.f32.mrf.mxu0
      %1105 = vmatprep.mubr.bf16.mxu0 0
      %1106 = vmatmul.mubr.bf16.gmra.mxu0 %v727
      %v1107 = vpop.f32.mrf.mxu0
      %v1108 = vadd.f32 0.0, %v1107
      %v1109 = vpop.f32.mrf.mxu0
      %v1110 = vpop.f32.mrf.mxu0
      %v1111 = vadd.f32 0.0, %v1110
      %v1112 = vpop.f32.mrf.mxu0
      %1113 = vmatprep.mubr.bf16.mxu0 0
      %1114 = vmatmul.mubr.bf16.gmra.mxu0 %v730
      %v1115 = vpop.f32.mrf.mxu0
      %v1116 = vadd.f32 0.0, %v1115
      %v1117 = vpop.f32.mrf.mxu0
      %v1118 = vpop.f32.mrf.mxu0
      %v1119 = vadd.f32 0.0, %v1118
      %v1120 = vpop.f32.mrf.mxu0
      %1121 = vmatprep.mubr.bf16.mxu0 0
      %1122 = vmatmul.mubr.bf16.gmra.mxu0 %v733
      %v1123 = vpop.f32.mrf.mxu0
      %v1124 = vadd.f32 0.0, %v1123
      %v1125 = vpop.f32.mrf.mxu0
      %v1126 = vpop.f32.mrf.mxu0
      %v1127 = vadd.f32 0.0, %v1126
      %v1128 = vpop.f32.mrf.mxu0
      %1129 = vmatprep.mubr.bf16.mxu0 0
      %1130 = vmatmul.mubr.bf16.gmra.mxu0 %v736
      %v1131 = vpop.f32.mrf.mxu0
      %v1132 = vadd.f32 0.0, %v1131
      %v1133 = vpop.f32.mrf.mxu0
      %v1134 = vpop.f32.mrf.mxu0
      %v1135 = vadd.f32 0.0, %v1134
      %v1136 = vpop.f32.mrf.mxu0
      %1137 = vmatprep.mubr.bf16.mxu0 0
      %1138 = vmatmul.mubr.bf16.gmra.mxu0 %v739
      %v1139 = vpop.f32.mrf.mxu0
      %v1140 = vadd.f32 0.0, %v1139
      %v1141 = vpop.f32.mrf.mxu0
      %v1142 = vpop.f32.mrf.mxu0
      %v1143 = vadd.f32 0.0, %v1142
      %v1144 = vpop.f32.mrf.mxu0
      %1145 = vmatprep.mubr.bf16.mxu0 0
      %1146 = vmatmul.mubr.bf16.gmra.mxu0 %v742
      %v1147 = vpop.f32.mrf.mxu0
      %v1148 = vadd.f32 0.0, %v1147
      %v1149 = vpop.f32.mrf.mxu0
      %v1150 = vpop.f32.mrf.mxu0
      %v1151 = vadd.f32 0.0, %v1150
      %v1152 = vpop.f32.mrf.mxu0
      %1153 = vmatprep.mubr.bf16.mxu0 0
      %1154 = vmatmul.mubr.bf16.gmra.mxu0 %v745
      %v1155 = vpop.f32.mrf.mxu0
      %v1156 = vadd.f32 0.0, %v1155
      %v1157 = vpop.f32.mrf.mxu0
      %v1158 = vpop.f32.mrf.mxu0
      %v1159 = vadd.f32 0.0, %v1158
      %v1160 = vpop.f32.mrf.mxu0
      %1161 = vmatprep.mubr.bf16.mxu0 0
      %1162 = vmatmul.mubr.bf16.gmra.mxu0 %v748
      %v1163 = vpop.f32.mrf.mxu0
      %v1164 = vadd.f32 0.0, %v1163
      %v1165 = vpop.f32.mrf.mxu0
      %v1166 = vpop.f32.mrf.mxu0
      %v1167 = vadd.f32 0.0, %v1166
      %v1168 = vpop.f32.mrf.mxu0
      %1169 = vmatprep.mubr.bf16.mxu0 0
      %1170 = vmatmul.mubr.bf16.gmra.mxu0 %v751
      %v1171 = vpop.f32.mrf.mxu0
      %v1172 = vadd.f32 0.0, %v1171
      %v1173 = vpop.f32.mrf.mxu0
      %v1174 = vpop.f32.mrf.mxu0
      %v1175 = vadd.f32 0.0, %v1174
      %v1176 = vpop.f32.mrf.mxu0
      %1177 = vmatprep.mubr.bf16.mxu0 0
      %1178 = vmatmul.mubr.bf16.gmra.mxu0 %v754
      %v1179 = vpop.f32.mrf.mxu0
      %v1180 = vadd.f32 0.0, %v1179
      %v1181 = vpop.f32.mrf.mxu0
      %v1182 = vpop.f32.mrf.mxu0
      %v1183 = vadd.f32 0.0, %v1182
      %v1184 = vpop.f32.mrf.mxu0
      %1185 = vmatprep.mubr.bf16.mxu0 0
      %1186 = vmatmul.mubr.bf16.gmra.mxu0 %v757
      %v1187 = vpop.f32.mrf.mxu0
      %v1188 = vadd.f32 0.0, %v1187
      %v1189 = vpop.f32.mrf.mxu0
      %v1190 = vpop.f32.mrf.mxu0
      %v1191 = vadd.f32 0.0, %v1190
      %v1192 = vpop.f32.mrf.mxu0
      %1193 = vmatprep.mubr.bf16.mxu0 0
      %1194 = vmatmul.mubr.bf16.gmra.mxu0 %v760
      %v1195 = vpop.f32.mrf.mxu0
      %v1196 = vadd.f32 0.0, %v1195
      %v1197 = vpop.f32.mrf.mxu0
      %v1198 = vpop.f32.mrf.mxu0
      %v1199 = vadd.f32 0.0, %v1198
      %v1200 = vpop.f32.mrf.mxu0
      %1201 = vmatprep.mubr.bf16.mxu0 0
      %1202 = vmatmul.mubr.bf16.gmra.mxu0 %v763
      %v1203 = vpop.f32.mrf.mxu0
      %v1204 = vadd.f32 0.0, %v1203
      %v1205 = vpop.f32.mrf.mxu0
      %v1206 = vpop.f32.mrf.mxu0
      %v1207 = vadd.f32 0.0, %v1206
      %v1208 = vpop.f32.mrf.mxu0
      %1209 = vmatprep.mubr.bf16.mxu0 0
      %1210 = vmatmul.mubr.bf16.gmra.mxu0 %v766
      %v1211 = vpop.f32.mrf.mxu0
      %v1212 = vadd.f32 0.0, %v1211
      %v1213 = vpop.f32.mrf.mxu0
      %v1214 = vpop.f32.mrf.mxu0
      %v1215 = vadd.f32 0.0, %v1214
      %v1216 = vpop.f32.mrf.mxu0
      %1217 = vmatprep.mubr.bf16.mxu0 0
      %1218 = vmatmul.mubr.bf16.gmra.mxu0 %v769
      %v1219 = vpop.f32.mrf.mxu0
      %v1220 = vadd.f32 0.0, %v1219
      %v1221 = vpop.f32.mrf.mxu0
      %v1222 = vpop.f32.mrf.mxu0
      %v1223 = vadd.f32 0.0, %v1222
      %v1224 = vpop.f32.mrf.mxu0
      %1225 = vmatprep.mubr.bf16.mxu0 0
      %1226 = vmatmul.mubr.bf16.gmra.mxu0 %v772
      %v1227 = vpop.f32.mrf.mxu0
      %v1228 = vadd.f32 0.0, %v1227
      %v1229 = vpop.f32.mrf.mxu0
      %v1230 = vpop.f32.mrf.mxu0
      %v1231 = vadd.f32 0.0, %v1230
      %v1232 = vpop.f32.mrf.mxu0
      %1233 = vmatprep.mubr.bf16.mxu0 0
      %1234 = vmatmul.mubr.bf16.gmra.mxu0 %v775
      %v1235 = vpop.f32.mrf.mxu0
      %v1236 = vadd.f32 0.0, %v1235
      %v1237 = vpop.f32.mrf.mxu0
      %v1238 = vpop.f32.mrf.mxu0
      %v1239 = vadd.f32 0.0, %v1238
      %v1240 = vpop.f32.mrf.mxu0
      %1241 = vmatprep.mubr.bf16.mxu0 0
      %1242 = vmatmul.mubr.bf16.gmra.mxu0 %v778
      %v1243 = vpop.f32.mrf.mxu0
      %v1244 = vadd.f32 0.0, %v1243
      %v1245 = vpop.f32.mrf.mxu0
      %v1246 = vpop.f32.mrf.mxu0
      %v1247 = vadd.f32 0.0, %v1246
      %v1248 = vpop.f32.mrf.mxu0
      %1249 = vmatprep.mubr.bf16.mxu0 0
      %1250 = vmatmul.mubr.bf16.gmra.mxu0 %v781
      %v1251 = vpop.f32.mrf.mxu0
      %v1252 = vadd.f32 0.0, %v1251
      %v1253 = vpop.f32.mrf.mxu0
      %v1254 = vpop.f32.mrf.mxu0
      %v1255 = vadd.f32 0.0, %v1254
      %v1256 = vpop.f32.mrf.mxu0
      %1257 = vmatprep.mubr.bf16.mxu0 0
      %1258 = vmatmul.mubr.bf16.gmra.mxu0 %v784
      %v1259 = vpop.f32.mrf.mxu0
      %v1260 = vadd.f32 0.0, %v1259
      %v1261 = vpop.f32.mrf.mxu0
      %v1262 = vpop.f32.mrf.mxu0
      %v1263 = vadd.f32 0.0, %v1262
      %v1264 = vpop.f32.mrf.mxu0
      %1265 = vmatprep.mubr.bf16.mxu0 0
      %1266 = vmatmul.mubr.bf16.gmra.mxu0 %v787
      %v1267 = vpop.f32.mrf.mxu0
      %v1268 = vadd.f32 0.0, %v1267
      %v1269 = vpop.f32.mrf.mxu0
      %v1270 = vpop.f32.mrf.mxu0
      %v1271 = vadd.f32 0.0, %v1270
      %v1272 = vpop.f32.mrf.mxu0
      %1273 = vmatprep.mubr.bf16.mxu0 0
      %1274 = vmatmul.mubr.bf16.gmra.mxu0 %v790
      %v1275 = vpop.f32.mrf.mxu0
      %v1276 = vadd.f32 0.0, %v1275
      %v1277 = vpop.f32.mrf.mxu0
      %v1278 = vpop.f32.mrf.mxu0
      %v1279 = vadd.f32 0.0, %v1278
      %v1280 = vpop.f32.mrf.mxu0
      %1281 = vmatprep.mubr.bf16.mxu0 0
      %1282 = vmatmul.mubr.bf16.gmra.mxu0 %v793
      %v1283 = vpop.f32.mrf.mxu0
      %v1284 = vadd.f32 0.0, %v1283
      %v1285 = vpop.f32.mrf.mxu0
      %v1286 = vpop.f32.mrf.mxu0
      %v1287 = vadd.f32 0.0, %v1286
      %v1288 = vpop.f32.mrf.mxu0
      %1289 = vmatprep.mubr.bf16.mxu0 0
      %1290 = vmatmul.mubr.bf16.gmra.mxu0 %v796
      %v1291 = vpop.f32.mrf.mxu0
      %v1292 = vadd.f32 0.0, %v1291
      %v1293 = vpop.f32.mrf.mxu0
      %v1294 = vpop.f32.mrf.mxu0
      %v1295 = vadd.f32 0.0, %v1294
      %v1296 = vpop.f32.mrf.mxu0
      %1297 = vmatprep.mubr.bf16.mxu0 0
      %1298 = vmatmul.mubr.bf16.gmra.mxu0 %v799
      %v1299 = vpop.f32.mrf.mxu0
      %v1300 = vadd.f32 0.0, %v1299
      %v1301 = vpop.f32.mrf.mxu0
      %v1302 = vpop.f32.mrf.mxu0
      %v1303 = vadd.f32 0.0, %v1302
      %v1304 = vpop.f32.mrf.mxu0
      %1305 = vmatprep.mubr.bf16.mxu0 0
      %1306 = vmatmul.mubr.bf16.gmra.mxu0 %v802
      %v1307 = vpop.f32.mrf.mxu0
      %v1308 = vadd.f32 0.0, %v1307
      %v1309 = vpop.f32.mrf.mxu0
      %v1310 = vpop.f32.mrf.mxu0
      %v1311 = vadd.f32 0.0, %v1310
      %v1312 = vpop.f32.mrf.mxu0
      %1313 = vmatprep.mubr.bf16.mxu0 0
      %1314 = vmatmul.mubr.bf16.gmra.mxu0 %v805
      %v1315 = vpop.f32.mrf.mxu0
      %v1316 = vadd.f32 0.0, %v1315
      %v1317 = vpop.f32.mrf.mxu0
      %v1318 = vpop.f32.mrf.mxu0
      %v1319 = vadd.f32 0.0, %v1318
      %v1320 = vpop.f32.mrf.mxu0
      %1321 = vmatprep.mubr.bf16.mxu0 0
      %1322 = vmatmul.mubr.bf16.gmra.mxu0 %v808
      %v1323 = vpop.f32.mrf.mxu0
      %v1324 = vadd.f32 0.0, %v1323
      %v1325 = vpop.f32.mrf.mxu0
      %v1326 = vpop.f32.mrf.mxu0
      %v1327 = vadd.f32 0.0, %v1326
      %v1328 = vpop.f32.mrf.mxu0
      %1329 = vmatprep.mubr.bf16.mxu0 0
      %1330 = vmatmul.mubr.bf16.gmra.mxu0 %v811
      %v1331 = vpop.f32.mrf.mxu0
      %v1332 = vadd.f32 0.0, %v1331
      %v1333 = vpop.f32.mrf.mxu0
      %v1334 = vpop.f32.mrf.mxu0
      %v1335 = vadd.f32 0.0, %v1334
      %v1336 = vpop.f32.mrf.mxu0
      %1337 = vmatprep.mubr.bf16.mxu0 0
      %1338 = vmatmul.mubr.bf16.gmra.mxu0 %v814
      %v1339 = vpop.f32.mrf.mxu0
      %v1340 = vadd.f32 0.0, %v1339
      %v1341 = vpop.f32.mrf.mxu0
      %v1342 = vpop.f32.mrf.mxu0
      %v1343 = vadd.f32 0.0, %v1342
      %v1344 = vpop.f32.mrf.mxu0
      %1345 = vmatprep.mubr.bf16.mxu0 0
      %1346 = vmatmul.mubr.bf16.gmra.mxu0 %v817
      %v1347 = vpop.f32.mrf.mxu0
      %v1348 = vadd.f32 0.0, %v1347
      %v1349 = vpop.f32.mrf.mxu0
      %v1350 = vpop.f32.mrf.mxu0
      %v1351 = vadd.f32 0.0, %v1350
      %v1352 = vpop.f32.mrf.mxu0
      %1353 = vmatprep.mubr.bf16.mxu0 0
      %1354 = vmatmul.mubr.bf16.gmra.mxu0 %v820
      %v1355 = vpop.f32.mrf.mxu0
      %v1356 = vadd.f32 0.0, %v1355
      %v1357 = vpop.f32.mrf.mxu0
      %v1358 = vpop.f32.mrf.mxu0
      %v1359 = vadd.f32 0.0, %v1358
      %v1360 = vpop.f32.mrf.mxu0
      %1361 = vmatprep.mubr.bf16.mxu0 0
      %1362 = vmatmul.mubr.bf16.gmra.mxu0 %v823
      %v1363 = vpop.f32.mrf.mxu0
      %v1364 = vadd.f32 0.0, %v1363
      %v1365 = vpop.f32.mrf.mxu0
      %v1366 = vpop.f32.mrf.mxu0
      %v1367 = vadd.f32 0.0, %v1366
      %v1368 = vpop.f32.mrf.mxu0
      %1369 = vmatprep.mubr.bf16.mxu0 0
      %1370 = vmatmul.mubr.bf16.gmra.mxu0 %v826
      %v1371 = vpop.f32.mrf.mxu0
      %v1372 = vadd.f32 0.0, %v1371
      %v1373 = vpop.f32.mrf.mxu0
      %v1374 = vpop.f32.mrf.mxu0
      %v1375 = vadd.f32 0.0, %v1374
      %v1376 = vpop.f32.mrf.mxu0
      %1377 = vmatprep.mubr.bf16.mxu0 0
      %1378 = vmatmul.mubr.bf16.gmra.mxu0 %v829
      %v1379 = vpop.f32.mrf.mxu0
      %v1380 = vadd.f32 0.0, %v1379
      %v1381 = vpop.f32.mrf.mxu0
      %v1382 = vpop.f32.mrf.mxu0
      %v1383 = vadd.f32 0.0, %v1382
      %v1384 = vpop.f32.mrf.mxu0
      %1385 = vmatprep.mubr.bf16.mxu0 0
      %1386 = vmatmul.mubr.bf16.gmra.mxu0 %v832
      %v1387 = vpop.f32.mrf.mxu0
      %v1388 = vadd.f32 0.0, %v1387
      %v1389 = vpop.f32.mrf.mxu0
      %v1390 = vpop.f32.mrf.mxu0
      %v1391 = vadd.f32 0.0, %v1390
      %v1392 = vpop.f32.mrf.mxu0
      %1393 = vmatprep.mubr.bf16.mxu0 0
      %1394 = vmatmul.mubr.bf16.gmra.mxu0 %v835
      %v1395 = vpop.f32.mrf.mxu0
      %v1396 = vadd.f32 0.0, %v1395
      %v1397 = vpop.f32.mrf.mxu0
      %v1398 = vpop.f32.mrf.mxu0
      %v1399 = vadd.f32 0.0, %v1398
      %v1400 = vpop.f32.mrf.mxu0
      %1401 = vmatprep.mubr.bf16.mxu0 0
      %1402 = vmatmul.mubr.bf16.gmra.mxu0 %v838
      %v1403 = vpop.f32.mrf.mxu0
      %v1404 = vadd.f32 0.0, %v1403
      %v1405 = vpop.f32.mrf.mxu0
      %v1406 = vpop.f32.mrf.mxu0
      %v1407 = vadd.f32 0.0, %v1406
      %v1408 = vpop.f32.mrf.mxu0
      %1409 = vmatprep.mubr.bf16.mxu0 0
      %1410 = vmatmul.mubr.bf16.gmra.mxu0 %v841
      %v1411 = vpop.f32.mrf.mxu0
      %v1412 = vadd.f32 0.0, %v1411
      %v1413 = vpop.f32.mrf.mxu0
      %v1414 = vpop.f32.mrf.mxu0
      %v1415 = vadd.f32 0.0, %v1414
      %v1416 = vpop.f32.mrf.mxu0
      %1417 = vmatprep.mubr.bf16.mxu0 0
      %1418 = vmatmul.mubr.bf16.gmra.mxu0 %v844
      %v1419 = vpop.f32.mrf.mxu0
      %v1420 = vadd.f32 0.0, %v1419
      %v1421 = vpop.f32.mrf.mxu0
      %v1422 = vpop.f32.mrf.mxu0
      %v1423 = vadd.f32 0.0, %v1422
      %v1424 = vpop.f32.mrf.mxu0
      %1425 = vmatprep.mubr.bf16.mxu0 0
      %1426 = vmatmul.mubr.bf16.gmra.mxu0 %v847
      %v1427 = vpop.f32.mrf.mxu0
      %v1428 = vadd.f32 0.0, %v1427
      %v1429 = vpop.f32.mrf.mxu0
      %v1430 = vpop.f32.mrf.mxu0
      %v1431 = vpop.f32.mrf.mxu0
      %1432 = vdwg.mxu0
      %v1433 = vtanh.pop %v884
      %v1434 = vtanh.pop %v887
      %v1435 = vtanh.pop %v892
      %v1436 = vtanh.pop %v895
      %v1437 = vtanh.pop %v900
      %v1438 = vtanh.pop %v903
      %v1439 = vtanh.pop %v908
      %v1440 = vtanh.pop %v911
      %v1441 = vtanh.pop %v916
      %v1442 = vtanh.pop %v919
      %v1443 = vtanh.pop %v924
      %v1444 = vtanh.pop %v927
      %v1445 = vtanh.pop %v932
      %v1446 = vtanh.pop %v935
      %v1447 = vtanh.pop %v940
      %v1448 = vtanh.pop %v943
      %v1449 = vtanh.pop %v948
      %v1450 = vtanh.pop %v951
      %v1451 = vtanh.pop %v956
      %v1452 = vtanh.pop %v959
      %v1453 = vtanh.pop %v964
      %v1454 = vtanh.pop %v967
      %v1455 = vtanh.pop %v972
      %v1456 = vtanh.pop %v975
      %v1457 = vtanh.pop %v980
      %v1458 = vtanh.pop %v983
      %v1459 = vtanh.pop %v988
      %v1460 = vtanh.pop %v991
      %v1461 = vtanh.pop %v996
      %v1462 = vtanh.pop %v999
      %v1463 = vtanh.pop %v1004
      %v1464 = vtanh.pop %v1007
      %v1465 = vtanh.pop %v1012
      %v1466 = vtanh.pop %v1015
      %v1467 = vtanh.pop %v1020
      %v1468 = vtanh.pop %v1023
      %v1469 = vtanh.pop %v1028
      %v1470 = vtanh.pop %v1031
      %v1471 = vtanh.pop %v1036
      %v1472 = vtanh.pop %v1039
      %v1473 = vtanh.pop %v1044
      %v1474 = vtanh.pop %v1047
      %v1475 = vtanh.pop %v1052
      %v1476 = vtanh.pop %v1055
      %v1477 = vtanh.pop %v1060
      %v1478 = vtanh.pop %v1063
      %v1479 = vtanh.pop %v1068
      %v1480 = vtanh.pop %v1071
      %v1481 = vtanh.pop %v1076
      %v1482 = vtanh.pop %v1079
      %v1483 = vtanh.pop %v1084
      %v1484 = vtanh.pop %v1087
      %v1485 = vtanh.pop %v1092
      %v1486 = vtanh.pop %v1095
      %v1487 = vtanh.pop %v1100
      %v1488 = vtanh.pop %v1103
      %v1489 = vtanh.pop %v1108
      %v1490 = vtanh.pop %v1111
      %v1491 = vtanh.pop %v1116
      %v1492 = vtanh.pop %v1119
      %v1493 = vtanh.pop %v1124
      %v1494 = vtanh.pop %v1127
      %v1495 = vtanh.pop %v1132
      %v1496 = vtanh.pop %v1135
      %v1497 = vtanh.pop %v1140
      %v1498 = vtanh.pop %v1143
      %v1499 = vtanh.pop %v1148
      %v1500 = vtanh.pop %v1151
      %v1501 = vtanh.pop %v1156
      %v1502 = vtanh.pop %v1159
      %v1503 = vtanh.pop %v1164
      %v1504 = vtanh.pop %v1167
      %v1505 = vtanh.pop %v1172
      %v1506 = vtanh.pop %v1175
      %v1507 = vtanh.pop %v1180
      %v1508 = vtanh.pop %v1183
      %v1509 = vtanh.pop %v1188
      %v1510 = vtanh.pop %v1191
      %v1511 = vtanh.pop %v1196
      %v1512 = vtanh.pop %v1199
      %v1513 = vtanh.pop %v1204
      %v1514 = vtanh.pop %v1207
      %v1515 = vtanh.pop %v1212
      %v1516 = vtanh.pop %v1215
      %v1517 = vtanh.pop %v1220
      %v1518 = vtanh.pop %v1223
      %v1519 = vtanh.pop %v1228
      %v1520 = vtanh.pop %v1231
      %v1521 = vtanh.pop %v1236
      %v1522 = vtanh.pop %v1239
      %v1523 = vtanh.pop %v1244
      %v1524 = vtanh.pop %v1247
      %v1525 = vtanh.pop %v1252
      %v1526 = vtanh.pop %v1255
      %v1527 = vtanh.pop %v1260
      %v1528 = vtanh.pop %v1263
      %v1529 = vtanh.pop %v1268
      %v1530 = vtanh.pop %v1271
      %v1531 = vtanh.pop %v1276
      %v1532 = vtanh.pop %v1279
      %v1533 = vtanh.pop %v1284
      %v1534 = vtanh.pop %v1287
      %v1535 = vtanh.pop %v1292
      %v1536 = vtanh.pop %v1295
      %v1537 = vtanh.pop %v1300
      %v1538 = vtanh.pop %v1303
      %v1539 = vtanh.pop %v1308
      %v1540 = vtanh.pop %v1311
      %v1541 = vtanh.pop %v1316
      %v1542 = vtanh.pop %v1319
      %v1543 = vtanh.pop %v1324
      %v1544 = vtanh.pop %v1327
      %v1545 = vtanh.pop %v1332
      %v1546 = vtanh.pop %v1335
      %v1547 = vtanh.pop %v1340
      %v1548 = vtanh.pop %v1343
      %v1549 = vtanh.pop %v1348
      %v1550 = vtanh.pop %v1351
      %v1551 = vtanh.pop %v1356
      %v1552 = vtanh.pop %v1359
      %v1553 = vtanh.pop %v1364
      %v1554 = vtanh.pop %v1367
      %v1555 = vtanh.pop %v1372
      %v1556 = vtanh.pop %v1375
      %v1557 = vtanh.pop %v1380
      %v1558 = vtanh.pop %v1383
      %v1559 = vtanh.pop %v1388
      %v1560 = vtanh.pop %v1391
      %v1561 = vtanh.pop %v1396
      %v1562 = vtanh.pop %v1399
      %v1563 = vtanh.pop %v1404
      %v1564 = vtanh.pop %v1407
      %v1565 = vtanh.pop %v1412
      %v1566 = vtanh.pop %v1415
      %v1567 = vtanh.pop %v1420
      %v1568 = vtanh.pop %v1423
      %v1569 = vtanh.pop %v1428
      %v1570 = vpack.c.bf16 %v1434, %v1433
      %v1571 = vpack.c.bf16 %v1436, %v1435
      %v1572 = vpack.c.bf16 %v1438, %v1437
      %v1573 = vpack.c.bf16 %v1440, %v1439
      %v1574 = vpack.c.bf16 %v1442, %v1441
      %v1575 = vpack.c.bf16 %v1444, %v1443
      %v1576 = vpack.c.bf16 %v1446, %v1445
      %v1577 = vpack.c.bf16 %v1448, %v1447
      %v1578 = vpack.c.bf16 %v1450, %v1449
      %v1579 = vpack.c.bf16 %v1452, %v1451
      %v1580 = vpack.c.bf16 %v1454, %v1453
      %v1581 = vpack.c.bf16 %v1456, %v1455
      %v1582 = vpack.c.bf16 %v1458, %v1457
      %v1583 = vpack.c.bf16 %v1460, %v1459
      %v1584 = vpack.c.bf16 %v1462, %v1461
      %v1585 = vpack.c.bf16 %v1464, %v1463
      %v1586 = vpack.c.bf16 %v1466, %v1465
      %v1587 = vpack.c.bf16 %v1468, %v1467
      %v1588 = vpack.c.bf16 %v1470, %v1469
      %v1589 = vpack.c.bf16 %v1472, %v1471
      %v1590 = vpack.c.bf16 %v1474, %v1473
      %v1591 = vpack.c.bf16 %v1476, %v1475
      %v1592 = vpack.c.bf16 %v1478, %v1477
      %v1593 = vpack.c.bf16 %v1480, %v1479
      %v1594 = vpack.c.bf16 %v1482, %v1481
      %v1595 = vpack.c.bf16 %v1484, %v1483
      %v1596 = vpack.c.bf16 %v1486, %v1485
      %v1597 = vpack.c.bf16 %v1488, %v1487
      %v1598 = vpack.c.bf16 %v1490, %v1489
      %v1599 = vpack.c.bf16 %v1492, %v1491
      %v1600 = vpack.c.bf16 %v1494, %v1493
      %v1601 = vpack.c.bf16 %v1496, %v1495
      %v1602 = vpack.c.bf16 %v1498, %v1497
      %v1603 = vpack.c.bf16 %v1500, %v1499
      %v1604 = vpack.c.bf16 %v1502, %v1501
      %v1605 = vpack.c.bf16 %v1504, %v1503
      %v1606 = vpack.c.bf16 %v1506, %v1505
      %v1607 = vpack.c.bf16 %v1508, %v1507
      %v1608 = vpack.c.bf16 %v1510, %v1509
      %v1609 = vpack.c.bf16 %v1512, %v1511
      %v1610 = vpack.c.bf16 %v1514, %v1513
      %v1611 = vpack.c.bf16 %v1516, %v1515
      %v1612 = vpack.c.bf16 %v1518, %v1517
      %v1613 = vpack.c.bf16 %v1520, %v1519
      %v1614 = vpack.c.bf16 %v1522, %v1521
      %v1615 = vpack.c.bf16 %v1524, %v1523
      %v1616 = vpack.c.bf16 %v1526, %v1525
      %v1617 = vpack.c.bf16 %v1528, %v1527
      %v1618 = vpack.c.bf16 %v1530, %v1529
      %v1619 = vpack.c.bf16 %v1532, %v1531
      %v1620 = vpack.c.bf16 %v1534, %v1533
      %v1621 = vpack.c.bf16 %v1536, %v1535
      %v1622 = vpack.c.bf16 %v1538, %v1537
      %v1623 = vpack.c.bf16 %v1540, %v1539
      %v1624 = vpack.c.bf16 %v1542, %v1541
      %v1625 = vpack.c.bf16 %v1544, %v1543
      %v1626 = vpack.c.bf16 %v1546, %v1545
      %v1627 = vpack.c.bf16 %v1548, %v1547
      %v1628 = vpack.c.bf16 %v1550, %v1549
      %v1629 = vpack.c.bf16 %v1552, %v1551
      %v1630 = vpack.c.bf16 %v1554, %v1553
      %v1631 = vpack.c.bf16 %v1556, %v1555
      %v1632 = vpack.c.bf16 %v1558, %v1557
      %v1633 = vpack.c.bf16 %v1560, %v1559
      %v1634 = vpack.c.bf16 %v1562, %v1561
      %v1635 = vpack.c.bf16 %v1564, %v1563
      %v1636 = vpack.c.bf16 %v1566, %v1565
      %v1637 = vpack.c.bf16 %v1568, %v1567
      %v1638 = vpack.c.bf16 %v1569, %v1569
      %v1708 = vunpack.c.l.b16 %v1570
      %v1709 = vunpack.c.h.b16 %v1570
      %v1710 = vunpack.c.l.b16 %v1571
      %v1711 = vunpack.c.h.b16 %v1571
      %v1712 = vunpack.c.l.b16 %v1572
      %v1713 = vunpack.c.h.b16 %v1572
      %v1714 = vunpack.c.l.b16 %v1573
      %v1715 = vunpack.c.h.b16 %v1573
      %v1716 = vunpack.c.l.b16 %v1574
      %v1717 = vunpack.c.h.b16 %v1574
      %v1718 = vunpack.c.l.b16 %v1575
      %v1719 = vunpack.c.h.b16 %v1575
      %v1720 = vunpack.c.l.b16 %v1576
      %v1721 = vunpack.c.h.b16 %v1576
      %v1722 = vunpack.c.l.b16 %v1577
      %v1723 = vunpack.c.h.b16 %v1577
      %v1724 = vunpack.c.l.b16 %v1578
      %v1725 = vunpack.c.h.b16 %v1578
      %v1726 = vunpack.c.l.b16 %v1579
      %v1727 = vunpack.c.h.b16 %v1579
      %v1728 = vunpack.c.l.b16 %v1580
      %v1729 = vunpack.c.h.b16 %v1580
      %v1730 = vunpack.c.l.b16 %v1581
      %v1731 = vunpack.c.h.b16 %v1581
      %v1732 = vunpack.c.l.b16 %v1582
      %v1733 = vunpack.c.h.b16 %v1582
      %v1734 = vunpack.c.l.b16 %v1583
      %v1735 = vunpack.c.h.b16 %v1583
      %v1736 = vunpack.c.l.b16 %v1584
      %v1737 = vunpack.c.h.b16 %v1584
      %v1738 = vunpack.c.l.b16 %v1585
      %v1739 = vunpack.c.h.b16 %v1585
      %v1740 = vunpack.c.l.b16 %v1586
      %v1741 = vunpack.c.h.b16 %v1586
      %v1742 = vunpack.c.l.b16 %v1587
      %v1743 = vunpack.c.h.b16 %v1587
      %v1744 = vunpack.c.l.b16 %v1588
      %v1745 = vunpack.c.h.b16 %v1588
      %v1746 = vunpack.c.l.b16 %v1589
      %v1747 = vunpack.c.h.b16 %v1589
      %v1748 = vunpack.c.l.b16 %v1590
      %v1749 = vunpack.c.h.b16 %v1590
      %v1750 = vunpack.c.l.b16 %v1591
      %v1751 = vunpack.c.h.b16 %v1591
      %v1752 = vunpack.c.l.b16 %v1592
      %v1753 = vunpack.c.h.b16 %v1592
      %v1754 = vunpack.c.l.b16 %v1593
      %v1755 = vunpack.c.h.b16 %v1593
      %v1756 = vunpack.c.l.b16 %v1594
      %v1757 = vunpack.c.h.b16 %v1594
      %v1758 = vunpack.c.l.b16 %v1595
      %v1759 = vunpack.c.h.b16 %v1595
      %v1760 = vunpack.c.l.b16 %v1596
      %v1761 = vunpack.c.h.b16 %v1596
      %v1762 = vunpack.c.l.b16 %v1597
      %v1763 = vunpack.c.h.b16 %v1597
      %v1764 = vunpack.c.l.b16 %v1598
      %v1765 = vunpack.c.h.b16 %v1598
      %v1766 = vunpack.c.l.b16 %v1599
      %v1767 = vunpack.c.h.b16 %v1599
      %v1768 = vunpack.c.l.b16 %v1600
      %v1769 = vunpack.c.h.b16 %v1600
      %v1770 = vunpack.c.l.b16 %v1601
      %v1771 = vunpack.c.h.b16 %v1601
      %v1772 = vunpack.c.l.b16 %v1602
      %v1773 = vunpack.c.h.b16 %v1602
      %v1774 = vunpack.c.l.b16 %v1603
      %v1775 = vunpack.c.h.b16 %v1603
      %v1776 = vunpack.c.l.b16 %v1604
      %v1777 = vunpack.c.h.b16 %v1604
      %v1778 = vunpack.c.l.b16 %v1605
      %v1779 = vunpack.c.h.b16 %v1605
      %v1780 = vunpack.c.l.b16 %v1606
      %v1781 = vunpack.c.h.b16 %v1606
      %v1782 = vunpack.c.l.b16 %v1607
      %v1783 = vunpack.c.h.b16 %v1607
      %v1784 = vunpack.c.l.b16 %v1608
      %v1785 = vunpack.c.h.b16 %v1608
      %v1786 = vunpack.c.l.b16 %v1609
      %v1787 = vunpack.c.h.b16 %v1609
      %v1788 = vunpack.c.l.b16 %v1610
      %v1789 = vunpack.c.h.b16 %v1610
      %v1790 = vunpack.c.l.b16 %v1611
      %v1791 = vunpack.c.h.b16 %v1611
      %v1792 = vunpack.c.l.b16 %v1612
      %v1793 = vunpack.c.h.b16 %v1612
      %v1794 = vunpack.c.l.b16 %v1613
      %v1795 = vunpack.c.h.b16 %v1613
      %v1796 = vunpack.c.l.b16 %v1614
      %v1797 = vunpack.c.h.b16 %v1614
      %v1798 = vunpack.c.l.b16 %v1615
      %v1799 = vunpack.c.h.b16 %v1615
      %v1800 = vunpack.c.l.b16 %v1616
      %v1801 = vunpack.c.h.b16 %v1616
      %v1802 = vunpack.c.l.b16 %v1617
      %v1803 = vunpack.c.h.b16 %v1617
      %v1804 = vunpack.c.l.b16 %v1618
      %v1805 = vunpack.c.h.b16 %v1618
      %v1806 = vunpack.c.l.b16 %v1619
      %v1807 = vunpack.c.h.b16 %v1619
      %v1808 = vunpack.c.l.b16 %v1620
      %v1809 = vunpack.c.h.b16 %v1620
      %v1810 = vunpack.c.l.b16 %v1621
      %v1811 = vunpack.c.h.b16 %v1621
      %v1812 = vunpack.c.l.b16 %v1622
      %v1813 = vunpack.c.h.b16 %v1622
      %v1814 = vunpack.c.l.b16 %v1623
      %v1815 = vunpack.c.h.b16 %v1623
      %v1816 = vunpack.c.l.b16 %v1624
      %v1817 = vunpack.c.h.b16 %v1624
      %v1818 = vunpack.c.l.b16 %v1625
      %v1819 = vunpack.c.h.b16 %v1625
      %v1820 = vunpack.c.l.b16 %v1626
      %v1821 = vunpack.c.h.b16 %v1626
      %v1822 = vunpack.c.l.b16 %v1627
      %v1823 = vunpack.c.h.b16 %v1627
      %v1824 = vunpack.c.l.b16 %v1628
      %v1825 = vunpack.c.h.b16 %v1628
      %v1826 = vunpack.c.l.b16 %v1629
      %v1827 = vunpack.c.h.b16 %v1629
      %v1828 = vunpack.c.l.b16 %v1630
      %v1829 = vunpack.c.h.b16 %v1630
      %v1830 = vunpack.c.l.b16 %v1631
      %v1831 = vunpack.c.h.b16 %v1631
      %v1832 = vunpack.c.l.b16 %v1632
      %v1833 = vunpack.c.h.b16 %v1632
      %v1834 = vunpack.c.l.b16 %v1633
      %v1835 = vunpack.c.h.b16 %v1633
      %v1836 = vunpack.c.l.b16 %v1634
      %v1837 = vunpack.c.h.b16 %v1634
      %v1838 = vunpack.c.l.b16 %v1635
      %v1839 = vunpack.c.h.b16 %v1635
      %v1840 = vunpack.c.l.b16 %v1636
      %v1841 = vunpack.c.h.b16 %v1636
      %v1842 = vunpack.c.l.b16 %v1637
      %v1843 = vunpack.c.h.b16 %v1637
      %v1844 = vunpack.c.l.b16 %v1638
      %v1845 = vpack.c.b16 %v1708, %v1708
      %v1846 = vpack.c.b16 %v1709, %v1709
      %v1847 = vpack.c.b16 %v1710, %v1710
      %v1848 = vpack.c.b16 %v1711, %v1711
      %v1849 = vpack.c.b16 %v1712, %v1712
      %v1850 = vpack.c.b16 %v1713, %v1713
      %v1851 = vpack.c.b16 %v1714, %v1714
      %v1852 = vpack.c.b16 %v1715, %v1715
      %v1853 = vpack.c.b16 %v1716, %v1716
      %v1854 = vpack.c.b16 %v1717, %v1717
      %v1855 = vpack.c.b16 %v1718, %v1718
      %v1856 = vpack.c.b16 %v1719, %v1719
      %v1857 = vpack.c.b16 %v1720, %v1720
      %v1858 = vpack.c.b16 %v1721, %v1721
      %v1859 = vpack.c.b16 %v1722, %v1722
      %v1860 = vpack.c.b16 %v1723, %v1723
      %v1861 = vpack.c.b16 %v1724, %v1724
      %v1862 = vpack.c.b16 %v1725, %v1725
      %v1863 = vpack.c.b16 %v1726, %v1726
      %v1864 = vpack.c.b16 %v1727, %v1727
      %v1865 = vpack.c.b16 %v1728, %v1728
      %v1866 = vpack.c.b16 %v1729, %v1729
      %v1867 = vpack.c.b16 %v1730, %v1730
      %v1868 = vpack.c.b16 %v1731, %v1731
      %v1869 = vpack.c.b16 %v1732, %v1732
      %v1870 = vpack.c.b16 %v1733, %v1733
      %v1871 = vpack.c.b16 %v1734, %v1734
      %v1872 = vpack.c.b16 %v1735, %v1735
      %v1873 = vpack.c.b16 %v1736, %v1736
      %v1874 = vpack.c.b16 %v1737, %v1737
      %v1875 = vpack.c.b16 %v1738, %v1738
      %v1876 = vpack.c.b16 %v1739, %v1739
      %v1877 = vpack.c.b16 %v1740, %v1740
      %v1878 = vpack.c.b16 %v1741, %v1741
      %v1879 = vpack.c.b16 %v1742, %v1742
      %v1880 = vpack.c.b16 %v1743, %v1743
      %v1881 = vpack.c.b16 %v1744, %v1744
      %v1882 = vpack.c.b16 %v1745, %v1745
      %v1883 = vpack.c.b16 %v1746, %v1746
      %v1884 = vpack.c.b16 %v1747, %v1747
      %v1885 = vpack.c.b16 %v1748, %v1748
      %v1886 = vpack.c.b16 %v1749, %v1749
      %v1887 = vpack.c.b16 %v1750, %v1750
      %v1888 = vpack.c.b16 %v1751, %v1751
      %v1889 = vpack.c.b16 %v1752, %v1752
      %v1890 = vpack.c.b16 %v1753, %v1753
      %v1891 = vpack.c.b16 %v1754, %v1754
      %v1892 = vpack.c.b16 %v1755, %v1755
      %v1893 = vpack.c.b16 %v1756, %v1756
      %v1894 = vpack.c.b16 %v1757, %v1757
      %v1895 = vpack.c.b16 %v1758, %v1758
      %v1896 = vpack.c.b16 %v1759, %v1759
      %v1897 = vpack.c.b16 %v1760, %v1760
      %v1898 = vpack.c.b16 %v1761, %v1761
      %v1899 = vpack.c.b16 %v1762, %v1762
      %v1900 = vpack.c.b16 %v1763, %v1763
      %v1901 = vpack.c.b16 %v1764, %v1764
      %v1902 = vpack.c.b16 %v1765, %v1765
      %v1903 = vpack.c.b16 %v1766, %v1766
      %v1904 = vpack.c.b16 %v1767, %v1767
      %v1905 = vpack.c.b16 %v1768, %v1768
      %v1906 = vpack.c.b16 %v1769, %v1769
      %v1907 = vpack.c.b16 %v1770, %v1770
      %v1908 = vpack.c.b16 %v1771, %v1771
      %v1909 = vpack.c.b16 %v1772, %v1772
      %v1910 = vpack.c.b16 %v1773, %v1773
      %v1911 = vpack.c.b16 %v1774, %v1774
      %v1912 = vpack.c.b16 %v1775, %v1775
      %v1913 = vpack.c.b16 %v1776, %v1776
      %v1914 = vpack.c.b16 %v1777, %v1777
      %v1915 = vpack.c.b16 %v1778, %v1778
      %v1916 = vpack.c.b16 %v1779, %v1779
      %v1917 = vpack.c.b16 %v1780, %v1780
      %v1918 = vpack.c.b16 %v1781, %v1781
      %v1919 = vpack.c.b16 %v1782, %v1782
      %v1920 = vpack.c.b16 %v1783, %v1783
      %v1921 = vpack.c.b16 %v1784, %v1784
      %v1922 = vpack.c.b16 %v1785, %v1785
      %v1923 = vpack.c.b16 %v1786, %v1786
      %v1924 = vpack.c.b16 %v1787, %v1787
      %v1925 = vpack.c.b16 %v1788, %v1788
      %v1926 = vpack.c.b16 %v1789, %v1789
      %v1927 = vpack.c.b16 %v1790, %v1790
      %v1928 = vpack.c.b16 %v1791, %v1791
      %v1929 = vpack.c.b16 %v1792, %v1792
      %v1930 = vpack.c.b16 %v1793, %v1793
      %v1931 = vpack.c.b16 %v1794, %v1794
      %v1932 = vpack.c.b16 %v1795, %v1795
      %v1933 = vpack.c.b16 %v1796, %v1796
      %v1934 = vpack.c.b16 %v1797, %v1797
      %v1935 = vpack.c.b16 %v1798, %v1798
      %v1936 = vpack.c.b16 %v1799, %v1799
      %v1937 = vpack.c.b16 %v1800, %v1800
      %v1938 = vpack.c.b16 %v1801, %v1801
      %v1939 = vpack.c.b16 %v1802, %v1802
      %v1940 = vpack.c.b16 %v1803, %v1803
      %v1941 = vpack.c.b16 %v1804, %v1804
      %v1942 = vpack.c.b16 %v1805, %v1805
      %v1943 = vpack.c.b16 %v1806, %v1806
      %v1944 = vpack.c.b16 %v1807, %v1807
      %v1945 = vpack.c.b16 %v1808, %v1808
      %v1946 = vpack.c.b16 %v1809, %v1809
      %v1947 = vpack.c.b16 %v1810, %v1810
      %v1948 = vpack.c.b16 %v1811, %v1811
      %v1949 = vpack.c.b16 %v1812, %v1812
      %v1950 = vpack.c.b16 %v1813, %v1813
      %v1951 = vpack.c.b16 %v1814, %v1814
      %v1952 = vpack.c.b16 %v1815, %v1815
      %v1953 = vpack.c.b16 %v1816, %v1816
      %v1954 = vpack.c.b16 %v1817, %v1817
      %v1955 = vpack.c.b16 %v1818, %v1818
      %v1956 = vpack.c.b16 %v1819, %v1819
      %v1957 = vpack.c.b16 %v1820, %v1820
      %v1958 = vpack.c.b16 %v1821, %v1821
      %v1959 = vpack.c.b16 %v1822, %v1822
      %v1960 = vpack.c.b16 %v1823, %v1823
      %v1961 = vpack.c.b16 %v1824, %v1824
      %v1962 = vpack.c.b16 %v1825, %v1825
      %v1963 = vpack.c.b16 %v1826, %v1826
      %v1964 = vpack.c.b16 %v1827, %v1827
      %v1965 = vpack.c.b16 %v1828, %v1828
      %v1966 = vpack.c.b16 %v1829, %v1829
      %v1967 = vpack.c.b16 %v1830, %v1830
      %v1968 = vpack.c.b16 %v1831, %v1831
      %v1969 = vpack.c.b16 %v1832, %v1832
      %v1970 = vpack.c.b16 %v1833, %v1833
      %v1971 = vpack.c.b16 %v1834, %v1834
      %v1972 = vpack.c.b16 %v1835, %v1835
      %v1973 = vpack.c.b16 %v1836, %v1836
      %v1974 = vpack.c.b16 %v1837, %v1837
      %v1975 = vpack.c.b16 %v1838, %v1838
      %v1976 = vpack.c.b16 %v1839, %v1839
      %v1977 = vpack.c.b16 %v1840, %v1840
      %v1978 = vpack.c.b16 %v1841, %v1841
      %v1979 = vpack.c.b16 %v1842, %v1842
      %v1980 = vpack.c.b16 %v1843, %v1843
      %v1981 = vpack.c.b16 %v1844, %v1844
      %vm2119 = vcmask 93184
      %2120 = vst.msk [vmem:[%s143] sm:$0xf] %vm2119, %v1845
      %2121 = vst.msk [vmem:[%s143 + $0x4] sm:$0xf] %vm2119, %v1846
      %2122 = vst.msk [vmem:[%s143 + $0x8] sm:$0xf] %vm2119, %v1847
      %2123 = vst.msk [vmem:[%s143 + $0xc] sm:$0xf] %vm2119, %v1848
      %2124 = vst.msk [vmem:[%s143 + $0x10] sm:$0xf] %vm2119, %v1849
      %2125 = vst.msk [vmem:[%s143 + $0x14] sm:$0xf] %vm2119, %v1850
      %2126 = vst.msk [vmem:[%s143 + $0x18] sm:$0xf] %vm2119, %v1851
      %2127 = vst.msk [vmem:[%s143 + $0x1c] sm:$0xf] %vm2119, %v1852
      %2128 = vst.msk [vmem:[%s143 + $0x20] sm:$0xf] %vm2119, %v1853
      %2129 = vst.msk [vmem:[%s143 + $0x24] sm:$0xf] %vm2119, %v1854
      %2130 = vst.msk [vmem:[%s143 + $0x28] sm:$0xf] %vm2119, %v1855
      %2131 = vst.msk [vmem:[%s143 + $0x2c] sm:$0xf] %vm2119, %v1856
      %2132 = vst.msk [vmem:[%s143 + $0x30] sm:$0xf] %vm2119, %v1857
      %2133 = vst.msk [vmem:[%s143 + $0x34] sm:$0xf] %vm2119, %v1858
      %2134 = vst.msk [vmem:[%s143 + $0x38] sm:$0xf] %vm2119, %v1859
      %2135 = vst.msk [vmem:[%s143 + $0x3c] sm:$0xf] %vm2119, %v1860
      %2136 = vst.msk [vmem:[%s143 + $0x40] sm:$0xf] %vm2119, %v1861
      %2137 = vst.msk [vmem:[%s143 + $0x44] sm:$0xf] %vm2119, %v1862
      %2138 = vst.msk [vmem:[%s143 + $0x48] sm:$0xf] %vm2119, %v1863
      %2139 = vst.msk [vmem:[%s143 + $0x4c] sm:$0xf] %vm2119, %v1864
      %2140 = vst.msk [vmem:[%s143 + $0x50] sm:$0xf] %vm2119, %v1865
      %2141 = vst.msk [vmem:[%s143 + $0x54] sm:$0xf] %vm2119, %v1866
      %2142 = vst.msk [vmem:[%s143 + $0x58] sm:$0xf] %vm2119, %v1867
      %2143 = vst.msk [vmem:[%s143 + $0x5c] sm:$0xf] %vm2119, %v1868
      %2144 = vst.msk [vmem:[%s143 + $0x60] sm:$0xf] %vm2119, %v1869
      %2145 = vst.msk [vmem:[%s143 + $0x64] sm:$0xf] %vm2119, %v1870
      %2146 = vst.msk [vmem:[%s143 + $0x68] sm:$0xf] %vm2119, %v1871
      %2147 = vst.msk [vmem:[%s143 + $0x6c] sm:$0xf] %vm2119, %v1872
      %2148 = vst.msk [vmem:[%s143 + $0x70] sm:$0xf] %vm2119, %v1873
      %2149 = vst.msk [vmem:[%s143 + $0x74] sm:$0xf] %vm2119, %v1874
      %2150 = vst.msk [vmem:[%s143 + $0x78] sm:$0xf] %vm2119, %v1875
      %2151 = vst.msk [vmem:[%s143 + $0x7c] sm:$0xf] %vm2119, %v1876
      %2152 = vst.msk [vmem:[%s143 + $0x80] sm:$0xf] %vm2119, %v1877
      %2153 = vst.msk [vmem:[%s143 + $0x84] sm:$0xf] %vm2119, %v1878
      %2154 = vst.msk [vmem:[%s143 + $0x88] sm:$0xf] %vm2119, %v1879
      %2155 = vst.msk [vmem:[%s143 + $0x8c] sm:$0xf] %vm2119, %v1880
      %2156 = vst.msk [vmem:[%s143 + $0x90] sm:$0xf] %vm2119, %v1881
      %2157 = vst.msk [vmem:[%s143 + $0x94] sm:$0xf] %vm2119, %v1882
      %2158 = vst.msk [vmem:[%s143 + $0x98] sm:$0xf] %vm2119, %v1883
      %2159 = vst.msk [vmem:[%s143 + $0x9c] sm:$0xf] %vm2119, %v1884
      %2160 = vst.msk [vmem:[%s143 + $0xa0] sm:$0xf] %vm2119, %v1885
      %2161 = vst.msk [vmem:[%s143 + $0xa4] sm:$0xf] %vm2119, %v1886
      %2162 = vst.msk [vmem:[%s143 + $0xa8] sm:$0xf] %vm2119, %v1887
      %2163 = vst.msk [vmem:[%s143 + $0xac] sm:$0xf] %vm2119, %v1888
      %2164 = vst.msk [vmem:[%s143 + $0xb0] sm:$0xf] %vm2119, %v1889
      %2165 = vst.msk [vmem:[%s143 + $0xb4] sm:$0xf] %vm2119, %v1890
      %2166 = vst.msk [vmem:[%s143 + $0xb8] sm:$0xf] %vm2119, %v1891
      %2167 = vst.msk [vmem:[%s143 + $0xbc] sm:$0xf] %vm2119, %v1892
      %2168 = vst.msk [vmem:[%s143 + $0xc0] sm:$0xf] %vm2119, %v1893
      %2169 = vst.msk [vmem:[%s143 + $0xc4] sm:$0xf] %vm2119, %v1894
      %2170 = vst.msk [vmem:[%s143 + $0xc8] sm:$0xf] %vm2119, %v1895
      %2171 = vst.msk [vmem:[%s143 + $0xcc] sm:$0xf] %vm2119, %v1896
      %2172 = vst.msk [vmem:[%s143 + $0xd0] sm:$0xf] %vm2119, %v1897
      %2173 = vst.msk [vmem:[%s143 + $0xd4] sm:$0xf] %vm2119, %v1898
      %2174 = vst.msk [vmem:[%s143 + $0xd8] sm:$0xf] %vm2119, %v1899
      %2175 = vst.msk [vmem:[%s143 + $0xdc] sm:$0xf] %vm2119, %v1900
      %2176 = vst.msk [vmem:[%s143 + $0xe0] sm:$0xf] %vm2119, %v1901
      %2177 = vst.msk [vmem:[%s143 + $0xe4] sm:$0xf] %vm2119, %v1902
      %2178 = vst.msk [vmem:[%s143 + $0xe8] sm:$0xf] %vm2119, %v1903
      %2179 = vst.msk [vmem:[%s143 + $0xec] sm:$0xf] %vm2119, %v1904
      %2180 = vst.msk [vmem:[%s143 + $0xf0] sm:$0xf] %vm2119, %v1905
      %2181 = vst.msk [vmem:[%s143 + $0xf4] sm:$0xf] %vm2119, %v1906
      %2182 = vst.msk [vmem:[%s143 + $0xf8] sm:$0xf] %vm2119, %v1907
      %2183 = vst.msk [vmem:[%s143 + $0xfc] sm:$0xf] %vm2119, %v1908
      %2184 = vst.msk [vmem:[%s143 + $0x100] sm:$0xf] %vm2119, %v1909
      %2185 = vst.msk [vmem:[%s143 + $0x104] sm:$0xf] %vm2119, %v1910
      %2186 = vst.msk [vmem:[%s143 + $0x108] sm:$0xf] %vm2119, %v1911
      %2187 = vst.msk [vmem:[%s143 + $0x10c] sm:$0xf] %vm2119, %v1912
      %2188 = vst.msk [vmem:[%s143 + $0x110] sm:$0xf] %vm2119, %v1913
      %2189 = vst.msk [vmem:[%s143 + $0x114] sm:$0xf] %vm2119, %v1914
      %2190 = vst.msk [vmem:[%s143 + $0x118] sm:$0xf] %vm2119, %v1915
      %2191 = vst.msk [vmem:[%s143 + $0x11c] sm:$0xf] %vm2119, %v1916
      %2192 = vst.msk [vmem:[%s143 + $0x120] sm:$0xf] %vm2119, %v1917
      %2193 = vst.msk [vmem:[%s143 + $0x124] sm:$0xf] %vm2119, %v1918
      %2194 = vst.msk [vmem:[%s143 + $0x128] sm:$0xf] %vm2119, %v1919
      %2195 = vst.msk [vmem:[%s143 + $0x12c] sm:$0xf] %vm2119, %v1920
      %2196 = vst.msk [vmem:[%s143 + $0x130] sm:$0xf] %vm2119, %v1921
      %2197 = vst.msk [vmem:[%s143 + $0x134] sm:$0xf] %vm2119, %v1922
      %2198 = vst.msk [vmem:[%s143 + $0x138] sm:$0xf] %vm2119, %v1923
      %2199 = vst.msk [vmem:[%s143 + $0x13c] sm:$0xf] %vm2119, %v1924
      %2200 = vst.msk [vmem:[%s143 + $0x140] sm:$0xf] %vm2119, %v1925
      %2201 = vst.msk [vmem:[%s143 + $0x144] sm:$0xf] %vm2119, %v1926
      %2202 = vst.msk [vmem:[%s143 + $0x148] sm:$0xf] %vm2119, %v1927
      %2203 = vst.msk [vmem:[%s143 + $0x14c] sm:$0xf] %vm2119, %v1928
      %2204 = vst.msk [vmem:[%s143 + $0x150] sm:$0xf] %vm2119, %v1929
      %2205 = vst.msk [vmem:[%s143 + $0x154] sm:$0xf] %vm2119, %v1930
      %2206 = vst.msk [vmem:[%s143 + $0x158] sm:$0xf] %vm2119, %v1931
      %2207 = vst.msk [vmem:[%s143 + $0x15c] sm:$0xf] %vm2119, %v1932
      %2208 = vst.msk [vmem:[%s143 + $0x160] sm:$0xf] %vm2119, %v1933
      %2209 = vst.msk [vmem:[%s143 + $0x164] sm:$0xf] %vm2119, %v1934
      %2210 = vst.msk [vmem:[%s143 + $0x168] sm:$0xf] %vm2119, %v1935
      %2211 = vst.msk [vmem:[%s143 + $0x16c] sm:$0xf] %vm2119, %v1936
      %2212 = vst.msk [vmem:[%s143 + $0x170] sm:$0xf] %vm2119, %v1937
      %2213 = vst.msk [vmem:[%s143 + $0x174] sm:$0xf] %vm2119, %v1938
      %2214 = vst.msk [vmem:[%s143 + $0x178] sm:$0xf] %vm2119, %v1939
      %2215 = vst.msk [vmem:[%s143 + $0x17c] sm:$0xf] %vm2119, %v1940
      %2216 = vst.msk [vmem:[%s143 + $0x180] sm:$0xf] %vm2119, %v1941
      %2217 = vst.msk [vmem:[%s143 + $0x184] sm:$0xf] %vm2119, %v1942
      %2218 = vst.msk [vmem:[%s143 + $0x188] sm:$0xf] %vm2119, %v1943
      %2219 = vst.msk [vmem:[%s143 + $0x18c] sm:$0xf] %vm2119, %v1944
      %2220 = vst.msk [vmem:[%s143 + $0x190] sm:$0xf] %vm2119, %v1945
      %2221 = vst.msk [vmem:[%s143 + $0x194] sm:$0xf] %vm2119, %v1946
      %2222 = vst.msk [vmem:[%s143 + $0x198] sm:$0xf] %vm2119, %v1947
      %2223 = vst.msk [vmem:[%s143 + $0x19c] sm:$0xf] %vm2119, %v1948
      %2224 = vst.msk [vmem:[%s143 + $0x1a0] sm:$0xf] %vm2119, %v1949
      %2225 = vst.msk [vmem:[%s143 + $0x1a4] sm:$0xf] %vm2119, %v1950
      %2226 = vst.msk [vmem:[%s143 + $0x1a8] sm:$0xf] %vm2119, %v1951
      %2227 = vst.msk [vmem:[%s143 + $0x1ac] sm:$0xf] %vm2119, %v1952
      %2228 = vst.msk [vmem:[%s143 + $0x1b0] sm:$0xf] %vm2119, %v1953
      %2229 = vst.msk [vmem:[%s143 + $0x1b4] sm:$0xf] %vm2119, %v1954
      %2230 = vst.msk [vmem:[%s143 + $0x1b8] sm:$0xf] %vm2119, %v1955
      %2231 = vst.msk [vmem:[%s143 + $0x1bc] sm:$0xf] %vm2119, %v1956
      %2232 = vst.msk [vmem:[%s143 + $0x1c0] sm:$0xf] %vm2119, %v1957
      %2233 = vst.msk [vmem:[%s143 + $0x1c4] sm:$0xf] %vm2119, %v1958
      %2234 = vst.msk [vmem:[%s143 + $0x1c8] sm:$0xf] %vm2119, %v1959
      %2235 = vst.msk [vmem:[%s143 + $0x1cc] sm:$0xf] %vm2119, %v1960
      %2236 = vst.msk [vmem:[%s143 + $0x1d0] sm:$0xf] %vm2119, %v1961
      %2237 = vst.msk [vmem:[%s143 + $0x1d4] sm:$0xf] %vm2119, %v1962
      %2238 = vst.msk [vmem:[%s143 + $0x1d8] sm:$0xf] %vm2119, %v1963
      %2239 = vst.msk [vmem:[%s143 + $0x1dc] sm:$0xf] %vm2119, %v1964
      %2240 = vst.msk [vmem:[%s143 + $0x1e0] sm:$0xf] %vm2119, %v1965
      %2241 = vst.msk [vmem:[%s143 + $0x1e4] sm:$0xf] %vm2119, %v1966
      %2242 = vst.msk [vmem:[%s143 + $0x1e8] sm:$0xf] %vm2119, %v1967
      %2243 = vst.msk [vmem:[%s143 + $0x1ec] sm:$0xf] %vm2119, %v1968
      %2244 = vst.msk [vmem:[%s143 + $0x1f0] sm:$0xf] %vm2119, %v1969
      %2245 = vst.msk [vmem:[%s143 + $0x1f4] sm:$0xf] %vm2119, %v1970
      %2246 = vst.msk [vmem:[%s143 + $0x1f8] sm:$0xf] %vm2119, %v1971
      %2247 = vst.msk [vmem:[%s143 + $0x1fc] sm:$0xf] %vm2119, %v1972
      %2248 = vst.msk [vmem:[%s143 + $0x200] sm:$0xf] %vm2119, %v1973
      %2249 = vst.msk [vmem:[%s143 + $0x204] sm:$0xf] %vm2119, %v1974
      %2250 = vst.msk [vmem:[%s143 + $0x208] sm:$0xf] %vm2119, %v1975
      %2251 = vst.msk [vmem:[%s143 + $0x20c] sm:$0xf] %vm2119, %v1976
      %2252 = vst.msk [vmem:[%s143 + $0x210] sm:$0xf] %vm2119, %v1977
      %2253 = vst.msk [vmem:[%s143 + $0x214] sm:$0xf] %vm2119, %v1978
      %2254 = vst.msk [vmem:[%s143 + $0x218] sm:$0xf] %vm2119, %v1979
      %2255 = vst.msk [vmem:[%s143 + $0x21c] sm:$0xf] %vm2119, %v1980
      %vm2256 = vcmask 90112
      %vm2257 = vsmask.f32 256
      %vm2258 = vmand %vm2256, %vm2257
      %v2259 = vld [vmem:[%s143 + $0x220] sm:$0x1]
      %v2260 = vsel %vm2258, %v1981, %v2259
      %2261 = vst [vmem:[%s143 + $0x220] sm:$0x1] %v2260
      %p2262 = scmp.lt.s32.totalorder %s13, 1
      %s2263 = scalar_select %p2262, %s13, 1
      %s2264 = smul.addr %s2263, 137
      %s2265 = smul.addr %s2264, 4
      %s2266 = scalar_lea.vmem %s2, %s2265
      // Predicated region
      $region29: #{generator_forward.9} parent=27 // pred_check
        %p2267 = pneg %p78
      $region30: #{generator_forward.9} parent=27 // pred_check_branch
        %2269 = sbr.rel (%p2267) target = $region32
      $region31: #{generator_forward.9} parent=27 // pred_region
        _
      $region32: #{generator_forward.9} parent=27 // pred_fallthru
        _
    $region28: #{generator_forward.9} parent=5 // pred_fallthru
      _
    %p2270 = scmp.le.s32.totalorder 2, %s8
    // Predicated region
    $region33: #{generator_forward.9} parent=5 // pred_check
      %p2271 = pneg %p2270
    $region34: #{generator_forward.9} parent=5 // pred_check_branch
      %2273 = sbr.rel (%p2271) target = $region36
    $region35: #{generator_forward.9} parent=5 // pred_region
      %s2274 = ssub.s32 %s8, 2
      // Predicated region
      $region37: #{generator_forward.9} parent=35 // pred_check
        %p2275 = pneg %p84
      $region38: #{generator_forward.9} parent=35 // pred_check_branch
        %2277 = sbr.rel (%p2275) target = $region40
      $region39: #{generator_forward.9} parent=35 // pred_region
        %p2278 = scmp.lt.s32.totalorder %s14, 1
        %s2279 = scalar_select %p2278, %s14, 1
        %s2280 = smul.addr %s2279, 137
        %s2281 = smul.addr %s2280, 4
        %s2282 = scalar_lea.vmem %s2, %s2281
      $region40: #{generator_forward.9} parent=35 // pred_fallthru
        _
    $region36: #{generator_forward.9} parent=5 // pred_fallthru
      _
  $region6: #{generator_forward.9} parent=0 // loop_footer
    %s12 = sadd.s32 1, %s8
  $region7: #{generator_forward.9} parent=0 // loop_footer_branch
    %7 = sbr.rel target = $region3
  $region8: #{generator_forward.9} parent=0 // loop_exit
    _

</llo_original>
